<compile_context>
chip_gen: v5e
topology: v5e:2x2
jax: 0.10.0
libtpu: 0.0.40
codegen_flags: <defaults>
</compile_context>

<pallas_src>
import jax
import jax.numpy as jnp
from jax.experimental import pallas as pl
from jax.experimental.pallas import tpu as pltpu


# ----------------------------- fused Pallas kernel ----------------------------
def _fused_deformation_kernel(
    a_ref, x_ref,
    w1_ref, b1_ref, w2_ref, b2_ref, w3_ref, b3_ref, w4_ref, b4_ref, w5_ref, b5_ref,
    feats_ref, coords_ref,
    xw2_acc,
):
    """Grid axis j streams W1 column-tiles (and matching W2 row-tiles).

    step j : h1_j  = relu(Â @ (X @ W1[:, tile_j]) + b1[tile_j])
             xw2  += h1_j @ W2[tile_j, :]                (f32 VMEM accumulator)
    last j : h2 = relu(Â @ xw2 + b2); h3, h4 likewise; feats = h4;
             coords = Â @ (h4 @ W5p) + b5p               (no relu)
    """
    j = pl.program_id(0)
    last = pl.num_programs(0) - 1
    a = a_ref[...]                                     # (N, N) f32, resident

    @pl.when(j == 0)
    def _():
        xw2_acc[...] = jnp.zeros_like(xw2_acc)

    # layer 1, output-channel tile j (bf16 MXU, f32 accumulate)
    xw1 = jnp.dot(x_ref[...], w1_ref[...], preferred_element_type=jnp.float32)
    h1_tile = jnp.maximum(
        jnp.dot(a, xw1, preferred_element_type=jnp.float32) + b1_ref[...], 0.0)

    # layer 2 partial product: (h1 @ W2) = sum_j h1[:, tile_j] @ W2[tile_j, :]
    xw2_acc[...] += jnp.dot(h1_tile.astype(w2_ref.dtype), w2_ref[...],
                            preferred_element_type=jnp.float32)

    @pl.when(j == last)
    def _():
        def gcn(h, w_ref, b_ref, relu):
            xw = jnp.dot(h.astype(w_ref.dtype), w_ref[...],
                         preferred_element_type=jnp.float32)
            out = jnp.dot(a, xw, preferred_element_type=jnp.float32) + b_ref[...]
            return jnp.maximum(out, 0.0) if relu else out

        h2 = jnp.maximum(
            jnp.dot(a, xw2_acc[...], preferred_element_type=jnp.float32)
            + b2_ref[...], 0.0)
        h3 = gcn(h2, w3_ref, b3_ref, relu=True)
        h4 = gcn(h3, w4_ref, b4_ref, relu=True)
        feats_ref[...] = h4.astype(feats_ref.dtype)
        coords_ref[...] = gcn(h4, w5_ref, b5_ref, relu=False).astype(coords_ref.dtype)


def deformation_block_pallas(a_norm, x_bf16, params, *, tile_c1=256):
    """Single fused pallas_call over all 5 GCN layers."""
    n = a_norm.shape[0]
    (w1, b1), (w2, b2), (w3, b3), (w4, b4), (w5, b5) = params
    c1 = w1.shape[1]
    assert c1 % tile_c1 == 0
    num_tiles = c1 // tile_c1

    grid_spec = pltpu.PrefetchScalarGridSpec(
        num_scalar_prefetch=0,
        grid=(num_tiles,),
        in_specs=[
            pl.BlockSpec((n, n), lambda j: (0, 0)),                  # Â      (resident)
            pl.BlockSpec(x_bf16.shape, lambda j: (0, 0)),            # X      (resident)
            pl.BlockSpec((w1.shape[0], tile_c1), lambda j: (0, j)),  # W1 col-tile (streamed)
            pl.BlockSpec((1, tile_c1), lambda j: (0, j)),            # b1 tile
            pl.BlockSpec((tile_c1, w2.shape[1]), lambda j: (j, 0)),  # W2 row-tile (streamed)
            pl.BlockSpec(b2.shape, lambda j: (0, 0)),
            pl.BlockSpec(w3.shape, lambda j: (0, 0)),                # small weights resident
            pl.BlockSpec(b3.shape, lambda j: (0, 0)),
            pl.BlockSpec(w4.shape, lambda j: (0, 0)),
            pl.BlockSpec(b4.shape, lambda j: (0, 0)),
            pl.BlockSpec(w5.shape, lambda j: (0, 0)),
            pl.BlockSpec(b5.shape, lambda j: (0, 0)),
        ],
        out_specs=[
            pl.BlockSpec((n, w4.shape[1]), lambda j: (0, 0)),        # shape features (N,128)
            pl.BlockSpec((n, w5.shape[1]), lambda j: (0, 0)),        # padded coords (N,128)
        ],
        scratch_shapes=[pltpu.VMEM((n, w2.shape[1]), jnp.float32)],  # layer-2 accumulator
    )

    feats, coords_pad = pl.pallas_call(
        _fused_deformation_kernel,
        out_shape=(jax.ShapeDtypeStruct((n, w4.shape[1]), jnp.float32),
                   jax.ShapeDtypeStruct((n, w5.shape[1]), jnp.float32)),
        grid_spec=grid_spec,
        compiler_params=pltpu.CompilerParams(
            dimension_semantics=("arbitrary",),        # scratch carries across steps
            vmem_limit_bytes=16 * 1024 * 1024),
    )(a_norm, x_bf16, w1, b1, w2, b2, w3, b3, w4, b4, w5, b5)
    return feats, coords_pad


# ------------------------------- JAX glue -------------------------------------
def build_normalized_adjacency(edge_index, num_nodes):
    """Dense Â = D^{-1/2} (A + I) D^{-1/2} following torch_geometric gcn_norm."""
    src = edge_index[0]
    dst = edge_index[1]
    a = jnp.zeros((num_nodes, num_nodes), jnp.float32).at[dst, src].add(1.0)
    a = a + jnp.eye(num_nodes, dtype=jnp.float32)           # self loops
    deg = jnp.sum(a, axis=1)
    dinv = jnp.where(deg > 0, 1.0 / jnp.sqrt(deg), 0.0)
    return dinv[:, None] * a * dinv[None, :]


def glorot(key, fan_in, fan_out):
    limit = jnp.sqrt(6.0 / (fan_in + fan_out))
    return jax.random.uniform(key, (fan_in, fan_out), jnp.float32, -limit, limit)


def init_deformation_block_params(key, feat_shape_dim, coord_pad=128):
    dims = [1280 + feat_shape_dim, 1024, 512, 256, 128, 3]
    params = []
    for i in range(len(dims) - 1):
        key, kw, kb = jax.random.split(key, 3)
        fan_in, fan_out = dims[i], dims[i + 1]
        w = glorot(kw, fan_in, fan_out)
        b = jax.random.uniform(kb, (1, fan_out), jnp.float32, -0.1, 0.1)
        if i == len(dims) - 2:
            # pad conv3 to a lane-dense 128-wide output once, at init time
            w = jnp.pad(w, ((0, 0), (0, coord_pad - fan_out)))
            b = jnp.pad(b, ((0, 0), (0, coord_pad - fan_out)))
        params.append((w.astype(jnp.bfloat16), b))          # bf16 weights, f32 biases
    return params


@jax.jit
def deformation_block_forward(params, x, edge_index):
    """Returns (shape_features [N,128], predicted_coords [N,3])."""
    n = x.shape[0]
    a_norm = build_normalized_adjacency(edge_index, n)
    feats, coords_pad = deformation_block_pallas(a_norm, x.astype(jnp.bfloat16), params)
    return feats, coords_pad[:, :3]


def deformation_block_reference(params, x, edge_index):
    """Pure-jnp reference with the same bf16-weight / f32-accumulate semantics."""
    n = x.shape[0]
    a = build_normalized_adjacency(edge_index, n)
    out = x
    for i in range(4):
        w, b = params[i]
        xw = jnp.dot(out.astype(jnp.bfloat16), w, preferred_element_type=jnp.float32)
        out = jnp.maximum(
            jnp.dot(a, xw, preferred_element_type=jnp.float32,
                    precision=jax.lax.Precision.HIGHEST) + b, 0.0)
    w5, b5 = params[4]
    xw = jnp.dot(out.astype(jnp.bfloat16), w5, preferred_element_type=jnp.float32)
    coords = (jnp.dot(a, xw, preferred_element_type=jnp.float32,
                      precision=jax.lax.Precision.HIGHEST) + b5)[:, :3]
    return out, coords


# --------------------------------- main ----------------------------------------
if __name__ == "__main__":
    N = 64                 # number of mesh vertices (small)
    E = 256                # number of directed edges
    feat_shape_dim = 128   # -> input feature dim = 1280 + 128 = 1408

    key = jax.random.PRNGKey(0)
    key, kx, ke, kp = jax.random.split(key, 4)

    x = jax.random.normal(kx, (N, 1280 + feat_shape_dim), jnp.float32)
    edge_index = jax.random.randint(ke, (2, E), 0, N, dtype=jnp.int32)

    params = init_deformation_block_params(kp, feat_shape_dim)

    feats, coords = deformation_block_forward(params, x, edge_index)
    feats = jax.block_until_ready(feats)
    coords = jax.block_until_ready(coords)

    # sanity check against pure-JAX reference (same bf16 weights, f32 accumulation)
    ref_feats, ref_coords = deformation_block_reference(params, x, edge_index)
    assert feats.shape == (N, 128) and coords.shape == (N, 3)
    assert jnp.allclose(feats, ref_feats, rtol=1e-2, atol=1e-2), (
        float(jnp.max(jnp.abs(feats - ref_feats))))
    assert jnp.allclose(coords, ref_coords, rtol=1e-2, atol=1e-2), (
        float(jnp.max(jnp.abs(coords - ref_coords))))

    print("KERNEL_OK")
</pallas_src>

<mosaic_0001>
module attributes {stable_mosaic.version = 11 : i64} {
  func.func @_fused_deformation_kernel(%arg0: i32, %arg1: memref<64x64xf32, #tpu.memory_space<vmem>>, %arg2: memref<64x1408xbf16, #tpu.memory_space<vmem>>, %arg3: memref<1408x256xbf16, #tpu.memory_space<vmem>>, %arg4: memref<1x256xf32, #tpu.memory_space<vmem>>, %arg5: memref<256x512xbf16, #tpu.memory_space<vmem>>, %arg6: memref<1x512xf32, #tpu.memory_space<vmem>>, %arg7: memref<512x256xbf16, #tpu.memory_space<vmem>>, %arg8: memref<1x256xf32, #tpu.memory_space<vmem>>, %arg9: memref<256x128xbf16, #tpu.memory_space<vmem>>, %arg10: memref<1x128xf32, #tpu.memory_space<vmem>>, %arg11: memref<128x128xbf16, #tpu.memory_space<vmem>>, %arg12: memref<1x128xf32, #tpu.memory_space<vmem>>, %arg13: memref<64x128xf32, #tpu.memory_space<vmem>>, %arg14: memref<64x128xf32, #tpu.memory_space<vmem>>, %arg15: memref<64x512xf32, #tpu.memory_space<vmem>>) attributes {dimension_semantics = [#tpu.dimension_semantics<arbitrary>], iteration_bounds = array<i64: 4>, scalar_prefetch = 0 : i64, scratch_operands = 1 : i64, tpu.core_type = #tpu.core_type<tc>, window_params = [{pipeline_mode = #tpu.pipeline_mode<synchronous>, transform_indices = @transform_0, window_bounds = array<i64: 64, 64>}, {pipeline_mode = #tpu.pipeline_mode<synchronous>, transform_indices = @transform_1, window_bounds = array<i64: 64, 1408>}, {transform_indices = @transform_2, window_bounds = array<i64: 1408, 256>}, {transform_indices = @transform_3, window_bounds = array<i64: 1, 256>}, {transform_indices = @transform_4, window_bounds = array<i64: 256, 512>}, {pipeline_mode = #tpu.pipeline_mode<synchronous>, transform_indices = @transform_5, window_bounds = array<i64: 1, 512>}, {pipeline_mode = #tpu.pipeline_mode<synchronous>, transform_indices = @transform_6, window_bounds = array<i64: 512, 256>}, {pipeline_mode = #tpu.pipeline_mode<synchronous>, transform_indices = @transform_7, window_bounds = array<i64: 1, 256>}, {pipeline_mode = #tpu.pipeline_mode<synchronous>, transform_indices = @transform_8, window_bounds = array<i64: 256, 128>}, {pipeline_mode = #tpu.pipeline_mode<synchronous>, transform_indices = @transform_9, window_bounds = array<i64: 1, 128>}, {pipeline_mode = #tpu.pipeline_mode<synchronous>, transform_indices = @transform_10, window_bounds = array<i64: 128, 128>}, {pipeline_mode = #tpu.pipeline_mode<synchronous>, transform_indices = @transform_11, window_bounds = array<i64: 1, 128>}, {pipeline_mode = #tpu.pipeline_mode<synchronous>, transform_indices = @transform_12, window_bounds = array<i64: 64, 128>}, {pipeline_mode = #tpu.pipeline_mode<synchronous>, transform_indices = @transform_13, window_bounds = array<i64: 64, 128>}]} {
    %c0 = arith.constant 0 : index
    %c0_0 = arith.constant 0 : index
    %0 = vector.load %arg1[%c0, %c0_0] : memref<64x64xf32, #tpu.memory_space<vmem>>, vector<64x64xf32>
    %c0_i32 = arith.constant 0 : i32
    %1 = arith.cmpi eq, %arg0, %c0_i32 : i32
    %2 = arith.extui %1 : i1 to i32
    %c0_i32_1 = arith.constant 0 : i32
    %3 = arith.cmpi ne, %2, %c0_i32_1 : i32
    scf.if %3 {
      %cst_18 = arith.constant 0.000000e+00 : f32
      %22 = vector.broadcast %cst_18 : f32 to vector<64x512xf32>
      %c0_19 = arith.constant 0 : index
      %c0_20 = arith.constant 0 : index
      %23 = vector.load %arg15[%c0_19, %c0_20] : memref<64x512xf32, #tpu.memory_space<vmem>>, vector<64x512xf32>
      tpu.vector_store %arg15[%c0_19, %c0_20], %22 {strides = array<i32>} : memref<64x512xf32, #tpu.memory_space<vmem>>, vector<64x512xf32>,
    } else {
    }
    %c0_2 = arith.constant 0 : index
    %c0_3 = arith.constant 0 : index
    %4 = vector.load %arg2[%c0_2, %c0_3] : memref<64x1408xbf16, #tpu.memory_space<vmem>>, vector<64x1408xbf16>
    %c0_4 = arith.constant 0 : index
    %c0_5 = arith.constant 0 : index
    %5 = vector.load %arg3[%c0_4, %c0_5] : memref<1408x256xbf16, #tpu.memory_space<vmem>>, vector<1408x256xbf16>
    %cst = arith.constant dense<0.000000e+00> : vector<64x256xf32>
    %6 = tpu.matmul %4, %5, %cst {dimension_numbers = #tpu.dot_dimension_numbers<[1], [0], [0], [1], [0, 0, 1, 1], [], []>} : vector<64x1408xbf16>, vector<1408x256xbf16>, vector<64x256xf32> -> vector<64x256xf32>
    %cst_6 = arith.constant dense<0.000000e+00> : vector<64x256xf32>
    %7 = tpu.matmul %0, %6, %cst_6 {dimension_numbers = #tpu.dot_dimension_numbers<[1], [0], [0], [1], [0, 0, 1, 1], [], []>} : vector<64x64xf32>, vector<64x256xf32>, vector<64x256xf32> -> vector<64x256xf32>
    %c0_7 = arith.constant 0 : index
    %c0_8 = arith.constant 0 : index
    %8 = vector.load %arg4[%c0_7, %c0_8] : memref<1x256xf32, #tpu.memory_space<vmem>>, vector<1x256xf32>
    %9 = vector.broadcast %8 : vector<1x256xf32> to vector<64x256xf32>
    %10 = arith.addf %7, %9 : vector<64x256xf32>
    %cst_9 = arith.constant 0.000000e+00 : f32
    %11 = vector.broadcast %cst_9 : f32 to vector<64x256xf32>
    %12 = arith.maximumf %10, %11 : vector<64x256xf32>
    %c0_10 = arith.constant 0 : index
    %c0_11 = arith.constant 0 : index
    %13 = vector.load %arg15[%c0_10, %c0_11] : memref<64x512xf32, #tpu.memory_space<vmem>>, vector<64x512xf32>
    %14 = arith.truncf %12 : vector<64x256xf32> to vector<64x256xbf16>
    %c0_12 = arith.constant 0 : index
    %c0_13 = arith.constant 0 : index
    %15 = vector.load %arg5[%c0_12, %c0_13] : memref<256x512xbf16, #tpu.memory_space<vmem>>, vector<256x512xbf16>
    %cst_14 = arith.constant dense<0.000000e+00> : vector<64x512xf32>
    %16 = tpu.matmul %14, %15, %cst_14 {dimension_numbers = #tpu.dot_dimension_numbers<[1], [0], [0], [1], [0, 0, 1, 1], [], []>} : vector<64x256xbf16>, vector<256x512xbf16>, vector<64x512xf32> -> vector<64x512xf32>
    %17 = arith.addf %13, %16 : vector<64x512xf32>
    %c0_15 = arith.constant 0 : index
    %c0_16 = arith.constant 0 : index
    %18 = vector.load %arg15[%c0_15, %c0_16] : memref<64x512xf32, #tpu.memory_space<vmem>>, vector<64x512xf32>
    tpu.vector_store %arg15[%c0_15, %c0_16], %17 {strides = array<i32>} : memref<64x512xf32, #tpu.memory_space<vmem>>, vector<64x512xf32>,
    %c3_i32 = arith.constant 3 : i32
    %19 = arith.cmpi eq, %arg0, %c3_i32 : i32
    %20 = arith.extui %19 : i1 to i32
    %c0_i32_17 = arith.constant 0 : i32
    %21 = arith.cmpi ne, %20, %c0_i32_17 : i32
    scf.if %21 {
      %c0_18 = arith.constant 0 : index
      %c0_19 = arith.constant 0 : index
      %22 = vector.load %arg15[%c0_18, %c0_19] : memref<64x512xf32, #tpu.memory_space<vmem>>, vector<64x512xf32>
      %cst_20 = arith.constant dense<0.000000e+00> : vector<64x512xf32>
      %23 = tpu.matmul %0, %22, %cst_20 {dimension_numbers = #tpu.dot_dimension_numbers<[1], [0], [0], [1], [0, 0, 1, 1], [], []>} : vector<64x64xf32>, vector<64x512xf32>, vector<64x512xf32> -> vector<64x512xf32>
      %c0_21 = arith.constant 0 : index
      %c0_22 = arith.constant 0 : index
      %24 = vector.load %arg6[%c0_21, %c0_22] : memref<1x512xf32, #tpu.memory_space<vmem>>, vector<1x512xf32>
      %25 = vector.broadcast %24 : vector<1x512xf32> to vector<64x512xf32>
      %26 = arith.addf %23, %25 : vector<64x512xf32>
      %cst_23 = arith.constant 0.000000e+00 : f32
      %27 = vector.broadcast %cst_23 : f32 to vector<64x512xf32>
      %28 = arith.maximumf %26, %27 : vector<64x512xf32>
      %29 = arith.truncf %28 : vector<64x512xf32> to vector<64x512xbf16>
      %c0_24 = arith.constant 0 : index
      %c0_25 = arith.constant 0 : index
      %30 = vector.load %arg7[%c0_24, %c0_25] : memref<512x256xbf16, #tpu.memory_space<vmem>>, vector<512x256xbf16>
      %cst_26 = arith.constant dense<0.000000e+00> : vector<64x256xf32>
      %31 = tpu.matmul %29, %30, %cst_26 {dimension_numbers = #tpu.dot_dimension_numbers<[1], [0], [0], [1], [0, 0, 1, 1], [], []>} : vector<64x512xbf16>, vector<512x256xbf16>, vector<64x256xf32> -> vector<64x256xf32>
      %cst_27 = arith.constant dense<0.000000e+00> : vector<64x256xf32>
      %32 = tpu.matmul %0, %31, %cst_27 {dimension_numbers = #tpu.dot_dimension_numbers<[1], [0], [0], [1], [0, 0, 1, 1], [], []>} : vector<64x64xf32>, vector<64x256xf32>, vector<64x256xf32> -> vector<64x256xf32>
      %c0_28 = arith.constant 0 : index
      %c0_29 = arith.constant 0 : index
      %33 = vector.load %arg8[%c0_28, %c0_29] : memref<1x256xf32, #tpu.memory_space<vmem>>, vector<1x256xf32>
      %34 = vector.broadcast %33 : vector<1x256xf32> to vector<64x256xf32>
      %35 = arith.addf %32, %34 : vector<64x256xf32>
      %cst_30 = arith.constant 0.000000e+00 : f32
      %36 = vector.broadcast %cst_30 : f32 to vector<64x256xf32>
      %37 = arith.maximumf %35, %36 : vector<64x256xf32>
      %38 = arith.truncf %37 : vector<64x256xf32> to vector<64x256xbf16>
      %c0_31 = arith.constant 0 : index
      %c0_32 = arith.constant 0 : index
      %39 = vector.load %arg9[%c0_31, %c0_32] : memref<256x128xbf16, #tpu.memory_space<vmem>>, vector<256x128xbf16>
      %cst_33 = arith.constant dense<0.000000e+00> : vector<64x128xf32>
      %40 = tpu.matmul %38, %39, %cst_33 {dimension_numbers = #tpu.dot_dimension_numbers<[1], [0], [0], [1], [0, 0, 1, 1], [], []>} : vector<64x256xbf16>, vector<256x128xbf16>, vector<64x128xf32> -> vector<64x128xf32>
      %cst_34 = arith.constant dense<0.000000e+00> : vector<64x128xf32>
      %41 = tpu.matmul %0, %40, %cst_34 {dimension_numbers = #tpu.dot_dimension_numbers<[1], [0], [0], [1], [0, 0, 1, 1], [], []>} : vector<64x64xf32>, vector<64x128xf32>, vector<64x128xf32> -> vector<64x128xf32>
      %c0_35 = arith.constant 0 : index
      %c0_36 = arith.constant 0 : index
      %42 = vector.load %arg10[%c0_35, %c0_36] : memref<1x128xf32, #tpu.memory_space<vmem>>, vector<1x128xf32>
      %43 = vector.broadcast %42 : vector<1x128xf32> to vector<64x128xf32>
      %44 = arith.addf %41, %43 : vector<64x128xf32>
      %cst_37 = arith.constant 0.000000e+00 : f32
      %45 = vector.broadcast %cst_37 : f32 to vector<64x128xf32>
      %46 = arith.maximumf %44, %45 : vector<64x128xf32>
      %c0_38 = arith.constant 0 : index
      %c0_39 = arith.constant 0 : index
      %47 = vector.load %arg13[%c0_38, %c0_39] : memref<64x128xf32, #tpu.memory_space<vmem>>, vector<64x128xf32>
      tpu.vector_store %arg13[%c0_38, %c0_39], %46 {strides = array<i32>} : memref<64x128xf32, #tpu.memory_space<vmem>>, vector<64x128xf32>,
      %48 = arith.truncf %46 : vector<64x128xf32> to vector<64x128xbf16>
      %c0_40 = arith.constant 0 : index
      %c0_41 = arith.constant 0 : index
      %49 = vector.load %arg11[%c0_40, %c0_41] : memref<128x128xbf16, #tpu.memory_space<vmem>>, vector<128x128xbf16>
      %cst_42 = arith.constant dense<0.000000e+00> : vector<64x128xf32>
      %50 = tpu.matmul %48, %49, %cst_42 {dimension_numbers = #tpu.dot_dimension_numbers<[1], [0], [0], [1], [0, 0, 1, 1], [], []>} : vector<64x128xbf16>, vector<128x128xbf16>, vector<64x128xf32> -> vector<64x128xf32>
      %cst_43 = arith.constant dense<0.000000e+00> : vector<64x128xf32>
      %51 = tpu.matmul %0, %50, %cst_43 {dimension_numbers = #tpu.dot_dimension_numbers<[1], [0], [0], [1], [0, 0, 1, 1], [], []>} : vector<64x64xf32>, vector<64x128xf32>, vector<64x128xf32> -> vector<64x128xf32>
      %c0_44 = arith.constant 0 : index
      %c0_45 = arith.constant 0 : index
      %52 = vector.load %arg12[%c0_44, %c0_45] : memref<1x128xf32, #tpu.memory_space<vmem>>, vector<1x128xf32>
      %53 = vector.broadcast %52 : vector<1x128xf32> to vector<64x128xf32>
      %54 = arith.addf %51, %53 : vector<64x128xf32>
      %c0_46 = arith.constant 0 : index
      %c0_47 = arith.constant 0 : index
      %55 = vector.load %arg14[%c0_46, %c0_47] : memref<64x128xf32, #tpu.memory_space<vmem>>, vector<64x128xf32>
      tpu.vector_store %arg14[%c0_46, %c0_47], %54 {strides = array<i32>} : memref<64x128xf32, #tpu.memory_space<vmem>>, vector<64x128xf32>,
    } else {
    }
    return
  }
  func.func @transform_0(%arg0: i32) -> (i32, i32) {
    %c0_i32 = arith.constant 0 : i32
    %c0_i32_0 = arith.constant 0 : i32
    %c0_i32_1 = arith.constant 0 : i32
    return %c0_i32, %c0_i32_0 : i32, i32
  }
  func.func @transform_1(%arg0: i32) -> (i32, i32) {
    %c0_i32 = arith.constant 0 : i32
    %c0_i32_0 = arith.constant 0 : i32
    %c0_i32_1 = arith.constant 0 : i32
    return %c0_i32, %c0_i32_0 : i32, i32
  }
  func.func @transform_2(%arg0: i32) -> (i32, i32) {
    %c0_i32 = arith.constant 0 : i32
    %c0_i32_0 = arith.constant 0 : i32
    return %c0_i32, %arg0 : i32, i32
  }
  func.func @transform_3(%arg0: i32) -> (i32, i32) {
    %c0_i32 = arith.constant 0 : i32
    %c0_i32_0 = arith.constant 0 : i32
    return %c0_i32, %arg0 : i32, i32
  }
  func.func @transform_4(%arg0: i32) -> (i32, i32) {
    %c0_i32 = arith.constant 0 : i32
    %c0_i32_0 = arith.constant 0 : i32
    return %arg0, %c0_i32 : i32, i32
  }
  func.func @transform_5(%arg0: i32) -> (i32, i32) {
    %c0_i32 = arith.constant 0 : i32
    %c0_i32_0 = arith.constant 0 : i32
    %c0_i32_1 = arith.constant 0 : i32
    return %c0_i32, %c0_i32_0 : i32, i32
  }
  func.func @transform_6(%arg0: i32) -> (i32, i32) {
    %c0_i32 = arith.constant 0 : i32
    %c0_i32_0 = arith.constant 0 : i32
    %c0_i32_1 = arith.constant 0 : i32
    return %c0_i32, %c0_i32_0 : i32, i32
  }
  func.func @transform_7(%arg0: i32) -> (i32, i32) {
    %c0_i32 = arith.constant 0 : i32
    %c0_i32_0 = arith.constant 0 : i32
    %c0_i32_1 = arith.constant 0 : i32
    return %c0_i32, %c0_i32_0 : i32, i32
  }
  func.func @transform_8(%arg0: i32) -> (i32, i32) {
    %c0_i32 = arith.constant 0 : i32
    %c0_i32_0 = arith.constant 0 : i32
    %c0_i32_1 = arith.constant 0 : i32
    return %c0_i32, %c0_i32_0 : i32, i32
  }
  func.func @transform_9(%arg0: i32) -> (i32, i32) {
    %c0_i32 = arith.constant 0 : i32
    %c0_i32_0 = arith.constant 0 : i32
    %c0_i32_1 = arith.constant 0 : i32
    return %c0_i32, %c0_i32_0 : i32, i32
  }
  func.func @transform_10(%arg0: i32) -> (i32, i32) {
    %c0_i32 = arith.constant 0 : i32
    %c0_i32_0 = arith.constant 0 : i32
    %c0_i32_1 = arith.constant 0 : i32
    return %c0_i32, %c0_i32_0 : i32, i32
  }
  func.func @transform_11(%arg0: i32) -> (i32, i32) {
    %c0_i32 = arith.constant 0 : i32
    %c0_i32_0 = arith.constant 0 : i32
    %c0_i32_1 = arith.constant 0 : i32
    return %c0_i32, %c0_i32_0 : i32, i32
  }
  func.func @transform_12(%arg0: i32) -> (i32, i32) {
    %c0_i32 = arith.constant 0 : i32
    %c0_i32_0 = arith.constant 0 : i32
    %c0_i32_1 = arith.constant 0 : i32
    return %c0_i32, %c0_i32_0 : i32, i32
  }
  func.func @transform_13(%arg0: i32) -> (i32, i32) {
    %c0_i32 = arith.constant 0 : i32
    %c0_i32_0 = arith.constant 0 : i32
    %c0_i32_1 = arith.constant 0 : i32
    return %c0_i32, %c0_i32_0 : i32, i32
  }
}

</mosaic_0001>

<llo_original>
// kernel: deformation_block_forward.1
$region0: #{deformation_block_forward.1}
  #allocation0 [shape = 'u32[]', space=smem, size = 0x4, offset = 0x4, fixed_abs, tag = 'smem constant byte address 0x4 - core index']
  #allocation1 [shape = 'u32[72,128]{1,0:T(1,128)}', space=vmem, size = 0x9000, scoped, tag = 'internal scratch']
  #allocation2 [shape = 'f32[64,512]{1,0:T(8,128)}', space=vmem, size = 0x20000, scoped, tag = 'scratch operand']
  %s0 = inlined_call_operand.vmem [shape: f32[64,64], index: 0, kind: input, shape index: {}]
  %s1 = inlined_call_operand.vmem [shape: bf16[64,1408], index: 1, kind: input, shape index: {}]
  %s2 = inlined_call_operand.vmem [shape: bf16[1408,1024], index: 2, kind: input, shape index: {}]
  %s3 = inlined_call_operand.vmem [shape: f32[1,1024], index: 3, kind: input, shape index: {}]
  %s4 = inlined_call_operand.hbm [shape: bf16[1024,512], index: 4, kind: input, shape index: {}]
  %s5 = inlined_call_operand.vmem [shape: f32[1,512], index: 5, kind: input, shape index: {}]
  %s6 = inlined_call_operand.hbm [shape: bf16[512,256], index: 6, kind: input, shape index: {}]
  %s7 = inlined_call_operand.vmem [shape: f32[1,256], index: 7, kind: input, shape index: {}]
  %s8 = inlined_call_operand.hbm [shape: bf16[256,128], index: 8, kind: input, shape index: {}]
  %s9 = inlined_call_operand.vmem [shape: f32[1,128], index: 9, kind: input, shape index: {}]
  %s10 = inlined_call_operand.hbm [shape: bf16[128,128], index: 10, kind: input, shape index: {}]
  %s11 = inlined_call_operand.vmem [shape: f32[1,128], index: 11, kind: input, shape index: {}]
  %s12 = inlined_call_operand.hbm [shape: f32[64,128], index: 12, kind: output, shape index: {0}]
  %s13 = inlined_call_operand.vmem [shape: f32[64,128], index: 13, kind: output, shape index: {1}]
  %14 = xla_tuple %s12, %s13
  %s15 = sld [smem:[#allocation0]]
  $region151: #{deformation_block_forward.1} parent=0
    _
  %s17 = ssub.s32 1, %s15
  %s18 = scalar_select 0, %s17, %s15
  $region1: #{deformation_block_forward.1} parent=0
    #allocation3 [shape = 'u8[1441792]{0}', space=vmem, size = 0x160000, scoped, tag = 'input window, operand 2']
    #allocation4 [shape = 'u8[524288]{0}', space=vmem, size = 0x80000, scoped, tag = 'input window, operand 4']
    #allocation5 [shape = 's32[2]{0}', space=sflag, size = 0x8, scoped, tag = 'scoped memory for deformation_block_forward.1']
    #allocation6 [shape = 's32[2]{0}', space=sflag, size = 0x8, scoped, tag = 'scoped memory for deformation_block_forward.1']
    #allocation7 [shape = 'u8[262144]{0}', space=vmem, size = 0x40000, scoped, tag = 'input window, operand 6, single buffered']
    #allocation8 [shape = 's32[1]{0}', space=sflag, size = 0x4, scoped, tag = 'scoped memory for deformation_block_forward.1']
    #allocation9 [shape = 'u8[65536]{0}', space=vmem, size = 0x10000, scoped, tag = 'input window, operand 8, single buffered']
    #allocation10 [shape = 'u8[32768]{0}', space=vmem, size = 0x8000, scoped, tag = 'input window, operand 10, single buffered']
    #allocation11 [shape = 's32[1]{0}', space=sflag, size = 0x4, scoped, tag = 'scoped memory for deformation_block_forward.1']
    #allocation12 [shape = 'u8[32768]{0}', space=vmem, size = 0x8000, scoped, tag = 'output window, operand 0, single buffered']
    %19 = vsyncpa [#allocation5], 0
    %s20 = scalar_lea.sflag [#allocation5], 1
    %21 = vsyncpa %s20, 0
    %22 = vsyncpa [#allocation8], 0
    %23 = vsyncpa [#allocation11], 0
    %24 = vsyncpa [#allocation6], 0
    loop: start=0, step=1, limit=6
    $region2: #{deformation_block_forward.1} parent=1 // loop_pre_header
      _
    $region3: #{deformation_block_forward.1} parent=1 // loop_header
      %s26 = sphi 0, %s30
      %p27 = scmp.ge.s32.totalorder %s26, 6
      %s34 = sphi 0, %s34
      %s36 = sphi 0, %s34
      %s37 = sphi 0, %s36
      %s51 = sphi 0, %s37
      %s55 = sphi 0, %s55
      %s57 = sphi 0, %s55
      %s58 = sphi 0, %s57
      %s72 = sphi 0, %s58
      %s78 = sphi 0, %s80
      %s81 = sphi 0, %s78
      %s82 = sphi 0, %s81
      %s98 = sphi 0, %s82
      %s104 = sphi 0, %s106
      %s107 = sphi 0, %s104
      %s108 = sphi 0, %s107
      %s124 = sphi 0, %s108
      %s130 = sphi 0, %s132
      %s133 = sphi 0, %s130
      %s134 = sphi 0, %s133
      %s150 = sphi 0, %s134
      %s154 = sphi 0, %s154
      %s156 = sphi 0, %s154
      %s157 = sphi 0, %s156
      %s171 = sphi 0, %s157
      %s175 = sphi 0, %s175
      %s177 = sphi 0, %s175
      %s178 = sphi 0, %s177
      %s192 = sphi 0, %s178
      %s196 = sphi 0, %s196
      %s198 = sphi 0, %s196
      %s199 = sphi 0, %s198
      %s213 = sphi 0, %s199
      %s217 = sphi 0, %s217
      %s219 = sphi 0, %s217
      %s220 = sphi 0, %s219
      %s234 = sphi 0, %s220
      %s238 = sphi 0, %s238
      %s240 = sphi 0, %s238
      %s241 = sphi 0, %s240
      %s255 = sphi 0, %s241
      %s259 = sphi 0, %s259
      %s261 = sphi 0, %s259
      %s262 = sphi 0, %s261
      %s276 = sphi 0, %s262
      %s280 = sphi 0, %s280
      %s282 = sphi 0, %s280
      %s283 = sphi 0, %s282
      %s297 = sphi 0, %s283
      %s301 = sphi 0, %s301
      %s303 = sphi 0, %s301
      %s304 = sphi 0, %s303
      %s318 = sphi 0, %s304
      %s322 = sphi 0, %s322
      %s324 = sphi 0, %s322
      %s325 = sphi 0, %s324
      %s339 = sphi 0, %s325
    $region4: #{deformation_block_forward.1} parent=1 // loop_header_branch
      %29 = sbr.rel (%p27) target = $region8
    $region5: #{deformation_block_forward.1} parent=1 // loop_body
      %s31 = ssub.s32 %s26, 1
      %s32 = ssub.s32 %s26, 2
      %s33 = sadd.s32 %s26, 1
      %s35 = sadd.s32 %s34, 1
      %p38 = scmp.eq.s32.totalorder %s26, 3
      %p39 = scmp.ne.s32.totalorder %s34, %s36
      %p40 = scmp.eq.s32.totalorder %s26, 0
      %p41 = por %p39, %p40
      %p42 = scmp.ne.s32.totalorder %s34, %s36
      %p43 = scmp.eq.s32.totalorder %s31, 3
      %p44 = por %p42, %p43
      %p45 = scmp.ne.s32.totalorder %s36, %s37
      %p46 = scmp.eq.s32.totalorder %s31, 0
      %p47 = por %p45, %p46
      %p48 = scmp.ne.s32.totalorder %s36, %s37
      %p49 = scmp.eq.s32.totalorder %s32, 3
      %p50 = por %p48, %p49
      %p52 = scmp.ne.s32.totalorder %s37, %s51
      %p53 = scmp.eq.s32.totalorder %s32, 0
      %p54 = por %p52, %p53
      %s56 = sadd.s32 %s55, 1
      %p59 = scmp.eq.s32.totalorder %s26, 3
      %p60 = scmp.ne.s32.totalorder %s55, %s57
      %p61 = scmp.eq.s32.totalorder %s26, 0
      %p62 = por %p60, %p61
      %p63 = scmp.ne.s32.totalorder %s55, %s57
      %p64 = scmp.eq.s32.totalorder %s31, 3
      %p65 = por %p63, %p64
      %p66 = scmp.ne.s32.totalorder %s57, %s58
      %p67 = scmp.eq.s32.totalorder %s31, 0
      %p68 = por %p66, %p67
      %p69 = scmp.ne.s32.totalorder %s57, %s58
      %p70 = scmp.eq.s32.totalorder %s32, 3
      %p71 = por %p69, %p70
      %p73 = scmp.ne.s32.totalorder %s58, %s72
      %p74 = scmp.eq.s32.totalorder %s32, 0
      %p75 = por %p73, %p74
      %s76 = ssub.s32 %s26, %s33
      %p77 = scmp.eq.s32.totalorder %s76, 0
      %s79 = sadd.s32 %s78, 1
      %s80 = scalar_select %p77, %s78, %s79
      %p83 = pneg %p77
      %p84 = scmp.eq.s32.totalorder %s26, 3
      %p85 = por %p83, %p84
      %p86 = scmp.ne.s32.totalorder %s78, %s81
      %p87 = scmp.eq.s32.totalorder %s26, 0
      %p88 = por %p86, %p87
      %p89 = scmp.ne.s32.totalorder %s78, %s81
      %p90 = scmp.eq.s32.totalorder %s31, 3
      %p91 = por %p89, %p90
      %p92 = scmp.ne.s32.totalorder %s81, %s82
      %p93 = scmp.eq.s32.totalorder %s31, 0
      %p94 = por %p92, %p93
      %p95 = scmp.ne.s32.totalorder %s81, %s82
      %p96 = scmp.eq.s32.totalorder %s32, 3
      %p97 = por %p95, %p96
      %p99 = scmp.ne.s32.totalorder %s82, %s98
      %p100 = scmp.eq.s32.totalorder %s32, 0
      %p101 = por %p99, %p100
      %s102 = ssub.s32 %s26, %s33
      %p103 = scmp.eq.s32.totalorder %s102, 0
      %s105 = sadd.s32 %s104, 1
      %s106 = scalar_select %p103, %s104, %s105
      %p109 = pneg %p103
      %p110 = scmp.eq.s32.totalorder %s26, 3
      %p111 = por %p109, %p110
      %p112 = scmp.ne.s32.totalorder %s104, %s107
      %p113 = scmp.eq.s32.totalorder %s26, 0
      %p114 = por %p112, %p113
      %p115 = scmp.ne.s32.totalorder %s104, %s107
      %p116 = scmp.eq.s32.totalorder %s31, 3
      %p117 = por %p115, %p116
      %p118 = scmp.ne.s32.totalorder %s107, %s108
      %p119 = scmp.eq.s32.totalorder %s31, 0
      %p120 = por %p118, %p119
      %p121 = scmp.ne.s32.totalorder %s107, %s108
      %p122 = scmp.eq.s32.totalorder %s32, 3
      %p123 = por %p121, %p122
      %p125 = scmp.ne.s32.totalorder %s108, %s124
      %p126 = scmp.eq.s32.totalorder %s32, 0
      %p127 = por %p125, %p126
      %s128 = ssub.s32 %s26, %s33
      %p129 = scmp.eq.s32.totalorder %s128, 0
      %s131 = sadd.s32 %s130, 1
      %s132 = scalar_select %p129, %s130, %s131
      %p135 = pneg %p129
      %p136 = scmp.eq.s32.totalorder %s26, 3
      %p137 = por %p135, %p136
      %p138 = scmp.ne.s32.totalorder %s130, %s133
      %p139 = scmp.eq.s32.totalorder %s26, 0
      %p140 = por %p138, %p139
      %p141 = scmp.ne.s32.totalorder %s130, %s133
      %p142 = scmp.eq.s32.totalorder %s31, 3
      %p143 = por %p141, %p142
      %p144 = scmp.ne.s32.totalorder %s133, %s134
      %p145 = scmp.eq.s32.totalorder %s31, 0
      %p146 = por %p144, %p145
      %p147 = scmp.ne.s32.totalorder %s133, %s134
      %p148 = scmp.eq.s32.totalorder %s32, 3
      %p149 = por %p147, %p148
      %p151 = scmp.ne.s32.totalorder %s134, %s150
      %p152 = scmp.eq.s32.totalorder %s32, 0
      %p153 = por %p151, %p152
      %s155 = sadd.s32 %s154, 1
      %p158 = scmp.eq.s32.totalorder %s26, 3
      %p159 = scmp.ne.s32.totalorder %s154, %s156
      %p160 = scmp.eq.s32.totalorder %s26, 0
      %p161 = por %p159, %p160
      %p162 = scmp.ne.s32.totalorder %s154, %s156
      %p163 = scmp.eq.s32.totalorder %s31, 3
      %p164 = por %p162, %p163
      %p165 = scmp.ne.s32.totalorder %s156, %s157
      %p166 = scmp.eq.s32.totalorder %s31, 0
      %p167 = por %p165, %p166
      %p168 = scmp.ne.s32.totalorder %s156, %s157
      %p169 = scmp.eq.s32.totalorder %s32, 3
      %p170 = por %p168, %p169
      %p172 = scmp.ne.s32.totalorder %s157, %s171
      %p173 = scmp.eq.s32.totalorder %s32, 0
      %p174 = por %p172, %p173
      %s176 = sadd.s32 %s175, 1
      %p179 = scmp.eq.s32.totalorder %s26, 3
      %p180 = scmp.ne.s32.totalorder %s175, %s177
      %p181 = scmp.eq.s32.totalorder %s26, 0
      %p182 = por %p180, %p181
      %p183 = scmp.ne.s32.totalorder %s175, %s177
      %p184 = scmp.eq.s32.totalorder %s31, 3
      %p185 = por %p183, %p184
      %p186 = scmp.ne.s32.totalorder %s177, %s178
      %p187 = scmp.eq.s32.totalorder %s31, 0
      %p188 = por %p186, %p187
      %p189 = scmp.ne.s32.totalorder %s177, %s178
      %p190 = scmp.eq.s32.totalorder %s32, 3
      %p191 = por %p189, %p190
      %p193 = scmp.ne.s32.totalorder %s178, %s192
      %p194 = scmp.eq.s32.totalorder %s32, 0
      %p195 = por %p193, %p194
      %s197 = sadd.s32 %s196, 1
      %p200 = scmp.eq.s32.totalorder %s26, 3
      %p201 = scmp.ne.s32.totalorder %s196, %s198
      %p202 = scmp.eq.s32.totalorder %s26, 0
      %p203 = por %p201, %p202
      %p204 = scmp.ne.s32.totalorder %s196, %s198
      %p205 = scmp.eq.s32.totalorder %s31, 3
      %p206 = por %p204, %p205
      %p207 = scmp.ne.s32.totalorder %s198, %s199
      %p208 = scmp.eq.s32.totalorder %s31, 0
      %p209 = por %p207, %p208
      %p210 = scmp.ne.s32.totalorder %s198, %s199
      %p211 = scmp.eq.s32.totalorder %s32, 3
      %p212 = por %p210, %p211
      %p214 = scmp.ne.s32.totalorder %s199, %s213
      %p215 = scmp.eq.s32.totalorder %s32, 0
      %p216 = por %p214, %p215
      %s218 = sadd.s32 %s217, 1
      %p221 = scmp.eq.s32.totalorder %s26, 3
      %p222 = scmp.ne.s32.totalorder %s217, %s219
      %p223 = scmp.eq.s32.totalorder %s26, 0
      %p224 = por %p222, %p223
      %p225 = scmp.ne.s32.totalorder %s217, %s219
      %p226 = scmp.eq.s32.totalorder %s31, 3
      %p227 = por %p225, %p226
      %p228 = scmp.ne.s32.totalorder %s219, %s220
      %p229 = scmp.eq.s32.totalorder %s31, 0
      %p230 = por %p228, %p229
      %p231 = scmp.ne.s32.totalorder %s219, %s220
      %p232 = scmp.eq.s32.totalorder %s32, 3
      %p233 = por %p231, %p232
      %p235 = scmp.ne.s32.totalorder %s220, %s234
      %p236 = scmp.eq.s32.totalorder %s32, 0
      %p237 = por %p235, %p236
      %s239 = sadd.s32 %s238, 1
      %p242 = scmp.eq.s32.totalorder %s26, 3
      %p243 = scmp.ne.s32.totalorder %s238, %s240
      %p244 = scmp.eq.s32.totalorder %s26, 0
      %p245 = por %p243, %p244
      %p246 = scmp.ne.s32.totalorder %s238, %s240
      %p247 = scmp.eq.s32.totalorder %s31, 3
      %p248 = por %p246, %p247
      %p249 = scmp.ne.s32.totalorder %s240, %s241
      %p250 = scmp.eq.s32.totalorder %s31, 0
      %p251 = por %p249, %p250
      %p252 = scmp.ne.s32.totalorder %s240, %s241
      %p253 = scmp.eq.s32.totalorder %s32, 3
      %p254 = por %p252, %p253
      %p256 = scmp.ne.s32.totalorder %s241, %s255
      %p257 = scmp.eq.s32.totalorder %s32, 0
      %p258 = por %p256, %p257
      %s260 = sadd.s32 %s259, 1
      %p263 = scmp.eq.s32.totalorder %s26, 3
      %p264 = scmp.ne.s32.totalorder %s259, %s261
      %p265 = scmp.eq.s32.totalorder %s26, 0
      %p266 = por %p264, %p265
      %p267 = scmp.ne.s32.totalorder %s259, %s261
      %p268 = scmp.eq.s32.totalorder %s31, 3
      %p269 = por %p267, %p268
      %p270 = scmp.ne.s32.totalorder %s261, %s262
      %p271 = scmp.eq.s32.totalorder %s31, 0
      %p272 = por %p270, %p271
      %p273 = scmp.ne.s32.totalorder %s261, %s262
      %p274 = scmp.eq.s32.totalorder %s32, 3
      %p275 = por %p273, %p274
      %p277 = scmp.ne.s32.totalorder %s262, %s276
      %p278 = scmp.eq.s32.totalorder %s32, 0
      %p279 = por %p277, %p278
      %s281 = sadd.s32 %s280, 1
      %p284 = scmp.eq.s32.totalorder %s26, 3
      %p285 = scmp.ne.s32.totalorder %s280, %s282
      %p286 = scmp.eq.s32.totalorder %s26, 0
      %p287 = por %p285, %p286
      %p288 = scmp.ne.s32.totalorder %s280, %s282
      %p289 = scmp.eq.s32.totalorder %s31, 3
      %p290 = por %p288, %p289
      %p291 = scmp.ne.s32.totalorder %s282, %s283
      %p292 = scmp.eq.s32.totalorder %s31, 0
      %p293 = por %p291, %p292
      %p294 = scmp.ne.s32.totalorder %s282, %s283
      %p295 = scmp.eq.s32.totalorder %s32, 3
      %p296 = por %p294, %p295
      %p298 = scmp.ne.s32.totalorder %s283, %s297
      %p299 = scmp.eq.s32.totalorder %s32, 0
      %p300 = por %p298, %p299
      %s302 = sadd.s32 %s301, 1
      %p305 = scmp.eq.s32.totalorder %s26, 3
      %p306 = scmp.ne.s32.totalorder %s301, %s303
      %p307 = scmp.eq.s32.totalorder %s26, 0
      %p308 = por %p306, %p307
      %p309 = scmp.ne.s32.totalorder %s301, %s303
      %p310 = scmp.eq.s32.totalorder %s31, 3
      %p311 = por %p309, %p310
      %p312 = scmp.ne.s32.totalorder %s303, %s304
      %p313 = scmp.eq.s32.totalorder %s31, 0
      %p314 = por %p312, %p313
      %p315 = scmp.ne.s32.totalorder %s303, %s304
      %p316 = scmp.eq.s32.totalorder %s32, 3
      %p317 = por %p315, %p316
      %p319 = scmp.ne.s32.totalorder %s304, %s318
      %p320 = scmp.eq.s32.totalorder %s32, 0
      %p321 = por %p319, %p320
      %s323 = sadd.s32 %s322, 1
      %p326 = scmp.eq.s32.totalorder %s26, 3
      %p327 = scmp.ne.s32.totalorder %s322, %s324
      %p328 = scmp.eq.s32.totalorder %s26, 0
      %p329 = por %p327, %p328
      %p330 = scmp.ne.s32.totalorder %s322, %s324
      %p331 = scmp.eq.s32.totalorder %s31, 3
      %p332 = por %p330, %p331
      %p333 = scmp.ne.s32.totalorder %s324, %s325
      %p334 = scmp.eq.s32.totalorder %s31, 0
      %p335 = por %p333, %p334
      %p336 = scmp.ne.s32.totalorder %s324, %s325
      %p337 = scmp.eq.s32.totalorder %s32, 3
      %p338 = por %p336, %p337
      %p340 = scmp.ne.s32.totalorder %s325, %s339
      %p341 = scmp.eq.s32.totalorder %s32, 0
      %p342 = por %p340, %p341
      %p343 = scmp.le.s32.totalorder 1, %s26
      %p344 = scmp.lt.s32.totalorder %s26, 5
      %p345 = pnand %p343, %p344
      %p346 = pneg %p345
      // Predicated region
      $region9: #{deformation_block_forward.1} parent=5 // pred_check
        _
      $region10: #{deformation_block_forward.1} parent=5 // pred_check_branch
        %348 = sbr.rel (%p345) target = $region12
      $region11: #{deformation_block_forward.1} parent=5 // pred_region
        %s349 = ssub.s32 %s26, 1
        // Predicated region
        $region13: #{deformation_block_forward.1} parent=11 // pred_check
          %p350 = pneg %p47
        $region14: #{deformation_block_forward.1} parent=11 // pred_check_branch
          %352 = sbr.rel (%p350) target = $region16
        $region15: #{deformation_block_forward.1} parent=11 // pred_region
          _
        $region16: #{deformation_block_forward.1} parent=11 // pred_fallthru
          _
        // Predicated region
        $region17: #{deformation_block_forward.1} parent=11 // pred_check
          %p353 = pneg %p68
        $region18: #{deformation_block_forward.1} parent=11 // pred_check_branch
          %355 = sbr.rel (%p353) target = $region20
        $region19: #{deformation_block_forward.1} parent=11 // pred_region
          _
        $region20: #{deformation_block_forward.1} parent=11 // pred_fallthru
          _
        // Predicated region
        $region21: #{deformation_block_forward.1} parent=11 // pred_check
          %p356 = pneg %p167
        $region22: #{deformation_block_forward.1} parent=11 // pred_check_branch
          %358 = sbr.rel (%p356) target = $region24
        $region23: #{deformation_block_forward.1} parent=11 // pred_region
          _
        $region24: #{deformation_block_forward.1} parent=11 // pred_fallthru
          _
        // Predicated region
        $region25: #{deformation_block_forward.1} parent=11 // pred_check
          %p359 = pneg %p188
        $region26: #{deformation_block_forward.1} parent=11 // pred_check_branch
          %361 = sbr.rel (%p359) target = $region28
        $region27: #{deformation_block_forward.1} parent=11 // pred_region
          %363 = vsyncadd [#allocation8], 0
          %s364 = sshll.u32 %s6, 4
          %s365 = int_to_ptr.hbm [resolvable:$true] %s364
          %s366 = sshll.u32 [#allocation7], 4
          %s367 = int_to_ptr.vmem [resolvable:$true] %s366
          %372 = dma.hbm_to_vmem [thread:$0]  %s365, 8192, %s367, [#allocation8], 128, 128, 8
        $region28: #{deformation_block_forward.1} parent=11 // pred_fallthru
          _
        // Predicated region
        $region29: #{deformation_block_forward.1} parent=11 // pred_check
          %p373 = pneg %p209
        $region30: #{deformation_block_forward.1} parent=11 // pred_check_branch
          %375 = sbr.rel (%p373) target = $region32
        $region31: #{deformation_block_forward.1} parent=11 // pred_region
          _
        $region32: #{deformation_block_forward.1} parent=11 // pred_fallthru
          _
        // Predicated region
        $region33: #{deformation_block_forward.1} parent=11 // pred_check
          %p376 = pneg %p230
        $region34: #{deformation_block_forward.1} parent=11 // pred_check_branch
          %378 = sbr.rel (%p376) target = $region36
        $region35: #{deformation_block_forward.1} parent=11 // pred_region
          %380 = vsyncadd [#allocation8], 0
          %s381 = sshll.u32 %s8, 4
          %s382 = int_to_ptr.hbm [resolvable:$true] %s381
          %s383 = sshll.u32 [#allocation9], 4
          %s384 = int_to_ptr.vmem [resolvable:$true] %s383
          %389 = dma.hbm_to_vmem [thread:$0]  %s382, 2048, %s384, [#allocation8], 64, 64, 4
        $region36: #{deformation_block_forward.1} parent=11 // pred_fallthru
          _
        // Predicated region
        $region37: #{deformation_block_forward.1} parent=11 // pred_check
          %p390 = pneg %p251
        $region38: #{deformation_block_forward.1} parent=11 // pred_check_branch
          %392 = sbr.rel (%p390) target = $region40
        $region39: #{deformation_block_forward.1} parent=11 // pred_region
          _
        $region40: #{deformation_block_forward.1} parent=11 // pred_fallthru
          _
        // Predicated region
        $region41: #{deformation_block_forward.1} parent=11 // pred_check
          %p393 = pneg %p272
        $region42: #{deformation_block_forward.1} parent=11 // pred_check_branch
          %395 = sbr.rel (%p393) target = $region44
        $region43: #{deformation_block_forward.1} parent=11 // pred_region
          %397 = vsyncadd [#allocation11], 0
          %s398 = sshll.u32 %s10, 4
          %s399 = int_to_ptr.hbm [resolvable:$true] %s398
          %s400 = sshll.u32 [#allocation10], 4
          %s401 = int_to_ptr.vmem [resolvable:$true] %s400
          %406 = dma.hbm_to_vmem [thread:$0]  %s399, 1024, %s401, [#allocation11], 64, 64, 4
        $region44: #{deformation_block_forward.1} parent=11 // pred_fallthru
          _
        // Predicated region
        $region45: #{deformation_block_forward.1} parent=11 // pred_check
          %p407 = pneg %p293
        $region46: #{deformation_block_forward.1} parent=11 // pred_check_branch
          %409 = sbr.rel (%p407) target = $region48
        $region47: #{deformation_block_forward.1} parent=11 // pred_region
          _
        $region48: #{deformation_block_forward.1} parent=11 // pred_fallthru
          _
      $region12: #{deformation_block_forward.1} parent=5 // pred_fallthru
        _
      %p410 = scmp.lt.s32.totalorder %s26, 4
      // Predicated region
      $region49: #{deformation_block_forward.1} parent=5 // pred_check
        %p411 = pneg %p410
      $region50: #{deformation_block_forward.1} parent=5 // pred_check_branch
        %413 = sbr.rel (%p411) target = $region52
      $region51: #{deformation_block_forward.1} parent=5 // pred_region
        // Predicated region
        $region53: #{deformation_block_forward.1} parent=51 // pred_check
          %p414 = pneg %p88
        $region54: #{deformation_block_forward.1} parent=51 // pred_check_branch
          %416 = sbr.rel (%p414) target = $region56
        $region55: #{deformation_block_forward.1} parent=51 // pred_region
          %s417 = sand.u32 %s78, 1
          %s418 = sand.u32 %s78, 1
          %s419 = smul.addr %s418, 1408
          %s420 = scalar_lea.vmem [#allocation3], %s419
          %s421 = smul.u32 2, %s26
          %s422 = smul.addr %s421, 4
          %s423 = scalar_lea.vmem %s2, %s422
          // Predicated region
          $region57: #{deformation_block_forward.1} parent=55 // pred_check
            _
          $region58: #{deformation_block_forward.1} parent=55 // pred_check_branch
            %425 = sbr.rel (0) target = $region60
          $region59: #{deformation_block_forward.1} parent=55 // pred_region
            // Predicated region
            $region61: #{deformation_block_forward.1} parent=59 // pred_check
              _
            $region62: #{deformation_block_forward.1} parent=59 // pred_check_branch
              %427 = sbr.rel (0) target = $region64
            $region63: #{deformation_block_forward.1} parent=59 // pred_region
              // Predicated region
              $region76: #{deformation_block_forward.1} parent=63 // pred_check
                _
              $region77: #{deformation_block_forward.1} parent=63 // pred_check_branch
                %793 = sbr.rel (0) target = $region79
              $region78: #{deformation_block_forward.1} parent=63 // pred_region
                loop: start=0, step=1, limit=1
                $region80: #{deformation_block_forward.1} parent=78 // loop_pre_header
                  _
                $region81: #{deformation_block_forward.1} parent=78 // loop_header
                  %s795 = sphi 0, %s799
                  %p796 = scmp.ge.s32.totalorder %s795, 1
                  %s800 = sphi %s423, %s423
                  %s801 = sphi %s420, %s420
                $region82: #{deformation_block_forward.1} parent=78 // loop_header_branch
                  %798 = sbr.rel (%p796) target = $region86
                $region83: #{deformation_block_forward.1} parent=78 // loop_body
                  %v802 = vld [vmem:[%s800] sm:$0xff]
                  %803 = vst [vmem:[%s801] sm:$0xff] %v802
                  %v804 = vld [vmem:[%s800 + $0x20] sm:$0xff]
                  %805 = vst [vmem:[%s801 + $0x8] sm:$0xff] %v804
                  %v806 = vld [vmem:[%s800 + $0x40] sm:$0xff]
                  %807 = vst [vmem:[%s801 + $0x10] sm:$0xff] %v806
                  %v808 = vld [vmem:[%s800 + $0x60] sm:$0xff]
                  %809 = vst [vmem:[%s801 + $0x18] sm:$0xff] %v808
                  %v810 = vld [vmem:[%s800 + $0x80] sm:$0xff]
                  %811 = vst [vmem:[%s801 + $0x20] sm:$0xff] %v810
                  %v812 = vld [vmem:[%s800 + $0xa0] sm:$0xff]
                  %813 = vst [vmem:[%s801 + $0x28] sm:$0xff] %v812
                  %v814 = vld [vmem:[%s800 + $0xc0] sm:$0xff]
                  %815 = vst [vmem:[%s801 + $0x30] sm:$0xff] %v814
                  %v816 = vld [vmem:[%s800 + $0xe0] sm:$0xff]
                  %817 = vst [vmem:[%s801 + $0x38] sm:$0xff] %v816
                  %v818 = vld [vmem:[%s800 + $0x100] sm:$0xff]
                  %819 = vst [vmem:[%s801 + $0x40] sm:$0xff] %v818
                  %v820 = vld [vmem:[%s800 + $0x120] sm:$0xff]
                  %821 = vst [vmem:[%s801 + $0x48] sm:$0xff] %v820
                  %v822 = vld [vmem:[%s800 + $0x140] sm:$0xff]
                  %823 = vst [vmem:[%s801 + $0x50] sm:$0xff] %v822
                  %v824 = vld [vmem:[%s800 + $0x160] sm:$0xff]
                  %825 = vst [vmem:[%s801 + $0x58] sm:$0xff] %v824
                  %v826 = vld [vmem:[%s800 + $0x180] sm:$0xff]
                  %827 = vst [vmem:[%s801 + $0x60] sm:$0xff] %v826
                  %v828 = vld [vmem:[%s800 + $0x1a0] sm:$0xff]
                  %829 = vst [vmem:[%s801 + $0x68] sm:$0xff] %v828
                  %v830 = vld [vmem:[%s800 + $0x1c0] sm:$0xff]
                  %831 = vst [vmem:[%s801 + $0x70] sm:$0xff] %v830
                  %v832 = vld [vmem:[%s800 + $0x1e0] sm:$0xff]
                  %833 = vst [vmem:[%s801 + $0x78] sm:$0xff] %v832
                  %v834 = vld [vmem:[%s800 + $0x200] sm:$0xff]
                  %835 = vst [vmem:[%s801 + $0x80] sm:$0xff] %v834
                  %v836 = vld [vmem:[%s800 + $0x220] sm:$0xff]
                  %837 = vst [vmem:[%s801 + $0x88] sm:$0xff] %v836
                  %v838 = vld [vmem:[%s800 + $0x240] sm:$0xff]
                  %839 = vst [vmem:[%s801 + $0x90] sm:$0xff] %v838
                  %v840 = vld [vmem:[%s800 + $0x260] sm:$0xff]
                  %841 = vst [vmem:[%s801 + $0x98] sm:$0xff] %v840
                  %v842 = vld [vmem:[%s800 + $0x280] sm:$0xff]
                  %843 = vst [vmem:[%s801 + $0xa0] sm:$0xff] %v842
                  %v844 = vld [vmem:[%s800 + $0x2a0] sm:$0xff]
                  %845 = vst [vmem:[%s801 + $0xa8] sm:$0xff] %v844
                  %v846 = vld [vmem:[%s800 + $0x2c0] sm:$0xff]
                  %847 = vst [vmem:[%s801 + $0xb0] sm:$0xff] %v846
                  %v848 = vld [vmem:[%s800 + $0x2e0] sm:$0xff]
                  %849 = vst [vmem:[%s801 + $0xb8] sm:$0xff] %v848
                  %v850 = vld [vmem:[%s800 + $0x300] sm:$0xff]
                  %851 = vst [vmem:[%s801 + $0xc0] sm:$0xff] %v850
                  %v852 = vld [vmem:[%s800 + $0x320] sm:$0xff]
                  %853 = vst [vmem:[%s801 + $0xc8] sm:$0xff] %v852
                  %v854 = vld [vmem:[%s800 + $0x340] sm:$0xff]
                  %855 = vst [vmem:[%s801 + $0xd0] sm:$0xff] %v854
                  %v856 = vld [vmem:[%s800 + $0x360] sm:$0xff]
                  %857 = vst [vmem:[%s801 + $0xd8] sm:$0xff] %v856
                  %v858 = vld [vmem:[%s800 + $0x380] sm:$0xff]
                  %859 = vst [vmem:[%s801 + $0xe0] sm:$0xff] %v858
                  %v860 = vld [vmem:[%s800 + $0x3a0] sm:$0xff]
                  %861 = vst [vmem:[%s801 + $0xe8] sm:$0xff] %v860
                  %v862 = vld [vmem:[%s800 + $0x3c0] sm:$0xff]
                  %863 = vst [vmem:[%s801 + $0xf0] sm:$0xff] %v862
                  %v864 = vld [vmem:[%s800 + $0x3e0] sm:$0xff]
                  %865 = vst [vmem:[%s801 + $0xf8] sm:$0xff] %v864
                  %v866 = vld [vmem:[%s800 + $0x400] sm:$0xff]
                  %867 = vst [vmem:[%s801 + $0x100] sm:$0xff] %v866
                  %v868 = vld [vmem:[%s800 + $0x420] sm:$0xff]
                  %869 = vst [vmem:[%s801 + $0x108] sm:$0xff] %v868
                  %v870 = vld [vmem:[%s800 + $0x440] sm:$0xff]
                  %871 = vst [vmem:[%s801 + $0x110] sm:$0xff] %v870
                  %v872 = vld [vmem:[%s800 + $0x460] sm:$0xff]
                  %873 = vst [vmem:[%s801 + $0x118] sm:$0xff] %v872
                  %v874 = vld [vmem:[%s800 + $0x480] sm:$0xff]
                  %875 = vst [vmem:[%s801 + $0x120] sm:$0xff] %v874
                  %v876 = vld [vmem:[%s800 + $0x4a0] sm:$0xff]
                  %877 = vst [vmem:[%s801 + $0x128] sm:$0xff] %v876
                  %v878 = vld [vmem:[%s800 + $0x4c0] sm:$0xff]
                  %879 = vst [vmem:[%s801 + $0x130] sm:$0xff] %v878
                  %v880 = vld [vmem:[%s800 + $0x4e0] sm:$0xff]
                  %881 = vst [vmem:[%s801 + $0x138] sm:$0xff] %v880
                  %v882 = vld [vmem:[%s800 + $0x500] sm:$0xff]
                  %883 = vst [vmem:[%s801 + $0x140] sm:$0xff] %v882
                  %v884 = vld [vmem:[%s800 + $0x520] sm:$0xff]
                  %885 = vst [vmem:[%s801 + $0x148] sm:$0xff] %v884
                  %v886 = vld [vmem:[%s800 + $0x540] sm:$0xff]
                  %887 = vst [vmem:[%s801 + $0x150] sm:$0xff] %v886
                  %v888 = vld [vmem:[%s800 + $0x560] sm:$0xff]
                  %889 = vst [vmem:[%s801 + $0x158] sm:$0xff] %v888
                  %v890 = vld [vmem:[%s800 + $0x580] sm:$0xff]
                  %891 = vst [vmem:[%s801 + $0x160] sm:$0xff] %v890
                  %v892 = vld [vmem:[%s800 + $0x5a0] sm:$0xff]
                  %893 = vst [vmem:[%s801 + $0x168] sm:$0xff] %v892
                  %v894 = vld [vmem:[%s800 + $0x5c0] sm:$0xff]
                  %895 = vst [vmem:[%s801 + $0x170] sm:$0xff] %v894
                  %v896 = vld [vmem:[%s800 + $0x5e0] sm:$0xff]
                  %897 = vst [vmem:[%s801 + $0x178] sm:$0xff] %v896
                  %v898 = vld [vmem:[%s800 + $0x600] sm:$0xff]
                  %899 = vst [vmem:[%s801 + $0x180] sm:$0xff] %v898
                  %v900 = vld [vmem:[%s800 + $0x620] sm:$0xff]
                  %901 = vst [vmem:[%s801 + $0x188] sm:$0xff] %v900
                  %v902 = vld [vmem:[%s800 + $0x640] sm:$0xff]
                  %903 = vst [vmem:[%s801 + $0x190] sm:$0xff] %v902
                  %v904 = vld [vmem:[%s800 + $0x660] sm:$0xff]
                  %905 = vst [vmem:[%s801 + $0x198] sm:$0xff] %v904
                  %v906 = vld [vmem:[%s800 + $0x680] sm:$0xff]
                  %907 = vst [vmem:[%s801 + $0x1a0] sm:$0xff] %v906
                  %v908 = vld [vmem:[%s800 + $0x6a0] sm:$0xff]
                  %909 = vst [vmem:[%s801 + $0x1a8] sm:$0xff] %v908
                  %v910 = vld [vmem:[%s800 + $0x6c0] sm:$0xff]
                  %911 = vst [vmem:[%s801 + $0x1b0] sm:$0xff] %v910
                  %v912 = vld [vmem:[%s800 + $0x6e0] sm:$0xff]
                  %913 = vst [vmem:[%s801 + $0x1b8] sm:$0xff] %v912
                  %v914 = vld [vmem:[%s800 + $0x700] sm:$0xff]
                  %915 = vst [vmem:[%s801 + $0x1c0] sm:$0xff] %v914
                  %v916 = vld [vmem:[%s800 + $0x720] sm:$0xff]
                  %917 = vst [vmem:[%s801 + $0x1c8] sm:$0xff] %v916
                  %v918 = vld [vmem:[%s800 + $0x740] sm:$0xff]
                  %919 = vst [vmem:[%s801 + $0x1d0] sm:$0xff] %v918
                  %v920 = vld [vmem:[%s800 + $0x760] sm:$0xff]
                  %921 = vst [vmem:[%s801 + $0x1d8] sm:$0xff] %v920
                  %v922 = vld [vmem:[%s800 + $0x780] sm:$0xff]
                  %923 = vst [vmem:[%s801 + $0x1e0] sm:$0xff] %v922
                  %v924 = vld [vmem:[%s800 + $0x7a0] sm:$0xff]
                  %925 = vst [vmem:[%s801 + $0x1e8] sm:$0xff] %v924
                  %v926 = vld [vmem:[%s800 + $0x7c0] sm:$0xff]
                  %927 = vst [vmem:[%s801 + $0x1f0] sm:$0xff] %v926
                  %v928 = vld [vmem:[%s800 + $0x7e0] sm:$0xff]
                  %929 = vst [vmem:[%s801 + $0x1f8] sm:$0xff] %v928
                  %v930 = vld [vmem:[%s800 + $0x800] sm:$0xff]
                  %931 = vst [vmem:[%s801 + $0x200] sm:$0xff] %v930
                  %v932 = vld [vmem:[%s800 + $0x820] sm:$0xff]
                  %933 = vst [vmem:[%s801 + $0x208] sm:$0xff] %v932
                  %v934 = vld [vmem:[%s800 + $0x840] sm:$0xff]
                  %935 = vst [vmem:[%s801 + $0x210] sm:$0xff] %v934
                  %v936 = vld [vmem:[%s800 + $0x860] sm:$0xff]
                  %937 = vst [vmem:[%s801 + $0x218] sm:$0xff] %v936
                  %v938 = vld [vmem:[%s800 + $0x880] sm:$0xff]
                  %939 = vst [vmem:[%s801 + $0x220] sm:$0xff] %v938
                  %v940 = vld [vmem:[%s800 + $0x8a0] sm:$0xff]
                  %941 = vst [vmem:[%s801 + $0x228] sm:$0xff] %v940
                  %v942 = vld [vmem:[%s800 + $0x8c0] sm:$0xff]
                  %943 = vst [vmem:[%s801 + $0x230] sm:$0xff] %v942
                  %v944 = vld [vmem:[%s800 + $0x8e0] sm:$0xff]
                  %945 = vst [vmem:[%s801 + $0x238] sm:$0xff] %v944
                  %v946 = vld [vmem:[%s800 + $0x900] sm:$0xff]
                  %947 = vst [vmem:[%s801 + $0x240] sm:$0xff] %v946
                  %v948 = vld [vmem:[%s800 + $0x920] sm:$0xff]
                  %949 = vst [vmem:[%s801 + $0x248] sm:$0xff] %v948
                  %v950 = vld [vmem:[%s800 + $0x940] sm:$0xff]
                  %951 = vst [vmem:[%s801 + $0x250] sm:$0xff] %v950
                  %v952 = vld [vmem:[%s800 + $0x960] sm:$0xff]
                  %953 = vst [vmem:[%s801 + $0x258] sm:$0xff] %v952
                  %v954 = vld [vmem:[%s800 + $0x980] sm:$0xff]
                  %955 = vst [vmem:[%s801 + $0x260] sm:$0xff] %v954
                  %v956 = vld [vmem:[%s800 + $0x9a0] sm:$0xff]
                  %957 = vst [vmem:[%s801 + $0x268] sm:$0xff] %v956
                  %v958 = vld [vmem:[%s800 + $0x9c0] sm:$0xff]
                  %959 = vst [vmem:[%s801 + $0x270] sm:$0xff] %v958
                  %v960 = vld [vmem:[%s800 + $0x9e0] sm:$0xff]
                  %961 = vst [vmem:[%s801 + $0x278] sm:$0xff] %v960
                  %v962 = vld [vmem:[%s800 + $0xa00] sm:$0xff]
                  %963 = vst [vmem:[%s801 + $0x280] sm:$0xff] %v962
                  %v964 = vld [vmem:[%s800 + $0xa20] sm:$0xff]
                  %965 = vst [vmem:[%s801 + $0x288] sm:$0xff] %v964
                  %v966 = vld [vmem:[%s800 + $0xa40] sm:$0xff]
                  %967 = vst [vmem:[%s801 + $0x290] sm:$0xff] %v966
                  %v968 = vld [vmem:[%s800 + $0xa60] sm:$0xff]
                  %969 = vst [vmem:[%s801 + $0x298] sm:$0xff] %v968
                  %v970 = vld [vmem:[%s800 + $0xa80] sm:$0xff]
                  %971 = vst [vmem:[%s801 + $0x2a0] sm:$0xff] %v970
                  %v972 = vld [vmem:[%s800 + $0xaa0] sm:$0xff]
                  %973 = vst [vmem:[%s801 + $0x2a8] sm:$0xff] %v972
                  %v974 = vld [vmem:[%s800 + $0xac0] sm:$0xff]
                  %975 = vst [vmem:[%s801 + $0x2b0] sm:$0xff] %v974
                  %v976 = vld [vmem:[%s800 + $0xae0] sm:$0xff]
                  %977 = vst [vmem:[%s801 + $0x2b8] sm:$0xff] %v976
                  %v978 = vld [vmem:[%s800 + $0xb00] sm:$0xff]
                  %979 = vst [vmem:[%s801 + $0x2c0] sm:$0xff] %v978
                  %v980 = vld [vmem:[%s800 + $0xb20] sm:$0xff]
                  %981 = vst [vmem:[%s801 + $0x2c8] sm:$0xff] %v980
                  %v982 = vld [vmem:[%s800 + $0xb40] sm:$0xff]
                  %983 = vst [vmem:[%s801 + $0x2d0] sm:$0xff] %v982
                  %v984 = vld [vmem:[%s800 + $0xb60] sm:$0xff]
                  %985 = vst [vmem:[%s801 + $0x2d8] sm:$0xff] %v984
                  %v986 = vld [vmem:[%s800 + $0xb80] sm:$0xff]
                  %987 = vst [vmem:[%s801 + $0x2e0] sm:$0xff] %v986
                  %v988 = vld [vmem:[%s800 + $0xba0] sm:$0xff]
                  %989 = vst [vmem:[%s801 + $0x2e8] sm:$0xff] %v988
                  %v990 = vld [vmem:[%s800 + $0xbc0] sm:$0xff]
                  %991 = vst [vmem:[%s801 + $0x2f0] sm:$0xff] %v990
                  %v992 = vld [vmem:[%s800 + $0xbe0] sm:$0xff]
                  %993 = vst [vmem:[%s801 + $0x2f8] sm:$0xff] %v992
                  %v994 = vld [vmem:[%s800 + $0xc00] sm:$0xff]
                  %995 = vst [vmem:[%s801 + $0x300] sm:$0xff] %v994
                  %v996 = vld [vmem:[%s800 + $0xc20] sm:$0xff]
                  %997 = vst [vmem:[%s801 + $0x308] sm:$0xff] %v996
                  %v998 = vld [vmem:[%s800 + $0xc40] sm:$0xff]
                  %999 = vst [vmem:[%s801 + $0x310] sm:$0xff] %v998
                  %v1000 = vld [vmem:[%s800 + $0xc60] sm:$0xff]
                  %1001 = vst [vmem:[%s801 + $0x318] sm:$0xff] %v1000
                  %v1002 = vld [vmem:[%s800 + $0xc80] sm:$0xff]
                  %1003 = vst [vmem:[%s801 + $0x320] sm:$0xff] %v1002
                  %v1004 = vld [vmem:[%s800 + $0xca0] sm:$0xff]
                  %1005 = vst [vmem:[%s801 + $0x328] sm:$0xff] %v1004
                  %v1006 = vld [vmem:[%s800 + $0xcc0] sm:$0xff]
                  %1007 = vst [vmem:[%s801 + $0x330] sm:$0xff] %v1006
                  %v1008 = vld [vmem:[%s800 + $0xce0] sm:$0xff]
                  %1009 = vst [vmem:[%s801 + $0x338] sm:$0xff] %v1008
                  %v1010 = vld [vmem:[%s800 + $0xd00] sm:$0xff]
                  %1011 = vst [vmem:[%s801 + $0x340] sm:$0xff] %v1010
                  %v1012 = vld [vmem:[%s800 + $0xd20] sm:$0xff]
                  %1013 = vst [vmem:[%s801 + $0x348] sm:$0xff] %v1012
                  %v1014 = vld [vmem:[%s800 + $0xd40] sm:$0xff]
                  %1015 = vst [vmem:[%s801 + $0x350] sm:$0xff] %v1014
                  %v1016 = vld [vmem:[%s800 + $0xd60] sm:$0xff]
                  %1017 = vst [vmem:[%s801 + $0x358] sm:$0xff] %v1016
                  %v1018 = vld [vmem:[%s800 + $0xd80] sm:$0xff]
                  %1019 = vst [vmem:[%s801 + $0x360] sm:$0xff] %v1018
                  %v1020 = vld [vmem:[%s800 + $0xda0] sm:$0xff]
                  %1021 = vst [vmem:[%s801 + $0x368] sm:$0xff] %v1020
                  %v1022 = vld [vmem:[%s800 + $0xdc0] sm:$0xff]
                  %1023 = vst [vmem:[%s801 + $0x370] sm:$0xff] %v1022
                  %v1024 = vld [vmem:[%s800 + $0xde0] sm:$0xff]
                  %1025 = vst [vmem:[%s801 + $0x378] sm:$0xff] %v1024
                  %v1026 = vld [vmem:[%s800 + $0xe00] sm:$0xff]
                  %1027 = vst [vmem:[%s801 + $0x380] sm:$0xff] %v1026
                  %v1028 = vld [vmem:[%s800 + $0xe20] sm:$0xff]
                  %1029 = vst [vmem:[%s801 + $0x388] sm:$0xff] %v1028
                  %v1030 = vld [vmem:[%s800 + $0xe40] sm:$0xff]
                  %1031 = vst [vmem:[%s801 + $0x390] sm:$0xff] %v1030
                  %v1032 = vld [vmem:[%s800 + $0xe60] sm:$0xff]
                  %1033 = vst [vmem:[%s801 + $0x398] sm:$0xff] %v1032
                  %v1034 = vld [vmem:[%s800 + $0xe80] sm:$0xff]
                  %1035 = vst [vmem:[%s801 + $0x3a0] sm:$0xff] %v1034
                  %v1036 = vld [vmem:[%s800 + $0xea0] sm:$0xff]
                  %1037 = vst [vmem:[%s801 + $0x3a8] sm:$0xff] %v1036
                  %v1038 = vld [vmem:[%s800 + $0xec0] sm:$0xff]
                  %1039 = vst [vmem:[%s801 + $0x3b0] sm:$0xff] %v1038
                  %v1040 = vld [vmem:[%s800 + $0xee0] sm:$0xff]
                  %1041 = vst [vmem:[%s801 + $0x3b8] sm:$0xff] %v1040
                  %v1042 = vld [vmem:[%s800 + $0xf00] sm:$0xff]
                  %1043 = vst [vmem:[%s801 + $0x3c0] sm:$0xff] %v1042
                  %v1044 = vld [vmem:[%s800 + $0xf20] sm:$0xff]
                  %1045 = vst [vmem:[%s801 + $0x3c8] sm:$0xff] %v1044
                  %v1046 = vld [vmem:[%s800 + $0xf40] sm:$0xff]
                  %1047 = vst [vmem:[%s801 + $0x3d0] sm:$0xff] %v1046
                  %v1048 = vld [vmem:[%s800 + $0xf60] sm:$0xff]
                  %1049 = vst [vmem:[%s801 + $0x3d8] sm:$0xff] %v1048
                  %v1050 = vld [vmem:[%s800 + $0xf80] sm:$0xff]
                  %1051 = vst [vmem:[%s801 + $0x3e0] sm:$0xff] %v1050
                  %v1052 = vld [vmem:[%s800 + $0xfa0] sm:$0xff]
                  %1053 = vst [vmem:[%s801 + $0x3e8] sm:$0xff] %v1052
                  %v1054 = vld [vmem:[%s800 + $0xfc0] sm:$0xff]
                  %1055 = vst [vmem:[%s801 + $0x3f0] sm:$0xff] %v1054
                  %v1056 = vld [vmem:[%s800 + $0xfe0] sm:$0xff]
                  %1057 = vst [vmem:[%s801 + $0x3f8] sm:$0xff] %v1056
                  %v1058 = vld [vmem:[%s800 + $0x1000] sm:$0xff]
                  %1059 = vst [vmem:[%s801 + $0x400] sm:$0xff] %v1058
                  %v1060 = vld [vmem:[%s800 + $0x1020] sm:$0xff]
                  %1061 = vst [vmem:[%s801 + $0x408] sm:$0xff] %v1060
                  %v1062 = vld [vmem:[%s800 + $0x1040] sm:$0xff]
                  %1063 = vst [vmem:[%s801 + $0x410] sm:$0xff] %v1062
                  %v1064 = vld [vmem:[%s800 + $0x1060] sm:$0xff]
                  %1065 = vst [vmem:[%s801 + $0x418] sm:$0xff] %v1064
                  %v1066 = vld [vmem:[%s800 + $0x1080] sm:$0xff]
                  %1067 = vst [vmem:[%s801 + $0x420] sm:$0xff] %v1066
                  %v1068 = vld [vmem:[%s800 + $0x10a0] sm:$0xff]
                  %1069 = vst [vmem:[%s801 + $0x428] sm:$0xff] %v1068
                  %v1070 = vld [vmem:[%s800 + $0x10c0] sm:$0xff]
                  %1071 = vst [vmem:[%s801 + $0x430] sm:$0xff] %v1070
                  %v1072 = vld [vmem:[%s800 + $0x10e0] sm:$0xff]
                  %1073 = vst [vmem:[%s801 + $0x438] sm:$0xff] %v1072
                  %v1074 = vld [vmem:[%s800 + $0x1100] sm:$0xff]
                  %1075 = vst [vmem:[%s801 + $0x440] sm:$0xff] %v1074
                  %v1076 = vld [vmem:[%s800 + $0x1120] sm:$0xff]
                  %1077 = vst [vmem:[%s801 + $0x448] sm:$0xff] %v1076
                  %v1078 = vld [vmem:[%s800 + $0x1140] sm:$0xff]
                  %1079 = vst [vmem:[%s801 + $0x450] sm:$0xff] %v1078
                  %v1080 = vld [vmem:[%s800 + $0x1160] sm:$0xff]
                  %1081 = vst [vmem:[%s801 + $0x458] sm:$0xff] %v1080
                  %v1082 = vld [vmem:[%s800 + $0x1180] sm:$0xff]
                  %1083 = vst [vmem:[%s801 + $0x460] sm:$0xff] %v1082
                  %v1084 = vld [vmem:[%s800 + $0x11a0] sm:$0xff]
                  %1085 = vst [vmem:[%s801 + $0x468] sm:$0xff] %v1084
                  %v1086 = vld [vmem:[%s800 + $0x11c0] sm:$0xff]
                  %1087 = vst [vmem:[%s801 + $0x470] sm:$0xff] %v1086
                  %v1088 = vld [vmem:[%s800 + $0x11e0] sm:$0xff]
                  %1089 = vst [vmem:[%s801 + $0x478] sm:$0xff] %v1088
                  %v1090 = vld [vmem:[%s800 + $0x1200] sm:$0xff]
                  %1091 = vst [vmem:[%s801 + $0x480] sm:$0xff] %v1090
                  %v1092 = vld [vmem:[%s800 + $0x1220] sm:$0xff]
                  %1093 = vst [vmem:[%s801 + $0x488] sm:$0xff] %v1092
                  %v1094 = vld [vmem:[%s800 + $0x1240] sm:$0xff]
                  %1095 = vst [vmem:[%s801 + $0x490] sm:$0xff] %v1094
                  %v1096 = vld [vmem:[%s800 + $0x1260] sm:$0xff]
                  %1097 = vst [vmem:[%s801 + $0x498] sm:$0xff] %v1096
                  %v1098 = vld [vmem:[%s800 + $0x1280] sm:$0xff]
                  %1099 = vst [vmem:[%s801 + $0x4a0] sm:$0xff] %v1098
                  %v1100 = vld [vmem:[%s800 + $0x12a0] sm:$0xff]
                  %1101 = vst [vmem:[%s801 + $0x4a8] sm:$0xff] %v1100
                  %v1102 = vld [vmem:[%s800 + $0x12c0] sm:$0xff]
                  %1103 = vst [vmem:[%s801 + $0x4b0] sm:$0xff] %v1102
                  %v1104 = vld [vmem:[%s800 + $0x12e0] sm:$0xff]
                  %1105 = vst [vmem:[%s801 + $0x4b8] sm:$0xff] %v1104
                  %v1106 = vld [vmem:[%s800 + $0x1300] sm:$0xff]
                  %1107 = vst [vmem:[%s801 + $0x4c0] sm:$0xff] %v1106
                  %v1108 = vld [vmem:[%s800 + $0x1320] sm:$0xff]
                  %1109 = vst [vmem:[%s801 + $0x4c8] sm:$0xff] %v1108
                  %v1110 = vld [vmem:[%s800 + $0x1340] sm:$0xff]
                  %1111 = vst [vmem:[%s801 + $0x4d0] sm:$0xff] %v1110
                  %v1112 = vld [vmem:[%s800 + $0x1360] sm:$0xff]
                  %1113 = vst [vmem:[%s801 + $0x4d8] sm:$0xff] %v1112
                  %v1114 = vld [vmem:[%s800 + $0x1380] sm:$0xff]
                  %1115 = vst [vmem:[%s801 + $0x4e0] sm:$0xff] %v1114
                  %v1116 = vld [vmem:[%s800 + $0x13a0] sm:$0xff]
                  %1117 = vst [vmem:[%s801 + $0x4e8] sm:$0xff] %v1116
                  %v1118 = vld [vmem:[%s800 + $0x13c0] sm:$0xff]
                  %1119 = vst [vmem:[%s801 + $0x4f0] sm:$0xff] %v1118
                  %v1120 = vld [vmem:[%s800 + $0x13e0] sm:$0xff]
                  %1121 = vst [vmem:[%s801 + $0x4f8] sm:$0xff] %v1120
                  %v1122 = vld [vmem:[%s800 + $0x1400] sm:$0xff]
                  %1123 = vst [vmem:[%s801 + $0x500] sm:$0xff] %v1122
                  %v1124 = vld [vmem:[%s800 + $0x1420] sm:$0xff]
                  %1125 = vst [vmem:[%s801 + $0x508] sm:$0xff] %v1124
                  %v1126 = vld [vmem:[%s800 + $0x1440] sm:$0xff]
                  %1127 = vst [vmem:[%s801 + $0x510] sm:$0xff] %v1126
                  %v1128 = vld [vmem:[%s800 + $0x1460] sm:$0xff]
                  %1129 = vst [vmem:[%s801 + $0x518] sm:$0xff] %v1128
                  %v1130 = vld [vmem:[%s800 + $0x1480] sm:$0xff]
                  %1131 = vst [vmem:[%s801 + $0x520] sm:$0xff] %v1130
                  %v1132 = vld [vmem:[%s800 + $0x14a0] sm:$0xff]
                  %1133 = vst [vmem:[%s801 + $0x528] sm:$0xff] %v1132
                  %v1134 = vld [vmem:[%s800 + $0x14c0] sm:$0xff]
                  %1135 = vst [vmem:[%s801 + $0x530] sm:$0xff] %v1134
                  %v1136 = vld [vmem:[%s800 + $0x14e0] sm:$0xff]
                  %1137 = vst [vmem:[%s801 + $0x538] sm:$0xff] %v1136
                  %v1138 = vld [vmem:[%s800 + $0x1500] sm:$0xff]
                  %1139 = vst [vmem:[%s801 + $0x540] sm:$0xff] %v1138
                  %v1140 = vld [vmem:[%s800 + $0x1520] sm:$0xff]
                  %1141 = vst [vmem:[%s801 + $0x548] sm:$0xff] %v1140
                  %v1142 = vld [vmem:[%s800 + $0x1540] sm:$0xff]
                  %1143 = vst [vmem:[%s801 + $0x550] sm:$0xff] %v1142
                  %v1144 = vld [vmem:[%s800 + $0x1560] sm:$0xff]
                  %1145 = vst [vmem:[%s801 + $0x558] sm:$0xff] %v1144
                  %v1146 = vld [vmem:[%s800 + $0x1580] sm:$0xff]
                  %1147 = vst [vmem:[%s801 + $0x560] sm:$0xff] %v1146
                  %v1148 = vld [vmem:[%s800 + $0x15a0] sm:$0xff]
                  %1149 = vst [vmem:[%s801 + $0x568] sm:$0xff] %v1148
                  %v1150 = vld [vmem:[%s800 + $0x15c0] sm:$0xff]
                  %1151 = vst [vmem:[%s801 + $0x570] sm:$0xff] %v1150
                  %v1152 = vld [vmem:[%s800 + $0x15e0] sm:$0xff]
                  %1153 = vst [vmem:[%s801 + $0x578] sm:$0xff] %v1152
                $region84: #{deformation_block_forward.1} parent=78 // loop_footer
                  %s799 = sadd.s32 1, %s795
                $region85: #{deformation_block_forward.1} parent=78 // loop_footer_branch
                  %794 = sbr.rel target = $region81
                $region86: #{deformation_block_forward.1} parent=78 // loop_exit
                  _
              $region79: #{deformation_block_forward.1} parent=63 // pred_fallthru
                _
              // Predicated region
              $region87: #{deformation_block_forward.1} parent=63 // pred_check
                _
              $region88: #{deformation_block_forward.1} parent=63 // pred_check_branch
                %1155 = sbr.rel target = $region90
              $region89: #{deformation_block_forward.1} parent=63 // pred_region
                _
              $region90: #{deformation_block_forward.1} parent=63 // pred_fallthru
                _
            $region64: #{deformation_block_forward.1} parent=59 // pred_fallthru
              _
            // Predicated region
            $region65: #{deformation_block_forward.1} parent=59 // pred_check
              _
            $region66: #{deformation_block_forward.1} parent=59 // pred_check_branch
              %429 = sbr.rel target = $region68
            $region67: #{deformation_block_forward.1} parent=59 // pred_region
              %s431 = ssub.s32 256, 1
              loop: start=0, step=1, limit=1
              $region69: #{deformation_block_forward.1} parent=67 // loop_pre_header
                _
              $region70: #{deformation_block_forward.1} parent=67 // loop_header
                %s433 = sphi 0, %s437
                %p434 = scmp.ge.s32.totalorder %s433, 1
                %s438 = sphi %s423, %s423
                %s439 = sphi %s420, %s420
              $region71: #{deformation_block_forward.1} parent=67 // loop_header_branch
                %436 = sbr.rel (%p434) target = $region75
              $region72: #{deformation_block_forward.1} parent=67 // loop_body
                %v440 = vld [vmem:[%s438] sm:%s431]
                %441 = vst [vmem:[%s439] sm:%s431] %v440
                %v442 = vld [vmem:[%s438 + $0x20] sm:%s431]
                %443 = vst [vmem:[%s439 + $0x8] sm:%s431] %v442
                %v444 = vld [vmem:[%s438 + $0x40] sm:%s431]
                %445 = vst [vmem:[%s439 + $0x10] sm:%s431] %v444
                %v446 = vld [vmem:[%s438 + $0x60] sm:%s431]
                %447 = vst [vmem:[%s439 + $0x18] sm:%s431] %v446
                %v448 = vld [vmem:[%s438 + $0x80] sm:%s431]
                %449 = vst [vmem:[%s439 + $0x20] sm:%s431] %v448
                %v450 = vld [vmem:[%s438 + $0xa0] sm:%s431]
                %451 = vst [vmem:[%s439 + $0x28] sm:%s431] %v450
                %v452 = vld [vmem:[%s438 + $0xc0] sm:%s431]
                %453 = vst [vmem:[%s439 + $0x30] sm:%s431] %v452
                %v454 = vld [vmem:[%s438 + $0xe0] sm:%s431]
                %455 = vst [vmem:[%s439 + $0x38] sm:%s431] %v454
                %v456 = vld [vmem:[%s438 + $0x100] sm:%s431]
                %457 = vst [vmem:[%s439 + $0x40] sm:%s431] %v456
                %v458 = vld [vmem:[%s438 + $0x120] sm:%s431]
                %459 = vst [vmem:[%s439 + $0x48] sm:%s431] %v458
                %v460 = vld [vmem:[%s438 + $0x140] sm:%s431]
                %461 = vst [vmem:[%s439 + $0x50] sm:%s431] %v460
                %v462 = vld [vmem:[%s438 + $0x160] sm:%s431]
                %463 = vst [vmem:[%s439 + $0x58] sm:%s431] %v462
                %v464 = vld [vmem:[%s438 + $0x180] sm:%s431]
                %465 = vst [vmem:[%s439 + $0x60] sm:%s431] %v464
                %v466 = vld [vmem:[%s438 + $0x1a0] sm:%s431]
                %467 = vst [vmem:[%s439 + $0x68] sm:%s431] %v466
                %v468 = vld [vmem:[%s438 + $0x1c0] sm:%s431]
                %469 = vst [vmem:[%s439 + $0x70] sm:%s431] %v468
                %v470 = vld [vmem:[%s438 + $0x1e0] sm:%s431]
                %471 = vst [vmem:[%s439 + $0x78] sm:%s431] %v470
                %v472 = vld [vmem:[%s438 + $0x200] sm:%s431]
                %473 = vst [vmem:[%s439 + $0x80] sm:%s431] %v472
                %v474 = vld [vmem:[%s438 + $0x220] sm:%s431]
                %475 = vst [vmem:[%s439 + $0x88] sm:%s431] %v474
                %v476 = vld [vmem:[%s438 + $0x240] sm:%s431]
                %477 = vst [vmem:[%s439 + $0x90] sm:%s431] %v476
                %v478 = vld [vmem:[%s438 + $0x260] sm:%s431]
                %479 = vst [vmem:[%s439 + $0x98] sm:%s431] %v478
                %v480 = vld [vmem:[%s438 + $0x280] sm:%s431]
                %481 = vst [vmem:[%s439 + $0xa0] sm:%s431] %v480
                %v482 = vld [vmem:[%s438 + $0x2a0] sm:%s431]
                %483 = vst [vmem:[%s439 + $0xa8] sm:%s431] %v482
                %v484 = vld [vmem:[%s438 + $0x2c0] sm:%s431]
                %485 = vst [vmem:[%s439 + $0xb0] sm:%s431] %v484
                %v486 = vld [vmem:[%s438 + $0x2e0] sm:%s431]
                %487 = vst [vmem:[%s439 + $0xb8] sm:%s431] %v486
                %v488 = vld [vmem:[%s438 + $0x300] sm:%s431]
                %489 = vst [vmem:[%s439 + $0xc0] sm:%s431] %v488
                %v490 = vld [vmem:[%s438 + $0x320] sm:%s431]
                %491 = vst [vmem:[%s439 + $0xc8] sm:%s431] %v490
                %v492 = vld [vmem:[%s438 + $0x340] sm:%s431]
                %493 = vst [vmem:[%s439 + $0xd0] sm:%s431] %v492
                %v494 = vld [vmem:[%s438 + $0x360] sm:%s431]
                %495 = vst [vmem:[%s439 + $0xd8] sm:%s431] %v494
                %v496 = vld [vmem:[%s438 + $0x380] sm:%s431]
                %497 = vst [vmem:[%s439 + $0xe0] sm:%s431] %v496
                %v498 = vld [vmem:[%s438 + $0x3a0] sm:%s431]
                %499 = vst [vmem:[%s439 + $0xe8] sm:%s431] %v498
                %v500 = vld [vmem:[%s438 + $0x3c0] sm:%s431]
                %501 = vst [vmem:[%s439 + $0xf0] sm:%s431] %v500
                %v502 = vld [vmem:[%s438 + $0x3e0] sm:%s431]
                %503 = vst [vmem:[%s439 + $0xf8] sm:%s431] %v502
                %v504 = vld [vmem:[%s438 + $0x400] sm:%s431]
                %505 = vst [vmem:[%s439 + $0x100] sm:%s431] %v504
                %v506 = vld [vmem:[%s438 + $0x420] sm:%s431]
                %507 = vst [vmem:[%s439 + $0x108] sm:%s431] %v506
                %v508 = vld [vmem:[%s438 + $0x440] sm:%s431]
                %509 = vst [vmem:[%s439 + $0x110] sm:%s431] %v508
                %v510 = vld [vmem:[%s438 + $0x460] sm:%s431]
                %511 = vst [vmem:[%s439 + $0x118] sm:%s431] %v510
                %v512 = vld [vmem:[%s438 + $0x480] sm:%s431]
                %513 = vst [vmem:[%s439 + $0x120] sm:%s431] %v512
                %v514 = vld [vmem:[%s438 + $0x4a0] sm:%s431]
                %515 = vst [vmem:[%s439 + $0x128] sm:%s431] %v514
                %v516 = vld [vmem:[%s438 + $0x4c0] sm:%s431]
                %517 = vst [vmem:[%s439 + $0x130] sm:%s431] %v516
                %v518 = vld [vmem:[%s438 + $0x4e0] sm:%s431]
                %519 = vst [vmem:[%s439 + $0x138] sm:%s431] %v518
                %v520 = vld [vmem:[%s438 + $0x500] sm:%s431]
                %521 = vst [vmem:[%s439 + $0x140] sm:%s431] %v520
                %v522 = vld [vmem:[%s438 + $0x520] sm:%s431]
                %523 = vst [vmem:[%s439 + $0x148] sm:%s431] %v522
                %v524 = vld [vmem:[%s438 + $0x540] sm:%s431]
                %525 = vst [vmem:[%s439 + $0x150] sm:%s431] %v524
                %v526 = vld [vmem:[%s438 + $0x560] sm:%s431]
                %527 = vst [vmem:[%s439 + $0x158] sm:%s431] %v526
                %v528 = vld [vmem:[%s438 + $0x580] sm:%s431]
                %529 = vst [vmem:[%s439 + $0x160] sm:%s431] %v528
                %v530 = vld [vmem:[%s438 + $0x5a0] sm:%s431]
                %531 = vst [vmem:[%s439 + $0x168] sm:%s431] %v530
                %v532 = vld [vmem:[%s438 + $0x5c0] sm:%s431]
                %533 = vst [vmem:[%s439 + $0x170] sm:%s431] %v532
                %v534 = vld [vmem:[%s438 + $0x5e0] sm:%s431]
                %535 = vst [vmem:[%s439 + $0x178] sm:%s431] %v534
                %v536 = vld [vmem:[%s438 + $0x600] sm:%s431]
                %537 = vst [vmem:[%s439 + $0x180] sm:%s431] %v536
                %v538 = vld [vmem:[%s438 + $0x620] sm:%s431]
                %539 = vst [vmem:[%s439 + $0x188] sm:%s431] %v538
                %v540 = vld [vmem:[%s438 + $0x640] sm:%s431]
                %541 = vst [vmem:[%s439 + $0x190] sm:%s431] %v540
                %v542 = vld [vmem:[%s438 + $0x660] sm:%s431]
                %543 = vst [vmem:[%s439 + $0x198] sm:%s431] %v542
                %v544 = vld [vmem:[%s438 + $0x680] sm:%s431]
                %545 = vst [vmem:[%s439 + $0x1a0] sm:%s431] %v544
                %v546 = vld [vmem:[%s438 + $0x6a0] sm:%s431]
                %547 = vst [vmem:[%s439 + $0x1a8] sm:%s431] %v546
                %v548 = vld [vmem:[%s438 + $0x6c0] sm:%s431]
                %549 = vst [vmem:[%s439 + $0x1b0] sm:%s431] %v548
                %v550 = vld [vmem:[%s438 + $0x6e0] sm:%s431]
                %551 = vst [vmem:[%s439 + $0x1b8] sm:%s431] %v550
                %v552 = vld [vmem:[%s438 + $0x700] sm:%s431]
                %553 = vst [vmem:[%s439 + $0x1c0] sm:%s431] %v552
                %v554 = vld [vmem:[%s438 + $0x720] sm:%s431]
                %555 = vst [vmem:[%s439 + $0x1c8] sm:%s431] %v554
                %v556 = vld [vmem:[%s438 + $0x740] sm:%s431]
                %557 = vst [vmem:[%s439 + $0x1d0] sm:%s431] %v556
                %v558 = vld [vmem:[%s438 + $0x760] sm:%s431]
                %559 = vst [vmem:[%s439 + $0x1d8] sm:%s431] %v558
                %v560 = vld [vmem:[%s438 + $0x780] sm:%s431]
                %561 = vst [vmem:[%s439 + $0x1e0] sm:%s431] %v560
                %v562 = vld [vmem:[%s438 + $0x7a0] sm:%s431]
                %563 = vst [vmem:[%s439 + $0x1e8] sm:%s431] %v562
                %v564 = vld [vmem:[%s438 + $0x7c0] sm:%s431]
                %565 = vst [vmem:[%s439 + $0x1f0] sm:%s431] %v564
                %v566 = vld [vmem:[%s438 + $0x7e0] sm:%s431]
                %567 = vst [vmem:[%s439 + $0x1f8] sm:%s431] %v566
                %v568 = vld [vmem:[%s438 + $0x800] sm:%s431]
                %569 = vst [vmem:[%s439 + $0x200] sm:%s431] %v568
                %v570 = vld [vmem:[%s438 + $0x820] sm:%s431]
                %571 = vst [vmem:[%s439 + $0x208] sm:%s431] %v570
                %v572 = vld [vmem:[%s438 + $0x840] sm:%s431]
                %573 = vst [vmem:[%s439 + $0x210] sm:%s431] %v572
                %v574 = vld [vmem:[%s438 + $0x860] sm:%s431]
                %575 = vst [vmem:[%s439 + $0x218] sm:%s431] %v574
                %v576 = vld [vmem:[%s438 + $0x880] sm:%s431]
                %577 = vst [vmem:[%s439 + $0x220] sm:%s431] %v576
                %v578 = vld [vmem:[%s438 + $0x8a0] sm:%s431]
                %579 = vst [vmem:[%s439 + $0x228] sm:%s431] %v578
                %v580 = vld [vmem:[%s438 + $0x8c0] sm:%s431]
                %581 = vst [vmem:[%s439 + $0x230] sm:%s431] %v580
                %v582 = vld [vmem:[%s438 + $0x8e0] sm:%s431]
                %583 = vst [vmem:[%s439 + $0x238] sm:%s431] %v582
                %v584 = vld [vmem:[%s438 + $0x900] sm:%s431]
                %585 = vst [vmem:[%s439 + $0x240] sm:%s431] %v584
                %v586 = vld [vmem:[%s438 + $0x920] sm:%s431]
                %587 = vst [vmem:[%s439 + $0x248] sm:%s431] %v586
                %v588 = vld [vmem:[%s438 + $0x940] sm:%s431]
                %589 = vst [vmem:[%s439 + $0x250] sm:%s431] %v588
                %v590 = vld [vmem:[%s438 + $0x960] sm:%s431]
                %591 = vst [vmem:[%s439 + $0x258] sm:%s431] %v590
                %v592 = vld [vmem:[%s438 + $0x980] sm:%s431]
                %593 = vst [vmem:[%s439 + $0x260] sm:%s431] %v592
                %v594 = vld [vmem:[%s438 + $0x9a0] sm:%s431]
                %595 = vst [vmem:[%s439 + $0x268] sm:%s431] %v594
                %v596 = vld [vmem:[%s438 + $0x9c0] sm:%s431]
                %597 = vst [vmem:[%s439 + $0x270] sm:%s431] %v596
                %v598 = vld [vmem:[%s438 + $0x9e0] sm:%s431]
                %599 = vst [vmem:[%s439 + $0x278] sm:%s431] %v598
                %v600 = vld [vmem:[%s438 + $0xa00] sm:%s431]
                %601 = vst [vmem:[%s439 + $0x280] sm:%s431] %v600
                %v602 = vld [vmem:[%s438 + $0xa20] sm:%s431]
                %603 = vst [vmem:[%s439 + $0x288] sm:%s431] %v602
                %v604 = vld [vmem:[%s438 + $0xa40] sm:%s431]
                %605 = vst [vmem:[%s439 + $0x290] sm:%s431] %v604
                %v606 = vld [vmem:[%s438 + $0xa60] sm:%s431]
                %607 = vst [vmem:[%s439 + $0x298] sm:%s431] %v606
                %v608 = vld [vmem:[%s438 + $0xa80] sm:%s431]
                %609 = vst [vmem:[%s439 + $0x2a0] sm:%s431] %v608
                %v610 = vld [vmem:[%s438 + $0xaa0] sm:%s431]
                %611 = vst [vmem:[%s439 + $0x2a8] sm:%s431] %v610
                %v612 = vld [vmem:[%s438 + $0xac0] sm:%s431]
                %613 = vst [vmem:[%s439 + $0x2b0] sm:%s431] %v612
                %v614 = vld [vmem:[%s438 + $0xae0] sm:%s431]
                %615 = vst [vmem:[%s439 + $0x2b8] sm:%s431] %v614
                %v616 = vld [vmem:[%s438 + $0xb00] sm:%s431]
                %617 = vst [vmem:[%s439 + $0x2c0] sm:%s431] %v616
                %v618 = vld [vmem:[%s438 + $0xb20] sm:%s431]
                %619 = vst [vmem:[%s439 + $0x2c8] sm:%s431] %v618
                %v620 = vld [vmem:[%s438 + $0xb40] sm:%s431]
                %621 = vst [vmem:[%s439 + $0x2d0] sm:%s431] %v620
                %v622 = vld [vmem:[%s438 + $0xb60] sm:%s431]
                %623 = vst [vmem:[%s439 + $0x2d8] sm:%s431] %v622
                %v624 = vld [vmem:[%s438 + $0xb80] sm:%s431]
                %625 = vst [vmem:[%s439 + $0x2e0] sm:%s431] %v624
                %v626 = vld [vmem:[%s438 + $0xba0] sm:%s431]
                %627 = vst [vmem:[%s439 + $0x2e8] sm:%s431] %v626
                %v628 = vld [vmem:[%s438 + $0xbc0] sm:%s431]
                %629 = vst [vmem:[%s439 + $0x2f0] sm:%s431] %v628
                %v630 = vld [vmem:[%s438 + $0xbe0] sm:%s431]
                %631 = vst [vmem:[%s439 + $0x2f8] sm:%s431] %v630
                %v632 = vld [vmem:[%s438 + $0xc00] sm:%s431]
                %633 = vst [vmem:[%s439 + $0x300] sm:%s431] %v632
                %v634 = vld [vmem:[%s438 + $0xc20] sm:%s431]
                %635 = vst [vmem:[%s439 + $0x308] sm:%s431] %v634
                %v636 = vld [vmem:[%s438 + $0xc40] sm:%s431]
                %637 = vst [vmem:[%s439 + $0x310] sm:%s431] %v636
                %v638 = vld [vmem:[%s438 + $0xc60] sm:%s431]
                %639 = vst [vmem:[%s439 + $0x318] sm:%s431] %v638
                %v640 = vld [vmem:[%s438 + $0xc80] sm:%s431]
                %641 = vst [vmem:[%s439 + $0x320] sm:%s431] %v640
                %v642 = vld [vmem:[%s438 + $0xca0] sm:%s431]
                %643 = vst [vmem:[%s439 + $0x328] sm:%s431] %v642
                %v644 = vld [vmem:[%s438 + $0xcc0] sm:%s431]
                %645 = vst [vmem:[%s439 + $0x330] sm:%s431] %v644
                %v646 = vld [vmem:[%s438 + $0xce0] sm:%s431]
                %647 = vst [vmem:[%s439 + $0x338] sm:%s431] %v646
                %v648 = vld [vmem:[%s438 + $0xd00] sm:%s431]
                %649 = vst [vmem:[%s439 + $0x340] sm:%s431] %v648
                %v650 = vld [vmem:[%s438 + $0xd20] sm:%s431]
                %651 = vst [vmem:[%s439 + $0x348] sm:%s431] %v650
                %v652 = vld [vmem:[%s438 + $0xd40] sm:%s431]
                %653 = vst [vmem:[%s439 + $0x350] sm:%s431] %v652
                %v654 = vld [vmem:[%s438 + $0xd60] sm:%s431]
                %655 = vst [vmem:[%s439 + $0x358] sm:%s431] %v654
                %v656 = vld [vmem:[%s438 + $0xd80] sm:%s431]
                %657 = vst [vmem:[%s439 + $0x360] sm:%s431] %v656
                %v658 = vld [vmem:[%s438 + $0xda0] sm:%s431]
                %659 = vst [vmem:[%s439 + $0x368] sm:%s431] %v658
                %v660 = vld [vmem:[%s438 + $0xdc0] sm:%s431]
                %661 = vst [vmem:[%s439 + $0x370] sm:%s431] %v660
                %v662 = vld [vmem:[%s438 + $0xde0] sm:%s431]
                %663 = vst [vmem:[%s439 + $0x378] sm:%s431] %v662
                %v664 = vld [vmem:[%s438 + $0xe00] sm:%s431]
                %665 = vst [vmem:[%s439 + $0x380] sm:%s431] %v664
                %v666 = vld [vmem:[%s438 + $0xe20] sm:%s431]
                %667 = vst [vmem:[%s439 + $0x388] sm:%s431] %v666
                %v668 = vld [vmem:[%s438 + $0xe40] sm:%s431]
                %669 = vst [vmem:[%s439 + $0x390] sm:%s431] %v668
                %v670 = vld [vmem:[%s438 + $0xe60] sm:%s431]
                %671 = vst [vmem:[%s439 + $0x398] sm:%s431] %v670
                %v672 = vld [vmem:[%s438 + $0xe80] sm:%s431]
                %673 = vst [vmem:[%s439 + $0x3a0] sm:%s431] %v672
                %v674 = vld [vmem:[%s438 + $0xea0] sm:%s431]
                %675 = vst [vmem:[%s439 + $0x3a8] sm:%s431] %v674
                %v676 = vld [vmem:[%s438 + $0xec0] sm:%s431]
                %677 = vst [vmem:[%s439 + $0x3b0] sm:%s431] %v676
                %v678 = vld [vmem:[%s438 + $0xee0] sm:%s431]
                %679 = vst [vmem:[%s439 + $0x3b8] sm:%s431] %v678
                %v680 = vld [vmem:[%s438 + $0xf00] sm:%s431]
                %681 = vst [vmem:[%s439 + $0x3c0] sm:%s431] %v680
                %v682 = vld [vmem:[%s438 + $0xf20] sm:%s431]
                %683 = vst [vmem:[%s439 + $0x3c8] sm:%s431] %v682
                %v684 = vld [vmem:[%s438 + $0xf40] sm:%s431]
                %685 = vst [vmem:[%s439 + $0x3d0] sm:%s431] %v684
                %v686 = vld [vmem:[%s438 + $0xf60] sm:%s431]
                %687 = vst [vmem:[%s439 + $0x3d8] sm:%s431] %v686
                %v688 = vld [vmem:[%s438 + $0xf80] sm:%s431]
                %689 = vst [vmem:[%s439 + $0x3e0] sm:%s431] %v688
                %v690 = vld [vmem:[%s438 + $0xfa0] sm:%s431]
                %691 = vst [vmem:[%s439 + $0x3e8] sm:%s431] %v690
                %v692 = vld [vmem:[%s438 + $0xfc0] sm:%s431]
                %693 = vst [vmem:[%s439 + $0x3f0] sm:%s431] %v692
                %v694 = vld [vmem:[%s438 + $0xfe0] sm:%s431]
                %695 = vst [vmem:[%s439 + $0x3f8] sm:%s431] %v694
                %v696 = vld [vmem:[%s438 + $0x1000] sm:%s431]
                %697 = vst [vmem:[%s439 + $0x400] sm:%s431] %v696
                %v698 = vld [vmem:[%s438 + $0x1020] sm:%s431]
                %699 = vst [vmem:[%s439 + $0x408] sm:%s431] %v698
                %v700 = vld [vmem:[%s438 + $0x1040] sm:%s431]
                %701 = vst [vmem:[%s439 + $0x410] sm:%s431] %v700
                %v702 = vld [vmem:[%s438 + $0x1060] sm:%s431]
                %703 = vst [vmem:[%s439 + $0x418] sm:%s431] %v702
                %v704 = vld [vmem:[%s438 + $0x1080] sm:%s431]
                %705 = vst [vmem:[%s439 + $0x420] sm:%s431] %v704
                %v706 = vld [vmem:[%s438 + $0x10a0] sm:%s431]
                %707 = vst [vmem:[%s439 + $0x428] sm:%s431] %v706
                %v708 = vld [vmem:[%s438 + $0x10c0] sm:%s431]
                %709 = vst [vmem:[%s439 + $0x430] sm:%s431] %v708
                %v710 = vld [vmem:[%s438 + $0x10e0] sm:%s431]
                %711 = vst [vmem:[%s439 + $0x438] sm:%s431] %v710
                %v712 = vld [vmem:[%s438 + $0x1100] sm:%s431]
                %713 = vst [vmem:[%s439 + $0x440] sm:%s431] %v712
                %v714 = vld [vmem:[%s438 + $0x1120] sm:%s431]
                %715 = vst [vmem:[%s439 + $0x448] sm:%s431] %v714
                %v716 = vld [vmem:[%s438 + $0x1140] sm:%s431]
                %717 = vst [vmem:[%s439 + $0x450] sm:%s431] %v716
                %v718 = vld [vmem:[%s438 + $0x1160] sm:%s431]
                %719 = vst [vmem:[%s439 + $0x458] sm:%s431] %v718
                %v720 = vld [vmem:[%s438 + $0x1180] sm:%s431]
                %721 = vst [vmem:[%s439 + $0x460] sm:%s431] %v720
                %v722 = vld [vmem:[%s438 + $0x11a0] sm:%s431]
                %723 = vst [vmem:[%s439 + $0x468] sm:%s431] %v722
                %v724 = vld [vmem:[%s438 + $0x11c0] sm:%s431]
                %725 = vst [vmem:[%s439 + $0x470] sm:%s431] %v724
                %v726 = vld [vmem:[%s438 + $0x11e0] sm:%s431]
                %727 = vst [vmem:[%s439 + $0x478] sm:%s431] %v726
                %v728 = vld [vmem:[%s438 + $0x1200] sm:%s431]
                %729 = vst [vmem:[%s439 + $0x480] sm:%s431] %v728
                %v730 = vld [vmem:[%s438 + $0x1220] sm:%s431]
                %731 = vst [vmem:[%s439 + $0x488] sm:%s431] %v730
                %v732 = vld [vmem:[%s438 + $0x1240] sm:%s431]
                %733 = vst [vmem:[%s439 + $0x490] sm:%s431] %v732
                %v734 = vld [vmem:[%s438 + $0x1260] sm:%s431]
                %735 = vst [vmem:[%s439 + $0x498] sm:%s431] %v734
                %v736 = vld [vmem:[%s438 + $0x1280] sm:%s431]
                %737 = vst [vmem:[%s439 + $0x4a0] sm:%s431] %v736
                %v738 = vld [vmem:[%s438 + $0x12a0] sm:%s431]
                %739 = vst [vmem:[%s439 + $0x4a8] sm:%s431] %v738
                %v740 = vld [vmem:[%s438 + $0x12c0] sm:%s431]
                %741 = vst [vmem:[%s439 + $0x4b0] sm:%s431] %v740
                %v742 = vld [vmem:[%s438 + $0x12e0] sm:%s431]
                %743 = vst [vmem:[%s439 + $0x4b8] sm:%s431] %v742
                %v744 = vld [vmem:[%s438 + $0x1300] sm:%s431]
                %745 = vst [vmem:[%s439 + $0x4c0] sm:%s431] %v744
                %v746 = vld [vmem:[%s438 + $0x1320] sm:%s431]
                %747 = vst [vmem:[%s439 + $0x4c8] sm:%s431] %v746
                %v748 = vld [vmem:[%s438 + $0x1340] sm:%s431]
                %749 = vst [vmem:[%s439 + $0x4d0] sm:%s431] %v748
                %v750 = vld [vmem:[%s438 + $0x1360] sm:%s431]
                %751 = vst [vmem:[%s439 + $0x4d8] sm:%s431] %v750
                %v752 = vld [vmem:[%s438 + $0x1380] sm:%s431]
                %753 = vst [vmem:[%s439 + $0x4e0] sm:%s431] %v752
                %v754 = vld [vmem:[%s438 + $0x13a0] sm:%s431]
                %755 = vst [vmem:[%s439 + $0x4e8] sm:%s431] %v754
                %v756 = vld [vmem:[%s438 + $0x13c0] sm:%s431]
                %757 = vst [vmem:[%s439 + $0x4f0] sm:%s431] %v756
                %v758 = vld [vmem:[%s438 + $0x13e0] sm:%s431]
                %759 = vst [vmem:[%s439 + $0x4f8] sm:%s431] %v758
                %v760 = vld [vmem:[%s438 + $0x1400] sm:%s431]
                %761 = vst [vmem:[%s439 + $0x500] sm:%s431] %v760
                %v762 = vld [vmem:[%s438 + $0x1420] sm:%s431]
                %763 = vst [vmem:[%s439 + $0x508] sm:%s431] %v762
                %v764 = vld [vmem:[%s438 + $0x1440] sm:%s431]
                %765 = vst [vmem:[%s439 + $0x510] sm:%s431] %v764
                %v766 = vld [vmem:[%s438 + $0x1460] sm:%s431]
                %767 = vst [vmem:[%s439 + $0x518] sm:%s431] %v766
                %v768 = vld [vmem:[%s438 + $0x1480] sm:%s431]
                %769 = vst [vmem:[%s439 + $0x520] sm:%s431] %v768
                %v770 = vld [vmem:[%s438 + $0x14a0] sm:%s431]
                %771 = vst [vmem:[%s439 + $0x528] sm:%s431] %v770
                %v772 = vld [vmem:[%s438 + $0x14c0] sm:%s431]
                %773 = vst [vmem:[%s439 + $0x530] sm:%s431] %v772
                %v774 = vld [vmem:[%s438 + $0x14e0] sm:%s431]
                %775 = vst [vmem:[%s439 + $0x538] sm:%s431] %v774
                %v776 = vld [vmem:[%s438 + $0x1500] sm:%s431]
                %777 = vst [vmem:[%s439 + $0x540] sm:%s431] %v776
                %v778 = vld [vmem:[%s438 + $0x1520] sm:%s431]
                %779 = vst [vmem:[%s439 + $0x548] sm:%s431] %v778
                %v780 = vld [vmem:[%s438 + $0x1540] sm:%s431]
                %781 = vst [vmem:[%s439 + $0x550] sm:%s431] %v780
                %v782 = vld [vmem:[%s438 + $0x1560] sm:%s431]
                %783 = vst [vmem:[%s439 + $0x558] sm:%s431] %v782
                %v784 = vld [vmem:[%s438 + $0x1580] sm:%s431]
                %785 = vst [vmem:[%s439 + $0x560] sm:%s431] %v784
                %v786 = vld [vmem:[%s438 + $0x15a0] sm:%s431]
                %787 = vst [vmem:[%s439 + $0x568] sm:%s431] %v786
                %v788 = vld [vmem:[%s438 + $0x15c0] sm:%s431]
                %789 = vst [vmem:[%s439 + $0x570] sm:%s431] %v788
                %v790 = vld [vmem:[%s438 + $0x15e0] sm:%s431]
                %791 = vst [vmem:[%s439 + $0x578] sm:%s431] %v790
              $region73: #{deformation_block_forward.1} parent=67 // loop_footer
                %s437 = sadd.s32 1, %s433
              $region74: #{deformation_block_forward.1} parent=67 // loop_footer_branch
                %432 = sbr.rel target = $region70
              $region75: #{deformation_block_forward.1} parent=67 // loop_exit
                _
            $region68: #{deformation_block_forward.1} parent=59 // pred_fallthru
              _
          $region60: #{deformation_block_forward.1} parent=55 // pred_fallthru
            _
          %1156 = vnop
        $region56: #{deformation_block_forward.1} parent=51 // pred_fallthru
          _
        // Predicated region
        $region91: #{deformation_block_forward.1} parent=51 // pred_check
          %p1157 = pneg %p114
        $region92: #{deformation_block_forward.1} parent=51 // pred_check_branch
          %1159 = sbr.rel (%p1157) target = $region94
        $region93: #{deformation_block_forward.1} parent=51 // pred_region
          %s1160 = smul.u32 2, %s26
          %p1161 = scmp.lt.s32.totalorder %s1160, 7
          %s1162 = scalar_select %p1161, %s1160, 7
          %s1163 = scalar_lea.vmem %s3, %s1162
          %s1164 = smul.u32 2, %s26
        $region94: #{deformation_block_forward.1} parent=51 // pred_fallthru
          _
        // Predicated region
        $region95: #{deformation_block_forward.1} parent=51 // pred_check
          %p1165 = pneg %p140
        $region96: #{deformation_block_forward.1} parent=51 // pred_check_branch
          %1167 = sbr.rel (%p1165) target = $region98
        $region97: #{deformation_block_forward.1} parent=51 // pred_region
          %s1168 = sand.u32 %s130, 1
          %s1169 = scalar_lea.sflag [#allocation5], %s1168
          %s1170 = sand.u32 %s130, 1
          %s1171 = smul.addr %s1170, 512
          %s1172 = scalar_lea.vmem [#allocation4], %s1171
          %s1173 = smul.u32 32, %s26
          %1175 = vsyncadd %s1169, 0
          %s1176 = smul.addr %s1173, 4
          %s1177 = smul.addr %s1176, 4
          %s1178 = scalar_lea.hbm %s4, %s1177
          %s1179 = sshll.u32 %s1178, 4
          %s1180 = int_to_ptr.hbm [resolvable:$true] %s1179
          %s1181 = sshll.u32 %s1172, 4
          %s1182 = int_to_ptr.vmem [resolvable:$true] %s1181
          %1187 = dma.hbm_to_vmem [thread:$0]  %s1180, 8192, %s1182, %s1169, 256, 256, 16
        $region98: #{deformation_block_forward.1} parent=51 // pred_fallthru
          _
      $region52: #{deformation_block_forward.1} parent=5 // pred_fallthru
        _
      %p1188 = scmp.le.s32.totalorder 1, %s26
      %p1189 = scmp.lt.s32.totalorder %s26, 5
      %p1190 = pnand %p1188, %p1189
      %p1191 = pneg %p1190
      // Predicated region
      $region99: #{deformation_block_forward.1} parent=5 // pred_check
        _
      $region100: #{deformation_block_forward.1} parent=5 // pred_check_branch
        %1193 = sbr.rel (%p1190) target = $region102
      $region101: #{deformation_block_forward.1} parent=5 // pred_region
        %s1194 = ssub.s32 %s26, 1
        %s1195 = sand.u32 %s81, 1
        %s1196 = sand.u32 %s81, 1
        %s1197 = smul.addr %s1196, 1408
        %s1198 = scalar_lea.vmem [#allocation3], %s1197
        // Predicated region
        $region103: #{deformation_block_forward.1} parent=101 // pred_check
          %p1199 = pneg %p94
        $region104: #{deformation_block_forward.1} parent=101 // pred_check_branch
          %1201 = sbr.rel (%p1199) target = $region106
        $region105: #{deformation_block_forward.1} parent=101 // pred_region
          _
        $region106: #{deformation_block_forward.1} parent=101 // pred_fallthru
          _
        %s1202 = sand.u32 %s133, 1
        %s1203 = scalar_lea.sflag [#allocation5], %s1202
        %s1204 = sand.u32 %s133, 1
        %s1205 = smul.addr %s1204, 512
        %s1206 = scalar_lea.vmem [#allocation4], %s1205
        // Predicated region
        $region107: #{deformation_block_forward.1} parent=101 // pred_check
          %p1207 = pneg %p146
        $region108: #{deformation_block_forward.1} parent=101 // pred_check_branch
          %1209 = sbr.rel (%p1207) target = $region110
        $region109: #{deformation_block_forward.1} parent=101 // pred_region
          %1211 = dma.done %s1203, 8192
        $region110: #{deformation_block_forward.1} parent=101 // pred_fallthru
          _
        // Predicated region
        $region111: #{deformation_block_forward.1} parent=101 // pred_check
          %p1212 = pneg %p188
        $region112: #{deformation_block_forward.1} parent=101 // pred_check_branch
          %1214 = sbr.rel (%p1212) target = $region114
        $region113: #{deformation_block_forward.1} parent=101 // pred_region
          %1216 = dma.done [#allocation8], 8192
        $region114: #{deformation_block_forward.1} parent=101 // pred_fallthru
          _
        // Predicated region
        $region115: #{deformation_block_forward.1} parent=101 // pred_check
          %p1217 = pneg %p230
        $region116: #{deformation_block_forward.1} parent=101 // pred_check_branch
          %1219 = sbr.rel (%p1217) target = $region118
        $region117: #{deformation_block_forward.1} parent=101 // pred_region
          %1221 = dma.done [#allocation8], 2048
        $region118: #{deformation_block_forward.1} parent=101 // pred_fallthru
          _
        // Predicated region
        $region119: #{deformation_block_forward.1} parent=101 // pred_check
          %p1222 = pneg %p272
        $region120: #{deformation_block_forward.1} parent=101 // pred_check_branch
          %1224 = sbr.rel (%p1222) target = $region122
        $region121: #{deformation_block_forward.1} parent=101 // pred_region
          %1226 = dma.done [#allocation11], 1024
        $region122: #{deformation_block_forward.1} parent=101 // pred_fallthru
          _
        %p1227 = pneg %p47
        %p1228 = pneg %p44
        %p1229 = pneg %p68
        %p1230 = pneg %p65
        %s1231 = sand.u32 %s81, 1
        %s1232 = sand.u32 %s81, 1
        %s1233 = smul.addr %s1232, 1408
        %s1234 = scalar_lea.vmem [#allocation3], %s1233
        %p1235 = pneg %p94
        %p1236 = pneg %p91
        %s1237 = smul.u32 2, %s31
        %p1238 = scmp.lt.s32.totalorder %s1237, 7
        %s1239 = scalar_select %p1238, %s1237, 7
        %s1240 = scalar_lea.vmem %s3, %s1239
        %p1241 = pneg %p120
        %p1242 = pneg %p117
        %s1243 = sand.u32 %s133, 1
        %s1244 = scalar_lea.sflag [#allocation5], %s1243
        %s1245 = sand.u32 %s133, 1
        %s1246 = smul.addr %s1245, 512
        %s1247 = scalar_lea.vmem [#allocation4], %s1246
        %p1248 = pneg %p146
        %p1249 = pneg %p143
        %p1250 = pneg %p167
        %p1251 = pneg %p164
        %p1252 = pneg %p188
        %p1253 = pneg %p185
        %p1254 = pneg %p209
        %p1255 = pneg %p206
        %p1256 = pneg %p230
        %p1257 = pneg %p227
        %p1258 = pneg %p251
        %p1259 = pneg %p248
        %p1260 = pneg %p272
        %p1261 = pneg %p269
        %p1262 = pneg %p293
        %p1263 = pneg %p290
        %p1264 = pneg %p314
        %p1265 = pneg %p311
        %p1266 = pneg %p335
        %p1267 = pneg %p332
        %s1268 = smul.u32 2, %s31
        %s1269 = smul.u32 2, %s31
        %p1270 = scmp.lt.s32.totalorder %s1269, 7
        %s1271 = scalar_select %p1270, %s1269, 7
        %s1272 = scalar_lea.vmem %s3, %s1271
        %s1273 = smul.u32 2, %s31
        %s1274 = smul.u32 32, %s31
        %v1275 = vld [vmem:[%s0] sm:$0xff]
        %v1276 = vld [vmem:[%s0 + $0x8] sm:$0xff]
        %v1277 = vld [vmem:[%s0 + $0x10] sm:$0xff]
        %v1278 = vld [vmem:[%s0 + $0x18] sm:$0xff]
        %v1279 = vld [vmem:[%s0 + $0x20] sm:$0xff]
        %v1280 = vld [vmem:[%s0 + $0x28] sm:$0xff]
        %v1281 = vld [vmem:[%s0 + $0x30] sm:$0xff]
        %v1282 = vld [vmem:[%s0 + $0x38] sm:$0xff]
        %p1283 = scmp.eq.s32.totalorder %s31, 0
        // Predicated region
        $region123: #{deformation_block_forward.1} parent=101 // pred_check
          %p1284 = pneg %p1283
        $region124: #{deformation_block_forward.1} parent=101 // pred_check_branch
          %1286 = sbr.rel (%p1284) target = $region126
        $region125: #{deformation_block_forward.1} parent=101 // pred_region
          %1287 = vst [vmem:[#allocation2] sm:$0xff] 0.0
          %1288 = vst [vmem:[#allocation2 + $0x8] sm:$0xff] 0.0
          %1289 = vst [vmem:[#allocation2 + $0x10] sm:$0xff] 0.0
          %1290 = vst [vmem:[#allocation2 + $0x18] sm:$0xff] 0.0
          %1291 = vst [vmem:[#allocation2 + $0x20] sm:$0xff] 0.0
          %1292 = vst [vmem:[#allocation2 + $0x28] sm:$0xff] 0.0
          %1293 = vst [vmem:[#allocation2 + $0x30] sm:$0xff] 0.0
          %1294 = vst [vmem:[#allocation2 + $0x38] sm:$0xff] 0.0
          %1295 = vst [vmem:[#allocation2 + $0x40] sm:$0xff] 0.0
          %1296 = vst [vmem:[#allocation2 + $0x48] sm:$0xff] 0.0
          %1297 = vst [vmem:[#allocation2 + $0x50] sm:$0xff] 0.0
          %1298 = vst [vmem:[#allocation2 + $0x58] sm:$0xff] 0.0
          %1299 = vst [vmem:[#allocation2 + $0x60] sm:$0xff] 0.0
          %1300 = vst [vmem:[#allocation2 + $0x68] sm:$0xff] 0.0
          %1301 = vst [vmem:[#allocation2 + $0x70] sm:$0xff] 0.0
          %1302 = vst [vmem:[#allocation2 + $0x78] sm:$0xff] 0.0
          %1303 = vst [vmem:[#allocation2 + $0x80] sm:$0xff] 0.0
          %1304 = vst [vmem:[#allocation2 + $0x88] sm:$0xff] 0.0
          %1305 = vst [vmem:[#allocation2 + $0x90] sm:$0xff] 0.0
          %1306 = vst [vmem:[#allocation2 + $0x98] sm:$0xff] 0.0
          %1307 = vst [vmem:[#allocation2 + $0xa0] sm:$0xff] 0.0
          %1308 = vst [vmem:[#allocation2 + $0xa8] sm:$0xff] 0.0
          %1309 = vst [vmem:[#allocation2 + $0xb0] sm:$0xff] 0.0
          %1310 = vst [vmem:[#allocation2 + $0xb8] sm:$0xff] 0.0
          %1311 = vst [vmem:[#allocation2 + $0xc0] sm:$0xff] 0.0
          %1312 = vst [vmem:[#allocation2 + $0xc8] sm:$0xff] 0.0
          %1313 = vst [vmem:[#allocation2 + $0xd0] sm:$0xff] 0.0
          %1314 = vst [vmem:[#allocation2 + $0xd8] sm:$0xff] 0.0
          %1315 = vst [vmem:[#allocation2 + $0xe0] sm:$0xff] 0.0
          %1316 = vst [vmem:[#allocation2 + $0xe8] sm:$0xff] 0.0
          %1317 = vst [vmem:[#allocation2 + $0xf0] sm:$0xff] 0.0
          %1318 = vst [vmem:[#allocation2 + $0xf8] sm:$0xff] 0.0
        $region126: #{deformation_block_forward.1} parent=101 // pred_fallthru
          _
        %v1319 = vld [vmem:[%s1] sm:$0xff]
        %v1320 = vld [vmem:[%s1 + $0x8] sm:$0xff]
        %v1321 = vld [vmem:[%s1 + $0x10] sm:$0xff]
        %v1322 = vld [vmem:[%s1 + $0x18] sm:$0xff]
        %v1323 = vld [vmem:[%s1 + $0x20] sm:$0xff]
        %v1324 = vld [vmem:[%s1 + $0x28] sm:$0xf]
        %v1325 = vld [vmem:[%s1 + $0x2c] sm:$0xff]
        %v1326 = vld [vmem:[%s1 + $0x34] sm:$0xff]
        %v1327 = vld [vmem:[%s1 + $0x3c] sm:$0xff]
        %v1328 = vld [vmem:[%s1 + $0x44] sm:$0xff]
        %v1329 = vld [vmem:[%s1 + $0x4c] sm:$0xff]
        %v1330 = vld [vmem:[%s1 + $0x54] sm:$0xf]
        %v1331 = vld [vmem:[%s1 + $0x58] sm:$0xff]
        %v1332 = vld [vmem:[%s1 + $0x60] sm:$0xff]
        %v1333 = vld [vmem:[%s1 + $0x68] sm:$0xff]
        %v1334 = vld [vmem:[%s1 + $0x70] sm:$0xff]
        %v1335 = vld [vmem:[%s1 + $0x78] sm:$0xff]
        %v1336 = vld [vmem:[%s1 + $0x80] sm:$0xf]
        %v1337 = vld [vmem:[%s1 + $0x84] sm:$0xff]
        %v1338 = vld [vmem:[%s1 + $0x8c] sm:$0xff]
        %v1339 = vld [vmem:[%s1 + $0x94] sm:$0xff]
        %v1340 = vld [vmem:[%s1 + $0x9c] sm:$0xff]
        %v1341 = vld [vmem:[%s1 + $0xa4] sm:$0xff]
        %v1342 = vld [vmem:[%s1 + $0xac] sm:$0xf]
        %v1343 = vld [vmem:[%s1 + $0xb0] sm:$0xff]
        %v1344 = vld [vmem:[%s1 + $0xb8] sm:$0xff]
        %v1345 = vld [vmem:[%s1 + $0xc0] sm:$0xff]
        %v1346 = vld [vmem:[%s1 + $0xc8] sm:$0xff]
        %v1347 = vld [vmem:[%s1 + $0xd0] sm:$0xff]
        %v1348 = vld [vmem:[%s1 + $0xd8] sm:$0xf]
        %v1349 = vld [vmem:[%s1 + $0xdc] sm:$0xff]
        %v1350 = vld [vmem:[%s1 + $0xe4] sm:$0xff]
        %v1351 = vld [vmem:[%s1 + $0xec] sm:$0xff]
        %v1352 = vld [vmem:[%s1 + $0xf4] sm:$0xff]
        %v1353 = vld [vmem:[%s1 + $0xfc] sm:$0xff]
        %v1354 = vld [vmem:[%s1 + $0x104] sm:$0xf]
        %v1355 = vld [vmem:[%s1 + $0x108] sm:$0xff]
        %v1356 = vld [vmem:[%s1 + $0x110] sm:$0xff]
        %v1357 = vld [vmem:[%s1 + $0x118] sm:$0xff]
        %v1358 = vld [vmem:[%s1 + $0x120] sm:$0xff]
        %v1359 = vld [vmem:[%s1 + $0x128] sm:$0xff]
        %v1360 = vld [vmem:[%s1 + $0x130] sm:$0xf]
        %v1361 = vld [vmem:[%s1 + $0x134] sm:$0xff]
        %v1362 = vld [vmem:[%s1 + $0x13c] sm:$0xff]
        %v1363 = vld [vmem:[%s1 + $0x144] sm:$0xff]
        %v1364 = vld [vmem:[%s1 + $0x14c] sm:$0xff]
        %v1365 = vld [vmem:[%s1 + $0x154] sm:$0xff]
        %v1366 = vld [vmem:[%s1 + $0x15c] sm:$0xf]
        %v1367 = vld [vmem:[%s1198] sm:$0xff]
        %v1368 = vld [vmem:[%s1198 + $0x8] sm:$0xff]
        %v1369 = vld [vmem:[%s1198 + $0x10] sm:$0xff]
        %v1370 = vld [vmem:[%s1198 + $0x18] sm:$0xff]
        %v1371 = vld [vmem:[%s1198 + $0x20] sm:$0xff]
        %v1372 = vld [vmem:[%s1198 + $0x28] sm:$0xff]
        %v1373 = vld [vmem:[%s1198 + $0x30] sm:$0xff]
        %v1374 = vld [vmem:[%s1198 + $0x38] sm:$0xff]
        %v1375 = vld [vmem:[%s1198 + $0x40] sm:$0xff]
        %v1376 = vld [vmem:[%s1198 + $0x48] sm:$0xff]
        %v1377 = vld [vmem:[%s1198 + $0x50] sm:$0xff]
        %v1378 = vld [vmem:[%s1198 + $0x58] sm:$0xff]
        %v1379 = vld [vmem:[%s1198 + $0x60] sm:$0xff]
        %v1380 = vld [vmem:[%s1198 + $0x68] sm:$0xff]
        %v1381 = vld [vmem:[%s1198 + $0x70] sm:$0xff]
        %v1382 = vld [vmem:[%s1198 + $0x78] sm:$0xff]
        %v1383 = vld [vmem:[%s1198 + $0x80] sm:$0xff]
        %v1384 = vld [vmem:[%s1198 + $0x88] sm:$0xff]
        %v1385 = vld [vmem:[%s1198 + $0x90] sm:$0xff]
        %v1386 = vld [vmem:[%s1198 + $0x98] sm:$0xff]
        %v1387 = vld [vmem:[%s1198 + $0xa0] sm:$0xff]
        %v1388 = vld [vmem:[%s1198 + $0xa8] sm:$0xff]
        %v1389 = vld [vmem:[%s1198 + $0xb0] sm:$0xff]
        %v1390 = vld [vmem:[%s1198 + $0xb8] sm:$0xff]
        %v1391 = vld [vmem:[%s1198 + $0xc0] sm:$0xff]
        %v1392 = vld [vmem:[%s1198 + $0xc8] sm:$0xff]
        %v1393 = vld [vmem:[%s1198 + $0xd0] sm:$0xff]
        %v1394 = vld [vmem:[%s1198 + $0xd8] sm:$0xff]
        %v1395 = vld [vmem:[%s1198 + $0xe0] sm:$0xff]
        %v1396 = vld [vmem:[%s1198 + $0xe8] sm:$0xff]
        %v1397 = vld [vmem:[%s1198 + $0xf0] sm:$0xff]
        %v1398 = vld [vmem:[%s1198 + $0xf8] sm:$0xff]
        %v1399 = vld [vmem:[%s1198 + $0x100] sm:$0xff]
        %v1400 = vld [vmem:[%s1198 + $0x108] sm:$0xff]
        %v1401 = vld [vmem:[%s1198 + $0x110] sm:$0xff]
        %v1402 = vld [vmem:[%s1198 + $0x118] sm:$0xff]
        %v1403 = vld [vmem:[%s1198 + $0x120] sm:$0xff]
        %v1404 = vld [vmem:[%s1198 + $0x128] sm:$0xff]
        %v1405 = vld [vmem:[%s1198 + $0x130] sm:$0xff]
        %v1406 = vld [vmem:[%s1198 + $0x138] sm:$0xff]
        %v1407 = vld [vmem:[%s1198 + $0x140] sm:$0xff]
        %v1408 = vld [vmem:[%s1198 + $0x148] sm:$0xff]
        %v1409 = vld [vmem:[%s1198 + $0x150] sm:$0xff]
        %v1410 = vld [vmem:[%s1198 + $0x158] sm:$0xff]
        %v1411 = vld [vmem:[%s1198 + $0x160] sm:$0xff]
        %v1412 = vld [vmem:[%s1198 + $0x168] sm:$0xff]
        %v1413 = vld [vmem:[%s1198 + $0x170] sm:$0xff]
        %v1414 = vld [vmem:[%s1198 + $0x178] sm:$0xff]
        %v1415 = vld [vmem:[%s1198 + $0x180] sm:$0xff]
        %v1416 = vld [vmem:[%s1198 + $0x188] sm:$0xff]
        %v1417 = vld [vmem:[%s1198 + $0x190] sm:$0xff]
        %v1418 = vld [vmem:[%s1198 + $0x198] sm:$0xff]
        %v1419 = vld [vmem:[%s1198 + $0x1a0] sm:$0xff]
        %v1420 = vld [vmem:[%s1198 + $0x1a8] sm:$0xff]
        %v1421 = vld [vmem:[%s1198 + $0x1b0] sm:$0xff]
        %v1422 = vld [vmem:[%s1198 + $0x1b8] sm:$0xff]
        %v1423 = vld [vmem:[%s1198 + $0x1c0] sm:$0xff]
        %v1424 = vld [vmem:[%s1198 + $0x1c8] sm:$0xff]
        %v1425 = vld [vmem:[%s1198 + $0x1d0] sm:$0xff]
        %v1426 = vld [vmem:[%s1198 + $0x1d8] sm:$0xff]
        %v1427 = vld [vmem:[%s1198 + $0x1e0] sm:$0xff]
        %v1428 = vld [vmem:[%s1198 + $0x1e8] sm:$0xff]
        %v1429 = vld [vmem:[%s1198 + $0x1f0] sm:$0xff]
        %v1430 = vld [vmem:[%s1198 + $0x1f8] sm:$0xff]
        %v1431 = vld [vmem:[%s1198 + $0x200] sm:$0xff]
        %v1432 = vld [vmem:[%s1198 + $0x208] sm:$0xff]
        %v1433 = vld [vmem:[%s1198 + $0x210] sm:$0xff]
        %v1434 = vld [vmem:[%s1198 + $0x218] sm:$0xff]
        %v1435 = vld [vmem:[%s1198 + $0x220] sm:$0xff]
        %v1436 = vld [vmem:[%s1198 + $0x228] sm:$0xff]
        %v1437 = vld [vmem:[%s1198 + $0x230] sm:$0xff]
        %v1438 = vld [vmem:[%s1198 + $0x238] sm:$0xff]
        %v1439 = vld [vmem:[%s1198 + $0x240] sm:$0xff]
        %v1440 = vld [vmem:[%s1198 + $0x248] sm:$0xff]
        %v1441 = vld [vmem:[%s1198 + $0x250] sm:$0xff]
        %v1442 = vld [vmem:[%s1198 + $0x258] sm:$0xff]
        %v1443 = vld [vmem:[%s1198 + $0x260] sm:$0xff]
        %v1444 = vld [vmem:[%s1198 + $0x268] sm:$0xff]
        %v1445 = vld [vmem:[%s1198 + $0x270] sm:$0xff]
        %v1446 = vld [vmem:[%s1198 + $0x278] sm:$0xff]
        %v1447 = vld [vmem:[%s1198 + $0x280] sm:$0xff]
        %v1448 = vld [vmem:[%s1198 + $0x288] sm:$0xff]
        %v1449 = vld [vmem:[%s1198 + $0x290] sm:$0xff]
        %v1450 = vld [vmem:[%s1198 + $0x298] sm:$0xff]
        %v1451 = vld [vmem:[%s1198 + $0x2a0] sm:$0xff]
        %v1452 = vld [vmem:[%s1198 + $0x2a8] sm:$0xff]
        %v1453 = vld [vmem:[%s1198 + $0x2b0] sm:$0xff]
        %v1454 = vld [vmem:[%s1198 + $0x2b8] sm:$0xff]
        %v1455 = vld [vmem:[%s1198 + $0x2c0] sm:$0xff]
        %v1456 = vld [vmem:[%s1198 + $0x2c8] sm:$0xff]
        %v1457 = vld [vmem:[%s1198 + $0x2d0] sm:$0xff]
        %v1458 = vld [vmem:[%s1198 + $0x2d8] sm:$0xff]
        %v1459 = vld [vmem:[%s1198 + $0x2e0] sm:$0xff]
        %v1460 = vld [vmem:[%s1198 + $0x2e8] sm:$0xff]
        %v1461 = vld [vmem:[%s1198 + $0x2f0] sm:$0xff]
        %v1462 = vld [vmem:[%s1198 + $0x2f8] sm:$0xff]
        %v1463 = vld [vmem:[%s1198 + $0x300] sm:$0xff]
        %v1464 = vld [vmem:[%s1198 + $0x308] sm:$0xff]
        %v1465 = vld [vmem:[%s1198 + $0x310] sm:$0xff]
        %v1466 = vld [vmem:[%s1198 + $0x318] sm:$0xff]
        %v1467 = vld [vmem:[%s1198 + $0x320] sm:$0xff]
        %v1468 = vld [vmem:[%s1198 + $0x328] sm:$0xff]
        %v1469 = vld [vmem:[%s1198 + $0x330] sm:$0xff]
        %v1470 = vld [vmem:[%s1198 + $0x338] sm:$0xff]
        %v1471 = vld [vmem:[%s1198 + $0x340] sm:$0xff]
        %v1472 = vld [vmem:[%s1198 + $0x348] sm:$0xff]
        %v1473 = vld [vmem:[%s1198 + $0x350] sm:$0xff]
        %v1474 = vld [vmem:[%s1198 + $0x358] sm:$0xff]
        %v1475 = vld [vmem:[%s1198 + $0x360] sm:$0xff]
        %v1476 = vld [vmem:[%s1198 + $0x368] sm:$0xff]
        %v1477 = vld [vmem:[%s1198 + $0x370] sm:$0xff]
        %v1478 = vld [vmem:[%s1198 + $0x378] sm:$0xff]
        %v1479 = vld [vmem:[%s1198 + $0x380] sm:$0xff]
        %v1480 = vld [vmem:[%s1198 + $0x388] sm:$0xff]
        %v1481 = vld [vmem:[%s1198 + $0x390] sm:$0xff]
        %v1482 = vld [vmem:[%s1198 + $0x398] sm:$0xff]
        %v1483 = vld [vmem:[%s1198 + $0x3a0] sm:$0xff]
        %v1484 = vld [vmem:[%s1198 + $0x3a8] sm:$0xff]
        %v1485 = vld [vmem:[%s1198 + $0x3b0] sm:$0xff]
        %v1486 = vld [vmem:[%s1198 + $0x3b8] sm:$0xff]
        %v1487 = vld [vmem:[%s1198 + $0x3c0] sm:$0xff]
        %v1488 = vld [vmem:[%s1198 + $0x3c8] sm:$0xff]
        %v1489 = vld [vmem:[%s1198 + $0x3d0] sm:$0xff]
        %v1490 = vld [vmem:[%s1198 + $0x3d8] sm:$0xff]
        %v1491 = vld [vmem:[%s1198 + $0x3e0] sm:$0xff]
        %v1492 = vld [vmem:[%s1198 + $0x3e8] sm:$0xff]
        %v1493 = vld [vmem:[%s1198 + $0x3f0] sm:$0xff]
        %v1494 = vld [vmem:[%s1198 + $0x3f8] sm:$0xff]
        %v1495 = vld [vmem:[%s1198 + $0x400] sm:$0xff]
        %v1496 = vld [vmem:[%s1198 + $0x408] sm:$0xff]
        %v1497 = vld [vmem:[%s1198 + $0x410] sm:$0xff]
        %v1498 = vld [vmem:[%s1198 + $0x418] sm:$0xff]
        %v1499 = vld [vmem:[%s1198 + $0x420] sm:$0xff]
        %v1500 = vld [vmem:[%s1198 + $0x428] sm:$0xff]
        %v1501 = vld [vmem:[%s1198 + $0x430] sm:$0xff]
        %v1502 = vld [vmem:[%s1198 + $0x438] sm:$0xff]
        %v1503 = vld [vmem:[%s1198 + $0x440] sm:$0xff]
        %v1504 = vld [vmem:[%s1198 + $0x448] sm:$0xff]
        %v1505 = vld [vmem:[%s1198 + $0x450] sm:$0xff]
        %v1506 = vld [vmem:[%s1198 + $0x458] sm:$0xff]
        %v1507 = vld [vmem:[%s1198 + $0x460] sm:$0xff]
        %v1508 = vld [vmem:[%s1198 + $0x468] sm:$0xff]
        %v1509 = vld [vmem:[%s1198 + $0x470] sm:$0xff]
        %v1510 = vld [vmem:[%s1198 + $0x478] sm:$0xff]
        %v1511 = vld [vmem:[%s1198 + $0x480] sm:$0xff]
        %v1512 = vld [vmem:[%s1198 + $0x488] sm:$0xff]
        %v1513 = vld [vmem:[%s1198 + $0x490] sm:$0xff]
        %v1514 = vld [vmem:[%s1198 + $0x498] sm:$0xff]
        %v1515 = vld [vmem:[%s1198 + $0x4a0] sm:$0xff]
        %v1516 = vld [vmem:[%s1198 + $0x4a8] sm:$0xff]
        %v1517 = vld [vmem:[%s1198 + $0x4b0] sm:$0xff]
        %v1518 = vld [vmem:[%s1198 + $0x4b8] sm:$0xff]
        %v1519 = vld [vmem:[%s1198 + $0x4c0] sm:$0xff]
        %v1520 = vld [vmem:[%s1198 + $0x4c8] sm:$0xff]
        %v1521 = vld [vmem:[%s1198 + $0x4d0] sm:$0xff]
        %v1522 = vld [vmem:[%s1198 + $0x4d8] sm:$0xff]
        %v1523 = vld [vmem:[%s1198 + $0x4e0] sm:$0xff]
        %v1524 = vld [vmem:[%s1198 + $0x4e8] sm:$0xff]
        %v1525 = vld [vmem:[%s1198 + $0x4f0] sm:$0xff]
        %v1526 = vld [vmem:[%s1198 + $0x4f8] sm:$0xff]
        %v1527 = vld [vmem:[%s1198 + $0x500] sm:$0xff]
        %v1528 = vld [vmem:[%s1198 + $0x508] sm:$0xff]
        %v1529 = vld [vmem:[%s1198 + $0x510] sm:$0xff]
        %v1530 = vld [vmem:[%s1198 + $0x518] sm:$0xff]
        %v1531 = vld [vmem:[%s1198 + $0x520] sm:$0xff]
        %v1532 = vld [vmem:[%s1198 + $0x528] sm:$0xff]
        %v1533 = vld [vmem:[%s1198 + $0x530] sm:$0xff]
        %v1534 = vld [vmem:[%s1198 + $0x538] sm:$0xff]
        %v1535 = vld [vmem:[%s1198 + $0x540] sm:$0xff]
        %v1536 = vld [vmem:[%s1198 + $0x548] sm:$0xff]
        %v1537 = vld [vmem:[%s1198 + $0x550] sm:$0xff]
        %v1538 = vld [vmem:[%s1198 + $0x558] sm:$0xff]
        %v1539 = vld [vmem:[%s1198 + $0x560] sm:$0xff]
        %v1540 = vld [vmem:[%s1198 + $0x568] sm:$0xff]
        %v1541 = vld [vmem:[%s1198 + $0x570] sm:$0xff]
        %v1542 = vld [vmem:[%s1198 + $0x578] sm:$0xff]
        %v1591 = vunpack.c.l.b16 %v1319
        %v1592 = vunpack.c.h.b16 %v1319
        %v1593 = vunpack.c.l.b16 %v1320
        %v1594 = vunpack.c.h.b16 %v1320
        %v1595 = vunpack.c.l.b16 %v1321
        %v1596 = vunpack.c.h.b16 %v1321
        %v1597 = vunpack.c.l.b16 %v1322
        %v1598 = vunpack.c.h.b16 %v1322
        %v1599 = vunpack.c.l.b16 %v1323
        %v1600 = vunpack.c.h.b16 %v1323
        %v1601 = vunpack.c.l.b16 %v1324
        %v1602 = vunpack.c.l.b16 %v1325
        %v1603 = vunpack.c.h.b16 %v1325
        %v1604 = vunpack.c.l.b16 %v1326
        %v1605 = vunpack.c.h.b16 %v1326
        %v1606 = vunpack.c.l.b16 %v1327
        %v1607 = vunpack.c.h.b16 %v1327
        %v1608 = vunpack.c.l.b16 %v1328
        %v1609 = vunpack.c.h.b16 %v1328
        %v1610 = vunpack.c.l.b16 %v1329
        %v1611 = vunpack.c.h.b16 %v1329
        %v1612 = vunpack.c.l.b16 %v1330
        %v1613 = vunpack.c.l.b16 %v1331
        %v1614 = vunpack.c.h.b16 %v1331
        %v1615 = vunpack.c.l.b16 %v1332
        %v1616 = vunpack.c.h.b16 %v1332
        %v1617 = vunpack.c.l.b16 %v1333
        %v1618 = vunpack.c.h.b16 %v1333
        %v1619 = vunpack.c.l.b16 %v1334
        %v1620 = vunpack.c.h.b16 %v1334
        %v1621 = vunpack.c.l.b16 %v1335
        %v1622 = vunpack.c.h.b16 %v1335
        %v1623 = vunpack.c.l.b16 %v1336
        %v1624 = vunpack.c.l.b16 %v1337
        %v1625 = vunpack.c.h.b16 %v1337
        %v1626 = vunpack.c.l.b16 %v1338
        %v1627 = vunpack.c.h.b16 %v1338
        %v1628 = vunpack.c.l.b16 %v1339
        %v1629 = vunpack.c.h.b16 %v1339
        %v1630 = vunpack.c.l.b16 %v1340
        %v1631 = vunpack.c.h.b16 %v1340
        %v1632 = vunpack.c.l.b16 %v1341
        %v1633 = vunpack.c.h.b16 %v1341
        %v1634 = vunpack.c.l.b16 %v1342
        %v1635 = vunpack.c.l.b16 %v1343
        %v1636 = vunpack.c.h.b16 %v1343
        %v1637 = vunpack.c.l.b16 %v1344
        %v1638 = vunpack.c.h.b16 %v1344
        %v1639 = vunpack.c.l.b16 %v1345
        %v1640 = vunpack.c.h.b16 %v1345
        %v1641 = vunpack.c.l.b16 %v1346
        %v1642 = vunpack.c.h.b16 %v1346
        %v1643 = vunpack.c.l.b16 %v1347
        %v1644 = vunpack.c.h.b16 %v1347
        %v1645 = vunpack.c.l.b16 %v1348
        %v1646 = vunpack.c.l.b16 %v1349
        %v1647 = vunpack.c.h.b16 %v1349
        %v1648 = vunpack.c.l.b16 %v1350
        %v1649 = vunpack.c.h.b16 %v1350
        %v1650 = vunpack.c.l.b16 %v1351
        %v1651 = vunpack.c.h.b16 %v1351
        %v1652 = vunpack.c.l.b16 %v1352
        %v1653 = vunpack.c.h.b16 %v1352
        %v1654 = vunpack.c.l.b16 %v1353
        %v1655 = vunpack.c.h.b16 %v1353
        %v1656 = vunpack.c.l.b16 %v1354
        %v1657 = vunpack.c.l.b16 %v1355
        %v1658 = vunpack.c.h.b16 %v1355
        %v1659 = vunpack.c.l.b16 %v1356
        %v1660 = vunpack.c.h.b16 %v1356
        %v1661 = vunpack.c.l.b16 %v1357
        %v1662 = vunpack.c.h.b16 %v1357
        %v1663 = vunpack.c.l.b16 %v1358
        %v1664 = vunpack.c.h.b16 %v1358
        %v1665 = vunpack.c.l.b16 %v1359
        %v1666 = vunpack.c.h.b16 %v1359
        %v1667 = vunpack.c.l.b16 %v1360
        %v1668 = vunpack.c.l.b16 %v1361
        %v1669 = vunpack.c.h.b16 %v1361
        %v1670 = vunpack.c.l.b16 %v1362
        %v1671 = vunpack.c.h.b16 %v1362
        %v1672 = vunpack.c.l.b16 %v1363
        %v1673 = vunpack.c.h.b16 %v1363
        %v1674 = vunpack.c.l.b16 %v1364
        %v1675 = vunpack.c.h.b16 %v1364
        %v1676 = vunpack.c.l.b16 %v1365
        %v1677 = vunpack.c.h.b16 %v1365
        %v1678 = vunpack.c.l.b16 %v1366
        %v1679 = vpack.c.b16 %v1602, %v1591
        %v1680 = vpack.c.b16 %v1603, %v1592
        %v1681 = vpack.c.b16 %v1604, %v1593
        %v1682 = vpack.c.b16 %v1605, %v1594
        %v1683 = vpack.c.b16 %v1606, %v1595
        %v1684 = vpack.c.b16 %v1607, %v1596
        %v1685 = vpack.c.b16 %v1608, %v1597
        %v1686 = vpack.c.b16 %v1609, %v1598
        %v1687 = vpack.c.b16 %v1610, %v1599
        %v1688 = vpack.c.b16 %v1611, %v1600
        %v1689 = vpack.c.b16 %v1612, %v1601
        %v1690 = vpack.c.b16 %v1624, %v1613
        %v1691 = vpack.c.b16 %v1625, %v1614
        %v1692 = vpack.c.b16 %v1626, %v1615
        %v1693 = vpack.c.b16 %v1627, %v1616
        %v1694 = vpack.c.b16 %v1628, %v1617
        %v1695 = vpack.c.b16 %v1629, %v1618
        %v1696 = vpack.c.b16 %v1630, %v1619
        %v1697 = vpack.c.b16 %v1631, %v1620
        %v1698 = vpack.c.b16 %v1632, %v1621
        %v1699 = vpack.c.b16 %v1633, %v1622
        %v1700 = vpack.c.b16 %v1634, %v1623
        %v1701 = vpack.c.b16 %v1646, %v1635
        %v1702 = vpack.c.b16 %v1647, %v1636
        %v1703 = vpack.c.b16 %v1648, %v1637
        %v1704 = vpack.c.b16 %v1649, %v1638
        %v1705 = vpack.c.b16 %v1650, %v1639
        %v1706 = vpack.c.b16 %v1651, %v1640
        %v1707 = vpack.c.b16 %v1652, %v1641
        %v1708 = vpack.c.b16 %v1653, %v1642
        %v1709 = vpack.c.b16 %v1654, %v1643
        %v1710 = vpack.c.b16 %v1655, %v1644
        %v1711 = vpack.c.b16 %v1656, %v1645
        %v1712 = vpack.c.b16 %v1668, %v1657
        %v1713 = vpack.c.b16 %v1669, %v1658
        %v1714 = vpack.c.b16 %v1670, %v1659
        %v1715 = vpack.c.b16 %v1671, %v1660
        %v1716 = vpack.c.b16 %v1672, %v1661
        %v1717 = vpack.c.b16 %v1673, %v1662
        %v1718 = vpack.c.b16 %v1674, %v1663
        %v1719 = vpack.c.b16 %v1675, %v1664
        %v1720 = vpack.c.b16 %v1676, %v1665
        %v1721 = vpack.c.b16 %v1677, %v1666
        %v1722 = vpack.c.b16 %v1678, %v1667
        %v1943 = vunpack.c.l.b16 %v1367
        %v1944 = vunpack.c.h.b16 %v1367
        %v1945 = vunpack.c.l.b16 %v1368
        %v1946 = vunpack.c.h.b16 %v1368
        %v1947 = vunpack.c.l.b16 %v1369
        %v1948 = vunpack.c.h.b16 %v1369
        %v1949 = vunpack.c.l.b16 %v1370
        %v1950 = vunpack.c.h.b16 %v1370
        %v1951 = vunpack.c.l.b16 %v1371
        %v1952 = vunpack.c.h.b16 %v1371
        %v1953 = vunpack.c.l.b16 %v1372
        %v1954 = vunpack.c.h.b16 %v1372
        %v1955 = vunpack.c.l.b16 %v1373
        %v1956 = vunpack.c.h.b16 %v1373
        %v1957 = vunpack.c.l.b16 %v1374
        %v1958 = vunpack.c.h.b16 %v1374
        %v1959 = vunpack.c.l.b16 %v1375
        %v1960 = vunpack.c.h.b16 %v1375
        %v1961 = vunpack.c.l.b16 %v1376
        %v1962 = vunpack.c.h.b16 %v1376
        %v1963 = vunpack.c.l.b16 %v1377
        %v1964 = vunpack.c.h.b16 %v1377
        %v1965 = vunpack.c.l.b16 %v1378
        %v1966 = vunpack.c.h.b16 %v1378
        %v1967 = vunpack.c.l.b16 %v1379
        %v1968 = vunpack.c.h.b16 %v1379
        %v1969 = vunpack.c.l.b16 %v1380
        %v1970 = vunpack.c.h.b16 %v1380
        %v1971 = vunpack.c.l.b16 %v1381
        %v1972 = vunpack.c.h.b16 %v1381
        %v1973 = vunpack.c.l.b16 %v1382
        %v1974 = vunpack.c.h.b16 %v1382
        %v1975 = vunpack.c.l.b16 %v1383
        %v1976 = vunpack.c.h.b16 %v1383
        %v1977 = vunpack.c.l.b16 %v1384
        %v1978 = vunpack.c.h.b16 %v1384
        %v1979 = vunpack.c.l.b16 %v1385
        %v1980 = vunpack.c.h.b16 %v1385
        %v1981 = vunpack.c.l.b16 %v1386
        %v1982 = vunpack.c.h.b16 %v1386
        %v1983 = vunpack.c.l.b16 %v1387
        %v1984 = vunpack.c.h.b16 %v1387
        %v1985 = vunpack.c.l.b16 %v1388
        %v1986 = vunpack.c.h.b16 %v1388
        %v1987 = vunpack.c.l.b16 %v1389
        %v1988 = vunpack.c.h.b16 %v1389
        %v1989 = vunpack.c.l.b16 %v1390
        %v1990 = vunpack.c.h.b16 %v1390
        %v1991 = vunpack.c.l.b16 %v1391
        %v1992 = vunpack.c.h.b16 %v1391
        %v1993 = vunpack.c.l.b16 %v1392
        %v1994 = vunpack.c.h.b16 %v1392
        %v1995 = vunpack.c.l.b16 %v1393
        %v1996 = vunpack.c.h.b16 %v1393
        %v1997 = vunpack.c.l.b16 %v1394
        %v1998 = vunpack.c.h.b16 %v1394
        %v1999 = vunpack.c.l.b16 %v1395
        %v2000 = vunpack.c.h.b16 %v1395
        %v2001 = vunpack.c.l.b16 %v1396
        %v2002 = vunpack.c.h.b16 %v1396
        %v2003 = vunpack.c.l.b16 %v1397
        %v2004 = vunpack.c.h.b16 %v1397
        %v2005 = vunpack.c.l.b16 %v1398
        %v2006 = vunpack.c.h.b16 %v1398
        %v2007 = vunpack.c.l.b16 %v1399
        %v2008 = vunpack.c.h.b16 %v1399
        %v2009 = vunpack.c.l.b16 %v1400
        %v2010 = vunpack.c.h.b16 %v1400
        %v2011 = vunpack.c.l.b16 %v1401
        %v2012 = vunpack.c.h.b16 %v1401
        %v2013 = vunpack.c.l.b16 %v1402
        %v2014 = vunpack.c.h.b16 %v1402
        %v2015 = vunpack.c.l.b16 %v1403
        %v2016 = vunpack.c.h.b16 %v1403
        %v2017 = vunpack.c.l.b16 %v1404
        %v2018 = vunpack.c.h.b16 %v1404
        %v2019 = vunpack.c.l.b16 %v1405
        %v2020 = vunpack.c.h.b16 %v1405
        %v2021 = vunpack.c.l.b16 %v1406
        %v2022 = vunpack.c.h.b16 %v1406
        %v2023 = vunpack.c.l.b16 %v1407
        %v2024 = vunpack.c.h.b16 %v1407
        %v2025 = vunpack.c.l.b16 %v1408
        %v2026 = vunpack.c.h.b16 %v1408
        %v2027 = vunpack.c.l.b16 %v1409
        %v2028 = vunpack.c.h.b16 %v1409
        %v2029 = vunpack.c.l.b16 %v1410
        %v2030 = vunpack.c.h.b16 %v1410
        %v2031 = vunpack.c.l.b16 %v1411
        %v2032 = vunpack.c.h.b16 %v1411
        %v2033 = vunpack.c.l.b16 %v1412
        %v2034 = vunpack.c.h.b16 %v1412
        %v2035 = vunpack.c.l.b16 %v1413
        %v2036 = vunpack.c.h.b16 %v1413
        %v2037 = vunpack.c.l.b16 %v1414
        %v2038 = vunpack.c.h.b16 %v1414
        %v2039 = vunpack.c.l.b16 %v1415
        %v2040 = vunpack.c.h.b16 %v1415
        %v2041 = vunpack.c.l.b16 %v1416
        %v2042 = vunpack.c.h.b16 %v1416
        %v2043 = vunpack.c.l.b16 %v1417
        %v2044 = vunpack.c.h.b16 %v1417
        %v2045 = vunpack.c.l.b16 %v1418
        %v2046 = vunpack.c.h.b16 %v1418
        %v2047 = vunpack.c.l.b16 %v1419
        %v2048 = vunpack.c.h.b16 %v1419
        %v2049 = vunpack.c.l.b16 %v1420
        %v2050 = vunpack.c.h.b16 %v1420
        %v2051 = vunpack.c.l.b16 %v1421
        %v2052 = vunpack.c.h.b16 %v1421
        %v2053 = vunpack.c.l.b16 %v1422
        %v2054 = vunpack.c.h.b16 %v1422
        %v2055 = vunpack.c.l.b16 %v1423
        %v2056 = vunpack.c.h.b16 %v1423
        %v2057 = vunpack.c.l.b16 %v1424
        %v2058 = vunpack.c.h.b16 %v1424
        %v2059 = vunpack.c.l.b16 %v1425
        %v2060 = vunpack.c.h.b16 %v1425
        %v2061 = vunpack.c.l.b16 %v1426
        %v2062 = vunpack.c.h.b16 %v1426
        %v2063 = vunpack.c.l.b16 %v1427
        %v2064 = vunpack.c.h.b16 %v1427
        %v2065 = vunpack.c.l.b16 %v1428
        %v2066 = vunpack.c.h.b16 %v1428
        %v2067 = vunpack.c.l.b16 %v1429
        %v2068 = vunpack.c.h.b16 %v1429
        %v2069 = vunpack.c.l.b16 %v1430
        %v2070 = vunpack.c.h.b16 %v1430
        %v2071 = vunpack.c.l.b16 %v1431
        %v2072 = vunpack.c.h.b16 %v1431
        %v2073 = vunpack.c.l.b16 %v1432
        %v2074 = vunpack.c.h.b16 %v1432
        %v2075 = vunpack.c.l.b16 %v1433
        %v2076 = vunpack.c.h.b16 %v1433
        %v2077 = vunpack.c.l.b16 %v1434
        %v2078 = vunpack.c.h.b16 %v1434
        %v2079 = vunpack.c.l.b16 %v1435
        %v2080 = vunpack.c.h.b16 %v1435
        %v2081 = vunpack.c.l.b16 %v1436
        %v2082 = vunpack.c.h.b16 %v1436
        %v2083 = vunpack.c.l.b16 %v1437
        %v2084 = vunpack.c.h.b16 %v1437
        %v2085 = vunpack.c.l.b16 %v1438
        %v2086 = vunpack.c.h.b16 %v1438
        %v2087 = vunpack.c.l.b16 %v1439
        %v2088 = vunpack.c.h.b16 %v1439
        %v2089 = vunpack.c.l.b16 %v1440
        %v2090 = vunpack.c.h.b16 %v1440
        %v2091 = vunpack.c.l.b16 %v1441
        %v2092 = vunpack.c.h.b16 %v1441
        %v2093 = vunpack.c.l.b16 %v1442
        %v2094 = vunpack.c.h.b16 %v1442
        %v2095 = vunpack.c.l.b16 %v1443
        %v2096 = vunpack.c.h.b16 %v1443
        %v2097 = vunpack.c.l.b16 %v1444
        %v2098 = vunpack.c.h.b16 %v1444
        %v2099 = vunpack.c.l.b16 %v1445
        %v2100 = vunpack.c.h.b16 %v1445
        %v2101 = vunpack.c.l.b16 %v1446
        %v2102 = vunpack.c.h.b16 %v1446
        %v2103 = vunpack.c.l.b16 %v1447
        %v2104 = vunpack.c.h.b16 %v1447
        %v2105 = vunpack.c.l.b16 %v1448
        %v2106 = vunpack.c.h.b16 %v1448
        %v2107 = vunpack.c.l.b16 %v1449
        %v2108 = vunpack.c.h.b16 %v1449
        %v2109 = vunpack.c.l.b16 %v1450
        %v2110 = vunpack.c.h.b16 %v1450
        %v2111 = vunpack.c.l.b16 %v1451
        %v2112 = vunpack.c.h.b16 %v1451
        %v2113 = vunpack.c.l.b16 %v1452
        %v2114 = vunpack.c.h.b16 %v1452
        %v2115 = vunpack.c.l.b16 %v1453
        %v2116 = vunpack.c.h.b16 %v1453
        %v2117 = vunpack.c.l.b16 %v1454
        %v2118 = vunpack.c.h.b16 %v1454
        %v2119 = vunpack.c.l.b16 %v1455
        %v2120 = vunpack.c.h.b16 %v1455
        %v2121 = vunpack.c.l.b16 %v1456
        %v2122 = vunpack.c.h.b16 %v1456
        %v2123 = vunpack.c.l.b16 %v1457
        %v2124 = vunpack.c.h.b16 %v1457
        %v2125 = vunpack.c.l.b16 %v1458
        %v2126 = vunpack.c.h.b16 %v1458
        %v2127 = vunpack.c.l.b16 %v1459
        %v2128 = vunpack.c.h.b16 %v1459
        %v2129 = vunpack.c.l.b16 %v1460
        %v2130 = vunpack.c.h.b16 %v1460
        %v2131 = vunpack.c.l.b16 %v1461
        %v2132 = vunpack.c.h.b16 %v1461
        %v2133 = vunpack.c.l.b16 %v1462
        %v2134 = vunpack.c.h.b16 %v1462
        %v2135 = vunpack.c.l.b16 %v1463
        %v2136 = vunpack.c.h.b16 %v1463
        %v2137 = vunpack.c.l.b16 %v1464
        %v2138 = vunpack.c.h.b16 %v1464
        %v2139 = vunpack.c.l.b16 %v1465
        %v2140 = vunpack.c.h.b16 %v1465
        %v2141 = vunpack.c.l.b16 %v1466
        %v2142 = vunpack.c.h.b16 %v1466
        %v2143 = vunpack.c.l.b16 %v1467
        %v2144 = vunpack.c.h.b16 %v1467
        %v2145 = vunpack.c.l.b16 %v1468
        %v2146 = vunpack.c.h.b16 %v1468
        %v2147 = vunpack.c.l.b16 %v1469
        %v2148 = vunpack.c.h.b16 %v1469
        %v2149 = vunpack.c.l.b16 %v1470
        %v2150 = vunpack.c.h.b16 %v1470
        %v2151 = vunpack.c.l.b16 %v1471
        %v2152 = vunpack.c.h.b16 %v1471
        %v2153 = vunpack.c.l.b16 %v1472
        %v2154 = vunpack.c.h.b16 %v1472
        %v2155 = vunpack.c.l.b16 %v1473
        %v2156 = vunpack.c.h.b16 %v1473
        %v2157 = vunpack.c.l.b16 %v1474
        %v2158 = vunpack.c.h.b16 %v1474
        %v2159 = vunpack.c.l.b16 %v1475
        %v2160 = vunpack.c.h.b16 %v1475
        %v2161 = vunpack.c.l.b16 %v1476
        %v2162 = vunpack.c.h.b16 %v1476
        %v2163 = vunpack.c.l.b16 %v1477
        %v2164 = vunpack.c.h.b16 %v1477
        %v2165 = vunpack.c.l.b16 %v1478
        %v2166 = vunpack.c.h.b16 %v1478
        %v2167 = vunpack.c.l.b16 %v1479
        %v2168 = vunpack.c.h.b16 %v1479
        %v2169 = vunpack.c.l.b16 %v1480
        %v2170 = vunpack.c.h.b16 %v1480
        %v2171 = vunpack.c.l.b16 %v1481
        %v2172 = vunpack.c.h.b16 %v1481
        %v2173 = vunpack.c.l.b16 %v1482
        %v2174 = vunpack.c.h.b16 %v1482
        %v2175 = vunpack.c.l.b16 %v1483
        %v2176 = vunpack.c.h.b16 %v1483
        %v2177 = vunpack.c.l.b16 %v1484
        %v2178 = vunpack.c.h.b16 %v1484
        %v2179 = vunpack.c.l.b16 %v1485
        %v2180 = vunpack.c.h.b16 %v1485
        %v2181 = vunpack.c.l.b16 %v1486
        %v2182 = vunpack.c.h.b16 %v1486
        %v2183 = vunpack.c.l.b16 %v1487
        %v2184 = vunpack.c.h.b16 %v1487
        %v2185 = vunpack.c.l.b16 %v1488
        %v2186 = vunpack.c.h.b16 %v1488
        %v2187 = vunpack.c.l.b16 %v1489
        %v2188 = vunpack.c.h.b16 %v1489
        %v2189 = vunpack.c.l.b16 %v1490
        %v2190 = vunpack.c.h.b16 %v1490
        %v2191 = vunpack.c.l.b16 %v1491
        %v2192 = vunpack.c.h.b16 %v1491
        %v2193 = vunpack.c.l.b16 %v1492
        %v2194 = vunpack.c.h.b16 %v1492
        %v2195 = vunpack.c.l.b16 %v1493
        %v2196 = vunpack.c.h.b16 %v1493
        %v2197 = vunpack.c.l.b16 %v1494
        %v2198 = vunpack.c.h.b16 %v1494
        %v2199 = vunpack.c.l.b16 %v1495
        %v2200 = vunpack.c.h.b16 %v1495
        %v2201 = vunpack.c.l.b16 %v1496
        %v2202 = vunpack.c.h.b16 %v1496
        %v2203 = vunpack.c.l.b16 %v1497
        %v2204 = vunpack.c.h.b16 %v1497
        %v2205 = vunpack.c.l.b16 %v1498
        %v2206 = vunpack.c.h.b16 %v1498
        %v2207 = vunpack.c.l.b16 %v1499
        %v2208 = vunpack.c.h.b16 %v1499
        %v2209 = vunpack.c.l.b16 %v1500
        %v2210 = vunpack.c.h.b16 %v1500
        %v2211 = vunpack.c.l.b16 %v1501
        %v2212 = vunpack.c.h.b16 %v1501
        %v2213 = vunpack.c.l.b16 %v1502
        %v2214 = vunpack.c.h.b16 %v1502
        %v2215 = vunpack.c.l.b16 %v1503
        %v2216 = vunpack.c.h.b16 %v1503
        %v2217 = vunpack.c.l.b16 %v1504
        %v2218 = vunpack.c.h.b16 %v1504
        %v2219 = vunpack.c.l.b16 %v1505
        %v2220 = vunpack.c.h.b16 %v1505
        %v2221 = vunpack.c.l.b16 %v1506
        %v2222 = vunpack.c.h.b16 %v1506
        %v2223 = vunpack.c.l.b16 %v1507
        %v2224 = vunpack.c.h.b16 %v1507
        %v2225 = vunpack.c.l.b16 %v1508
        %v2226 = vunpack.c.h.b16 %v1508
        %v2227 = vunpack.c.l.b16 %v1509
        %v2228 = vunpack.c.h.b16 %v1509
        %v2229 = vunpack.c.l.b16 %v1510
        %v2230 = vunpack.c.h.b16 %v1510
        %v2231 = vunpack.c.l.b16 %v1511
        %v2232 = vunpack.c.h.b16 %v1511
        %v2233 = vunpack.c.l.b16 %v1512
        %v2234 = vunpack.c.h.b16 %v1512
        %v2235 = vunpack.c.l.b16 %v1513
        %v2236 = vunpack.c.h.b16 %v1513
        %v2237 = vunpack.c.l.b16 %v1514
        %v2238 = vunpack.c.h.b16 %v1514
        %v2239 = vunpack.c.l.b16 %v1515
        %v2240 = vunpack.c.h.b16 %v1515
        %v2241 = vunpack.c.l.b16 %v1516
        %v2242 = vunpack.c.h.b16 %v1516
        %v2243 = vunpack.c.l.b16 %v1517
        %v2244 = vunpack.c.h.b16 %v1517
        %v2245 = vunpack.c.l.b16 %v1518
        %v2246 = vunpack.c.h.b16 %v1518
        %v2247 = vunpack.c.l.b16 %v1519
        %v2248 = vunpack.c.h.b16 %v1519
        %v2249 = vunpack.c.l.b16 %v1520
        %v2250 = vunpack.c.h.b16 %v1520
        %v2251 = vunpack.c.l.b16 %v1521
        %v2252 = vunpack.c.h.b16 %v1521
        %v2253 = vunpack.c.l.b16 %v1522
        %v2254 = vunpack.c.h.b16 %v1522
        %v2255 = vunpack.c.l.b16 %v1523
        %v2256 = vunpack.c.h.b16 %v1523
        %v2257 = vunpack.c.l.b16 %v1524
        %v2258 = vunpack.c.h.b16 %v1524
        %v2259 = vunpack.c.l.b16 %v1525
        %v2260 = vunpack.c.h.b16 %v1525
        %v2261 = vunpack.c.l.b16 %v1526
        %v2262 = vunpack.c.h.b16 %v1526
        %v2263 = vunpack.c.l.b16 %v1527
        %v2264 = vunpack.c.h.b16 %v1527
        %v2265 = vunpack.c.l.b16 %v1528
        %v2266 = vunpack.c.h.b16 %v1528
        %v2267 = vunpack.c.l.b16 %v1529
        %v2268 = vunpack.c.h.b16 %v1529
        %v2269 = vunpack.c.l.b16 %v1530
        %v2270 = vunpack.c.h.b16 %v1530
        %v2271 = vunpack.c.l.b16 %v1531
        %v2272 = vunpack.c.h.b16 %v1531
        %v2273 = vunpack.c.l.b16 %v1532
        %v2274 = vunpack.c.h.b16 %v1532
        %v2275 = vunpack.c.l.b16 %v1533
        %v2276 = vunpack.c.h.b16 %v1533
        %v2277 = vunpack.c.l.b16 %v1534
        %v2278 = vunpack.c.h.b16 %v1534
        %v2279 = vunpack.c.l.b16 %v1535
        %v2280 = vunpack.c.h.b16 %v1535
        %v2281 = vunpack.c.l.b16 %v1536
        %v2282 = vunpack.c.h.b16 %v1536
        %v2283 = vunpack.c.l.b16 %v1537
        %v2284 = vunpack.c.h.b16 %v1537
        %v2285 = vunpack.c.l.b16 %v1538
        %v2286 = vunpack.c.h.b16 %v1538
        %v2287 = vunpack.c.l.b16 %v1539
        %v2288 = vunpack.c.h.b16 %v1539
        %v2289 = vunpack.c.l.b16 %v1540
        %v2290 = vunpack.c.h.b16 %v1540
        %v2291 = vunpack.c.l.b16 %v1541
        %v2292 = vunpack.c.h.b16 %v1541
        %v2293 = vunpack.c.l.b16 %v1542
        %v2294 = vunpack.c.h.b16 %v1542
        %v2295 = vpack.c.b16 %v1945, %v1943
        %v2296 = vpack.c.b16 %v1946, %v1944
        %v2297 = vpack.c.b16 %v1949, %v1947
        %v2298 = vpack.c.b16 %v1950, %v1948
        %v2299 = vpack.c.b16 %v1953, %v1951
        %v2300 = vpack.c.b16 %v1954, %v1952
        %v2301 = vpack.c.b16 %v1957, %v1955
        %v2302 = vpack.c.b16 %v1958, %v1956
        %v2303 = vpack.c.b16 %v1961, %v1959
        %v2304 = vpack.c.b16 %v1962, %v1960
        %v2305 = vpack.c.b16 %v1965, %v1963
        %v2306 = vpack.c.b16 %v1966, %v1964
        %v2307 = vpack.c.b16 %v1969, %v1967
        %v2308 = vpack.c.b16 %v1970, %v1968
        %v2309 = vpack.c.b16 %v1973, %v1971
        %v2310 = vpack.c.b16 %v1974, %v1972
        %v2311 = vpack.c.b16 %v1977, %v1975
        %v2312 = vpack.c.b16 %v1978, %v1976
        %v2313 = vpack.c.b16 %v1981, %v1979
        %v2314 = vpack.c.b16 %v1982, %v1980
        %v2315 = vpack.c.b16 %v1985, %v1983
        %v2316 = vpack.c.b16 %v1986, %v1984
        %v2317 = vpack.c.b16 %v1989, %v1987
        %v2318 = vpack.c.b16 %v1990, %v1988
        %v2319 = vpack.c.b16 %v1993, %v1991
        %v2320 = vpack.c.b16 %v1994, %v1992
        %v2321 = vpack.c.b16 %v1997, %v1995
        %v2322 = vpack.c.b16 %v1998, %v1996
        %v2323 = vpack.c.b16 %v2001, %v1999
        %v2324 = vpack.c.b16 %v2002, %v2000
        %v2325 = vpack.c.b16 %v2005, %v2003
        %v2326 = vpack.c.b16 %v2006, %v2004
        %v2327 = vpack.c.b16 %v2009, %v2007
        %v2328 = vpack.c.b16 %v2010, %v2008
        %v2329 = vpack.c.b16 %v2013, %v2011
        %v2330 = vpack.c.b16 %v2014, %v2012
        %v2331 = vpack.c.b16 %v2017, %v2015
        %v2332 = vpack.c.b16 %v2018, %v2016
        %v2333 = vpack.c.b16 %v2021, %v2019
        %v2334 = vpack.c.b16 %v2022, %v2020
        %v2335 = vpack.c.b16 %v2025, %v2023
        %v2336 = vpack.c.b16 %v2026, %v2024
        %v2337 = vpack.c.b16 %v2029, %v2027
        %v2338 = vpack.c.b16 %v2030, %v2028
        %v2339 = vpack.c.b16 %v2033, %v2031
        %v2340 = vpack.c.b16 %v2034, %v2032
        %v2341 = vpack.c.b16 %v2037, %v2035
        %v2342 = vpack.c.b16 %v2038, %v2036
        %v2343 = vpack.c.b16 %v2041, %v2039
        %v2344 = vpack.c.b16 %v2042, %v2040
        %v2345 = vpack.c.b16 %v2045, %v2043
        %v2346 = vpack.c.b16 %v2046, %v2044
        %v2347 = vpack.c.b16 %v2049, %v2047
        %v2348 = vpack.c.b16 %v2050, %v2048
        %v2349 = vpack.c.b16 %v2053, %v2051
        %v2350 = vpack.c.b16 %v2054, %v2052
        %v2351 = vpack.c.b16 %v2057, %v2055
        %v2352 = vpack.c.b16 %v2058, %v2056
        %v2353 = vpack.c.b16 %v2061, %v2059
        %v2354 = vpack.c.b16 %v2062, %v2060
        %v2355 = vpack.c.b16 %v2065, %v2063
        %v2356 = vpack.c.b16 %v2066, %v2064
        %v2357 = vpack.c.b16 %v2069, %v2067
        %v2358 = vpack.c.b16 %v2070, %v2068
        %v2359 = vpack.c.b16 %v2073, %v2071
        %v2360 = vpack.c.b16 %v2074, %v2072
        %v2361 = vpack.c.b16 %v2077, %v2075
        %v2362 = vpack.c.b16 %v2078, %v2076
        %v2363 = vpack.c.b16 %v2081, %v2079
        %v2364 = vpack.c.b16 %v2082, %v2080
        %v2365 = vpack.c.b16 %v2085, %v2083
        %v2366 = vpack.c.b16 %v2086, %v2084
        %v2367 = vpack.c.b16 %v2089, %v2087
        %v2368 = vpack.c.b16 %v2090, %v2088
        %v2369 = vpack.c.b16 %v2093, %v2091
        %v2370 = vpack.c.b16 %v2094, %v2092
        %v2371 = vpack.c.b16 %v2097, %v2095
        %v2372 = vpack.c.b16 %v2098, %v2096
        %v2373 = vpack.c.b16 %v2101, %v2099
        %v2374 = vpack.c.b16 %v2102, %v2100
        %v2375 = vpack.c.b16 %v2105, %v2103
        %v2376 = vpack.c.b16 %v2106, %v2104
        %v2377 = vpack.c.b16 %v2109, %v2107
        %v2378 = vpack.c.b16 %v2110, %v2108
        %v2379 = vpack.c.b16 %v2113, %v2111
        %v2380 = vpack.c.b16 %v2114, %v2112
        %v2381 = vpack.c.b16 %v2117, %v2115
        %v2382 = vpack.c.b16 %v2118, %v2116
        %v2383 = vpack.c.b16 %v2121, %v2119
        %v2384 = vpack.c.b16 %v2122, %v2120
        %v2385 = vpack.c.b16 %v2125, %v2123
        %v2386 = vpack.c.b16 %v2126, %v2124
        %v2387 = vpack.c.b16 %v2129, %v2127
        %v2388 = vpack.c.b16 %v2130, %v2128
        %v2389 = vpack.c.b16 %v2133, %v2131
        %v2390 = vpack.c.b16 %v2134, %v2132
        %v2391 = vpack.c.b16 %v2137, %v2135
        %v2392 = vpack.c.b16 %v2138, %v2136
        %v2393 = vpack.c.b16 %v2141, %v2139
        %v2394 = vpack.c.b16 %v2142, %v2140
        %v2395 = vpack.c.b16 %v2145, %v2143
        %v2396 = vpack.c.b16 %v2146, %v2144
        %v2397 = vpack.c.b16 %v2149, %v2147
        %v2398 = vpack.c.b16 %v2150, %v2148
        %v2399 = vpack.c.b16 %v2153, %v2151
        %v2400 = vpack.c.b16 %v2154, %v2152
        %v2401 = vpack.c.b16 %v2157, %v2155
        %v2402 = vpack.c.b16 %v2158, %v2156
        %v2403 = vpack.c.b16 %v2161, %v2159
        %v2404 = vpack.c.b16 %v2162, %v2160
        %v2405 = vpack.c.b16 %v2165, %v2163
        %v2406 = vpack.c.b16 %v2166, %v2164
        %v2407 = vpack.c.b16 %v2169, %v2167
        %v2408 = vpack.c.b16 %v2170, %v2168
        %v2409 = vpack.c.b16 %v2173, %v2171
        %v2410 = vpack.c.b16 %v2174, %v2172
        %v2411 = vpack.c.b16 %v2177, %v2175
        %v2412 = vpack.c.b16 %v2178, %v2176
        %v2413 = vpack.c.b16 %v2181, %v2179
        %v2414 = vpack.c.b16 %v2182, %v2180
        %v2415 = vpack.c.b16 %v2185, %v2183
        %v2416 = vpack.c.b16 %v2186, %v2184
        %v2417 = vpack.c.b16 %v2189, %v2187
        %v2418 = vpack.c.b16 %v2190, %v2188
        %v2419 = vpack.c.b16 %v2193, %v2191
        %v2420 = vpack.c.b16 %v2194, %v2192
        %v2421 = vpack.c.b16 %v2197, %v2195
        %v2422 = vpack.c.b16 %v2198, %v2196
        %v2423 = vpack.c.b16 %v2201, %v2199
        %v2424 = vpack.c.b16 %v2202, %v2200
        %v2425 = vpack.c.b16 %v2205, %v2203
        %v2426 = vpack.c.b16 %v2206, %v2204
        %v2427 = vpack.c.b16 %v2209, %v2207
        %v2428 = vpack.c.b16 %v2210, %v2208
        %v2429 = vpack.c.b16 %v2213, %v2211
        %v2430 = vpack.c.b16 %v2214, %v2212
        %v2431 = vpack.c.b16 %v2217, %v2215
        %v2432 = vpack.c.b16 %v2218, %v2216
        %v2433 = vpack.c.b16 %v2221, %v2219
        %v2434 = vpack.c.b16 %v2222, %v2220
        %v2435 = vpack.c.b16 %v2225, %v2223
        %v2436 = vpack.c.b16 %v2226, %v2224
        %v2437 = vpack.c.b16 %v2229, %v2227
        %v2438 = vpack.c.b16 %v2230, %v2228
        %v2439 = vpack.c.b16 %v2233, %v2231
        %v2440 = vpack.c.b16 %v2234, %v2232
        %v2441 = vpack.c.b16 %v2237, %v2235
        %v2442 = vpack.c.b16 %v2238, %v2236
        %v2443 = vpack.c.b16 %v2241, %v2239
        %v2444 = vpack.c.b16 %v2242, %v2240
        %v2445 = vpack.c.b16 %v2245, %v2243
        %v2446 = vpack.c.b16 %v2246, %v2244
        %v2447 = vpack.c.b16 %v2249, %v2247
        %v2448 = vpack.c.b16 %v2250, %v2248
        %v2449 = vpack.c.b16 %v2253, %v2251
        %v2450 = vpack.c.b16 %v2254, %v2252
        %v2451 = vpack.c.b16 %v2257, %v2255
        %v2452 = vpack.c.b16 %v2258, %v2256
        %v2453 = vpack.c.b16 %v2261, %v2259
        %v2454 = vpack.c.b16 %v2262, %v2260
        %v2455 = vpack.c.b16 %v2265, %v2263
        %v2456 = vpack.c.b16 %v2266, %v2264
        %v2457 = vpack.c.b16 %v2269, %v2267
        %v2458 = vpack.c.b16 %v2270, %v2268
        %v2459 = vpack.c.b16 %v2273, %v2271
        %v2460 = vpack.c.b16 %v2274, %v2272
        %v2461 = vpack.c.b16 %v2277, %v2275
        %v2462 = vpack.c.b16 %v2278, %v2276
        %v2463 = vpack.c.b16 %v2281, %v2279
        %v2464 = vpack.c.b16 %v2282, %v2280
        %v2465 = vpack.c.b16 %v2285, %v2283
        %v2466 = vpack.c.b16 %v2286, %v2284
        %v2467 = vpack.c.b16 %v2289, %v2287
        %v2468 = vpack.c.b16 %v2290, %v2288
        %v2469 = vpack.c.b16 %v2293, %v2291
        %v2470 = vpack.c.b16 %v2294, %v2292
        %2647 = vmatpush.bf16.msra.mxu0 %v2309
        %2648 = vmatpush.bf16.msra.mxu0 %v2307
        %2649 = vmatpush.bf16.msra.mxu0 %v2305
        %2650 = vmatpush.bf16.msra.mxu0 %v2303
        %2651 = vmatpush.bf16.msra.mxu0 %v2301
        %2652 = vmatpush.bf16.msra.mxu0 %v2299
        %2653 = vmatpush.bf16.msra.mxu0 %v2297
        %2654 = vmatpush.bf16.msra.mxu0 %v2295
        %2655 = vmatmul.bf16.gmra.mxu0 %v1679
        %v2656 = vpop.f32.mrf.mxu0
        %v2657 = vadd.f32 0.0, %v2656
        %v2658 = vpop.f32.mrf.mxu0
        %v2659 = vadd.f32 0.0, %v2658
        %2660 = vmatmul.bf16.gmra.mxu0 %v1690
        %v2661 = vpop.f32.mrf.mxu0
        %v2662 = vadd.f32 0.0, %v2661
        %v2663 = vpop.f32.mrf.mxu0
        %v2664 = vadd.f32 0.0, %v2663
        %2665 = vmatmul.bf16.gmra.mxu0 %v1701
        %v2666 = vpop.f32.mrf.mxu0
        %v2667 = vadd.f32 0.0, %v2666
        %v2668 = vpop.f32.mrf.mxu0
        %v2669 = vadd.f32 0.0, %v2668
        %2670 = vmatmul.bf16.gmra.mxu0 %v1712
        %v2671 = vpop.f32.mrf.mxu0
        %v2672 = vadd.f32 0.0, %v2671
        %v2673 = vpop.f32.mrf.mxu0
        %v2674 = vadd.f32 0.0, %v2673
        %2675 = vdwg.mxu0
        %2676 = vmatpush.bf16.msra.mxu0 %v2325
        %2677 = vmatpush.bf16.msra.mxu0 %v2323
        %2678 = vmatpush.bf16.msra.mxu0 %v2321
        %2679 = vmatpush.bf16.msra.mxu0 %v2319
        %2680 = vmatpush.bf16.msra.mxu0 %v2317
        %2681 = vmatpush.bf16.msra.mxu0 %v2315
        %2682 = vmatpush.bf16.msra.mxu0 %v2313
        %2683 = vmatpush.bf16.msra.mxu0 %v2311
        %2684 = vmatmul.bf16.gmra.mxu0 %v1680
        %v2685 = vpop.f32.mrf.mxu0
        %v2686 = vadd.f32 %v2657, %v2685
        %v2687 = vpop.f32.mrf.mxu0
        %v2688 = vadd.f32 %v2659, %v2687
        %2689 = vmatmul.bf16.gmra.mxu0 %v1691
        %v2690 = vpop.f32.mrf.mxu0
        %v2691 = vadd.f32 %v2662, %v2690
        %v2692 = vpop.f32.mrf.mxu0
        %v2693 = vadd.f32 %v2664, %v2692
        %2694 = vmatmul.bf16.gmra.mxu0 %v1702
        %v2695 = vpop.f32.mrf.mxu0
        %v2696 = vadd.f32 %v2667, %v2695
        %v2697 = vpop.f32.mrf.mxu0
        %v2698 = vadd.f32 %v2669, %v2697
        %2699 = vmatmul.bf16.gmra.mxu0 %v1713
        %v2700 = vpop.f32.mrf.mxu0
        %v2701 = vadd.f32 %v2672, %v2700
        %v2702 = vpop.f32.mrf.mxu0
        %v2703 = vadd.f32 %v2674, %v2702
        %2704 = vdwg.mxu0
        %2705 = vmatpush.bf16.msra.mxu0 %v2341
        %2706 = vmatpush.bf16.msra.mxu0 %v2339
        %2707 = vmatpush.bf16.msra.mxu0 %v2337
        %2708 = vmatpush.bf16.msra.mxu0 %v2335
        %2709 = vmatpush.bf16.msra.mxu0 %v2333
        %2710 = vmatpush.bf16.msra.mxu0 %v2331
        %2711 = vmatpush.bf16.msra.mxu0 %v2329
        %2712 = vmatpush.bf16.msra.mxu0 %v2327
        %2713 = vmatmul.bf16.gmra.mxu0 %v1681
        %v2714 = vpop.f32.mrf.mxu0
        %v2715 = vadd.f32 %v2686, %v2714
        %v2716 = vpop.f32.mrf.mxu0
        %v2717 = vadd.f32 %v2688, %v2716
        %2718 = vmatmul.bf16.gmra.mxu0 %v1692
        %v2719 = vpop.f32.mrf.mxu0
        %v2720 = vadd.f32 %v2691, %v2719
        %v2721 = vpop.f32.mrf.mxu0
        %v2722 = vadd.f32 %v2693, %v2721
        %2723 = vmatmul.bf16.gmra.mxu0 %v1703
        %v2724 = vpop.f32.mrf.mxu0
        %v2725 = vadd.f32 %v2696, %v2724
        %v2726 = vpop.f32.mrf.mxu0
        %v2727 = vadd.f32 %v2698, %v2726
        %2728 = vmatmul.bf16.gmra.mxu0 %v1714
        %v2729 = vpop.f32.mrf.mxu0
        %v2730 = vadd.f32 %v2701, %v2729
        %v2731 = vpop.f32.mrf.mxu0
        %v2732 = vadd.f32 %v2703, %v2731
        %2733 = vdwg.mxu0
        %2734 = vmatpush.bf16.msra.mxu0 %v2357
        %2735 = vmatpush.bf16.msra.mxu0 %v2355
        %2736 = vmatpush.bf16.msra.mxu0 %v2353
        %2737 = vmatpush.bf16.msra.mxu0 %v2351
        %2738 = vmatpush.bf16.msra.mxu0 %v2349
        %2739 = vmatpush.bf16.msra.mxu0 %v2347
        %2740 = vmatpush.bf16.msra.mxu0 %v2345
        %2741 = vmatpush.bf16.msra.mxu0 %v2343
        %2742 = vmatmul.bf16.gmra.mxu0 %v1682
        %v2743 = vpop.f32.mrf.mxu0
        %v2744 = vadd.f32 %v2715, %v2743
        %v2745 = vpop.f32.mrf.mxu0
        %v2746 = vadd.f32 %v2717, %v2745
        %2747 = vmatmul.bf16.gmra.mxu0 %v1693
        %v2748 = vpop.f32.mrf.mxu0
        %v2749 = vadd.f32 %v2720, %v2748
        %v2750 = vpop.f32.mrf.mxu0
        %v2751 = vadd.f32 %v2722, %v2750
        %2752 = vmatmul.bf16.gmra.mxu0 %v1704
        %v2753 = vpop.f32.mrf.mxu0
        %v2754 = vadd.f32 %v2725, %v2753
        %v2755 = vpop.f32.mrf.mxu0
        %v2756 = vadd.f32 %v2727, %v2755
        %2757 = vmatmul.bf16.gmra.mxu0 %v1715
        %v2758 = vpop.f32.mrf.mxu0
        %v2759 = vadd.f32 %v2730, %v2758
        %v2760 = vpop.f32.mrf.mxu0
        %v2761 = vadd.f32 %v2732, %v2760
        %2762 = vdwg.mxu0
        %2763 = vmatpush.bf16.msra.mxu0 %v2373
        %2764 = vmatpush.bf16.msra.mxu0 %v2371
        %2765 = vmatpush.bf16.msra.mxu0 %v2369
        %2766 = vmatpush.bf16.msra.mxu0 %v2367
        %2767 = vmatpush.bf16.msra.mxu0 %v2365
        %2768 = vmatpush.bf16.msra.mxu0 %v2363
        %2769 = vmatpush.bf16.msra.mxu0 %v2361
        %2770 = vmatpush.bf16.msra.mxu0 %v2359
        %2771 = vmatmul.bf16.gmra.mxu0 %v1683
        %v2772 = vpop.f32.mrf.mxu0
        %v2773 = vadd.f32 %v2744, %v2772
        %v2774 = vpop.f32.mrf.mxu0
        %v2775 = vadd.f32 %v2746, %v2774
        %2776 = vmatmul.bf16.gmra.mxu0 %v1694
        %v2777 = vpop.f32.mrf.mxu0
        %v2778 = vadd.f32 %v2749, %v2777
        %v2779 = vpop.f32.mrf.mxu0
        %v2780 = vadd.f32 %v2751, %v2779
        %2781 = vmatmul.bf16.gmra.mxu0 %v1705
        %v2782 = vpop.f32.mrf.mxu0
        %v2783 = vadd.f32 %v2754, %v2782
        %v2784 = vpop.f32.mrf.mxu0
        %v2785 = vadd.f32 %v2756, %v2784
        %2786 = vmatmul.bf16.gmra.mxu0 %v1716
        %v2787 = vpop.f32.mrf.mxu0
        %v2788 = vadd.f32 %v2759, %v2787
        %v2789 = vpop.f32.mrf.mxu0
        %v2790 = vadd.f32 %v2761, %v2789
        %2791 = vdwg.mxu0
        %2792 = vmatpush.bf16.msra.mxu0 %v2389
        %2793 = vmatpush.bf16.msra.mxu0 %v2387
        %2794 = vmatpush.bf16.msra.mxu0 %v2385
        %2795 = vmatpush.bf16.msra.mxu0 %v2383
        %2796 = vmatpush.bf16.msra.mxu0 %v2381
        %2797 = vmatpush.bf16.msra.mxu0 %v2379
        %2798 = vmatpush.bf16.msra.mxu0 %v2377
        %2799 = vmatpush.bf16.msra.mxu0 %v2375
        %2800 = vmatmul.bf16.gmra.mxu0 %v1684
        %v2801 = vpop.f32.mrf.mxu0
        %v2802 = vadd.f32 %v2773, %v2801
        %v2803 = vpop.f32.mrf.mxu0
        %v2804 = vadd.f32 %v2775, %v2803
        %2805 = vmatmul.bf16.gmra.mxu0 %v1695
        %v2806 = vpop.f32.mrf.mxu0
        %v2807 = vadd.f32 %v2778, %v2806
        %v2808 = vpop.f32.mrf.mxu0
        %v2809 = vadd.f32 %v2780, %v2808
        %2810 = vmatmul.bf16.gmra.mxu0 %v1706
        %v2811 = vpop.f32.mrf.mxu0
        %v2812 = vadd.f32 %v2783, %v2811
        %v2813 = vpop.f32.mrf.mxu0
        %v2814 = vadd.f32 %v2785, %v2813
        %2815 = vmatmul.bf16.gmra.mxu0 %v1717
        %v2816 = vpop.f32.mrf.mxu0
        %v2817 = vadd.f32 %v2788, %v2816
        %v2818 = vpop.f32.mrf.mxu0
        %v2819 = vadd.f32 %v2790, %v2818
        %2820 = vdwg.mxu0
        %2821 = vmatpush.bf16.msra.mxu0 %v2405
        %2822 = vmatpush.bf16.msra.mxu0 %v2403
        %2823 = vmatpush.bf16.msra.mxu0 %v2401
        %2824 = vmatpush.bf16.msra.mxu0 %v2399
        %2825 = vmatpush.bf16.msra.mxu0 %v2397
        %2826 = vmatpush.bf16.msra.mxu0 %v2395
        %2827 = vmatpush.bf16.msra.mxu0 %v2393
        %2828 = vmatpush.bf16.msra.mxu0 %v2391
        %2829 = vmatmul.bf16.gmra.mxu0 %v1685
        %v2830 = vpop.f32.mrf.mxu0
        %v2831 = vadd.f32 %v2802, %v2830
        %v2832 = vpop.f32.mrf.mxu0
        %v2833 = vadd.f32 %v2804, %v2832
        %2834 = vmatmul.bf16.gmra.mxu0 %v1696
        %v2835 = vpop.f32.mrf.mxu0
        %v2836 = vadd.f32 %v2807, %v2835
        %v2837 = vpop.f32.mrf.mxu0
        %v2838 = vadd.f32 %v2809, %v2837
        %2839 = vmatmul.bf16.gmra.mxu0 %v1707
        %v2840 = vpop.f32.mrf.mxu0
        %v2841 = vadd.f32 %v2812, %v2840
        %v2842 = vpop.f32.mrf.mxu0
        %v2843 = vadd.f32 %v2814, %v2842
        %2844 = vmatmul.bf16.gmra.mxu0 %v1718
        %v2845 = vpop.f32.mrf.mxu0
        %v2846 = vadd.f32 %v2817, %v2845
        %v2847 = vpop.f32.mrf.mxu0
        %v2848 = vadd.f32 %v2819, %v2847
        %2849 = vdwg.mxu0
        %2850 = vmatpush.bf16.msra.mxu0 %v2421
        %2851 = vmatpush.bf16.msra.mxu0 %v2419
        %2852 = vmatpush.bf16.msra.mxu0 %v2417
        %2853 = vmatpush.bf16.msra.mxu0 %v2415
        %2854 = vmatpush.bf16.msra.mxu0 %v2413
        %2855 = vmatpush.bf16.msra.mxu0 %v2411
        %2856 = vmatpush.bf16.msra.mxu0 %v2409
        %2857 = vmatpush.bf16.msra.mxu0 %v2407
        %2858 = vmatmul.bf16.gmra.mxu0 %v1686
        %v2859 = vpop.f32.mrf.mxu0
        %v2860 = vadd.f32 %v2831, %v2859
        %v2861 = vpop.f32.mrf.mxu0
        %v2862 = vadd.f32 %v2833, %v2861
        %2863 = vmatmul.bf16.gmra.mxu0 %v1697
        %v2864 = vpop.f32.mrf.mxu0
        %v2865 = vadd.f32 %v2836, %v2864
        %v2866 = vpop.f32.mrf.mxu0
        %v2867 = vadd.f32 %v2838, %v2866
        %2868 = vmatmul.bf16.gmra.mxu0 %v1708
        %v2869 = vpop.f32.mrf.mxu0
        %v2870 = vadd.f32 %v2841, %v2869
        %v2871 = vpop.f32.mrf.mxu0
        %v2872 = vadd.f32 %v2843, %v2871
        %2873 = vmatmul.bf16.gmra.mxu0 %v1719
        %v2874 = vpop.f32.mrf.mxu0
        %v2875 = vadd.f32 %v2846, %v2874
        %v2876 = vpop.f32.mrf.mxu0
        %v2877 = vadd.f32 %v2848, %v2876
        %2878 = vdwg.mxu0
        %2879 = vmatpush.bf16.msra.mxu0 %v2437
        %2880 = vmatpush.bf16.msra.mxu0 %v2435
        %2881 = vmatpush.bf16.msra.mxu0 %v2433
        %2882 = vmatpush.bf16.msra.mxu0 %v2431
        %2883 = vmatpush.bf16.msra.mxu0 %v2429
        %2884 = vmatpush.bf16.msra.mxu0 %v2427
        %2885 = vmatpush.bf16.msra.mxu0 %v2425
        %2886 = vmatpush.bf16.msra.mxu0 %v2423
        %2887 = vmatmul.bf16.gmra.mxu0 %v1687
        %v2888 = vpop.f32.mrf.mxu0
        %v2889 = vadd.f32 %v2860, %v2888
        %v2890 = vpop.f32.mrf.mxu0
        %v2891 = vadd.f32 %v2862, %v2890
        %2892 = vmatmul.bf16.gmra.mxu0 %v1698
        %v2893 = vpop.f32.mrf.mxu0
        %v2894 = vadd.f32 %v2865, %v2893
        %v2895 = vpop.f32.mrf.mxu0
        %v2896 = vadd.f32 %v2867, %v2895
        %2897 = vmatmul.bf16.gmra.mxu0 %v1709
        %v2898 = vpop.f32.mrf.mxu0
        %v2899 = vadd.f32 %v2870, %v2898
        %v2900 = vpop.f32.mrf.mxu0
        %v2901 = vadd.f32 %v2872, %v2900
        %2902 = vmatmul.bf16.gmra.mxu0 %v1720
        %v2903 = vpop.f32.mrf.mxu0
        %v2904 = vadd.f32 %v2875, %v2903
        %v2905 = vpop.f32.mrf.mxu0
        %v2906 = vadd.f32 %v2877, %v2905
        %2907 = vdwg.mxu0
        %2908 = vmatpush.bf16.msra.mxu0 %v2453
        %2909 = vmatpush.bf16.msra.mxu0 %v2451
        %2910 = vmatpush.bf16.msra.mxu0 %v2449
        %2911 = vmatpush.bf16.msra.mxu0 %v2447
        %2912 = vmatpush.bf16.msra.mxu0 %v2445
        %2913 = vmatpush.bf16.msra.mxu0 %v2443
        %2914 = vmatpush.bf16.msra.mxu0 %v2441
        %2915 = vmatpush.bf16.msra.mxu0 %v2439
        %2916 = vmatmul.bf16.gmra.mxu0 %v1688
        %v2917 = vpop.f32.mrf.mxu0
        %v2918 = vadd.f32 %v2889, %v2917
        %v2919 = vpop.f32.mrf.mxu0
        %v2920 = vadd.f32 %v2891, %v2919
        %2921 = vmatmul.bf16.gmra.mxu0 %v1699
        %v2922 = vpop.f32.mrf.mxu0
        %v2923 = vadd.f32 %v2894, %v2922
        %v2924 = vpop.f32.mrf.mxu0
        %v2925 = vadd.f32 %v2896, %v2924
        %2926 = vmatmul.bf16.gmra.mxu0 %v1710
        %v2927 = vpop.f32.mrf.mxu0
        %v2928 = vadd.f32 %v2899, %v2927
        %v2929 = vpop.f32.mrf.mxu0
        %v2930 = vadd.f32 %v2901, %v2929
        %2931 = vmatmul.bf16.gmra.mxu0 %v1721
        %v2932 = vpop.f32.mrf.mxu0
        %v2933 = vadd.f32 %v2904, %v2932
        %v2934 = vpop.f32.mrf.mxu0
        %v2935 = vadd.f32 %v2906, %v2934
        %2936 = vdwg.mxu0
        %2937 = vmatpush.bf16.msra.mxu0 %v2469
        %2938 = vmatpush.bf16.msra.mxu0 %v2467
        %2939 = vmatpush.bf16.msra.mxu0 %v2465
        %2940 = vmatpush.bf16.msra.mxu0 %v2463
        %2941 = vmatpush.bf16.msra.mxu0 %v2461
        %2942 = vmatpush.bf16.msra.mxu0 %v2459
        %2943 = vmatpush.bf16.msra.mxu0 %v2457
        %2944 = vmatpush.bf16.msra.mxu0 %v2455
        %2945 = vmatmul.bf16.gmra.mxu0 %v1689
        %v2946 = vpop.f32.mrf.mxu0
        %v2947 = vadd.f32 %v2918, %v2946
        %v2948 = vpop.f32.mrf.mxu0
        %v2949 = vadd.f32 %v2920, %v2948
        %2950 = vmatmul.bf16.gmra.mxu0 %v1700
        %v2951 = vpop.f32.mrf.mxu0
        %v2952 = vadd.f32 %v2923, %v2951
        %v2953 = vpop.f32.mrf.mxu0
        %v2954 = vadd.f32 %v2925, %v2953
        %2955 = vmatmul.bf16.gmra.mxu0 %v1711
        %v2956 = vpop.f32.mrf.mxu0
        %v2957 = vadd.f32 %v2928, %v2956
        %v2958 = vpop.f32.mrf.mxu0
        %v2959 = vadd.f32 %v2930, %v2958
        %2960 = vmatmul.bf16.gmra.mxu0 %v1722
        %v2961 = vpop.f32.mrf.mxu0
        %v2962 = vadd.f32 %v2933, %v2961
        %v2963 = vpop.f32.mrf.mxu0
        %v2964 = vadd.f32 %v2935, %v2963
        %2965 = vdwg.mxu0
        %2966 = vmatpush.bf16.msra.mxu0 %v2310
        %2967 = vmatpush.bf16.msra.mxu0 %v2308
        %2968 = vmatpush.bf16.msra.mxu0 %v2306
        %2969 = vmatpush.bf16.msra.mxu0 %v2304
        %2970 = vmatpush.bf16.msra.mxu0 %v2302
        %2971 = vmatpush.bf16.msra.mxu0 %v2300
        %2972 = vmatpush.bf16.msra.mxu0 %v2298
        %2973 = vmatpush.bf16.msra.mxu0 %v2296
        %2974 = vmatmul.bf16.gmra.mxu0 %v1679
        %v2975 = vpop.f32.mrf.mxu0
        %v2976 = vadd.f32 0.0, %v2975
        %v2977 = vpop.f32.mrf.mxu0
        %v2978 = vadd.f32 0.0, %v2977
        %2979 = vmatmul.bf16.gmra.mxu0 %v1690
        %v2980 = vpop.f32.mrf.mxu0
        %v2981 = vadd.f32 0.0, %v2980
        %v2982 = vpop.f32.mrf.mxu0
        %v2983 = vadd.f32 0.0, %v2982
        %2984 = vmatmul.bf16.gmra.mxu0 %v1701
        %v2985 = vpop.f32.mrf.mxu0
        %v2986 = vadd.f32 0.0, %v2985
        %v2987 = vpop.f32.mrf.mxu0
        %v2988 = vadd.f32 0.0, %v2987
        %2989 = vmatmul.bf16.gmra.mxu0 %v1712
        %v2990 = vpop.f32.mrf.mxu0
        %v2991 = vadd.f32 0.0, %v2990
        %v2992 = vpop.f32.mrf.mxu0
        %v2993 = vadd.f32 0.0, %v2992
        %2994 = vdwg.mxu0
        %2995 = vmatpush.bf16.msra.mxu0 %v2326
        %2996 = vmatpush.bf16.msra.mxu0 %v2324
        %2997 = vmatpush.bf16.msra.mxu0 %v2322
        %2998 = vmatpush.bf16.msra.mxu0 %v2320
        %2999 = vmatpush.bf16.msra.mxu0 %v2318
        %3000 = vmatpush.bf16.msra.mxu0 %v2316
        %3001 = vmatpush.bf16.msra.mxu0 %v2314
        %3002 = vmatpush.bf16.msra.mxu0 %v2312
        %3003 = vmatmul.bf16.gmra.mxu0 %v1680
        %v3004 = vpop.f32.mrf.mxu0
        %v3005 = vadd.f32 %v2976, %v3004
        %v3006 = vpop.f32.mrf.mxu0
        %v3007 = vadd.f32 %v2978, %v3006
        %3008 = vmatmul.bf16.gmra.mxu0 %v1691
        %v3009 = vpop.f32.mrf.mxu0
        %v3010 = vadd.f32 %v2981, %v3009
        %v3011 = vpop.f32.mrf.mxu0
        %v3012 = vadd.f32 %v2983, %v3011
        %3013 = vmatmul.bf16.gmra.mxu0 %v1702
        %v3014 = vpop.f32.mrf.mxu0
        %v3015 = vadd.f32 %v2986, %v3014
        %v3016 = vpop.f32.mrf.mxu0
        %v3017 = vadd.f32 %v2988, %v3016
        %3018 = vmatmul.bf16.gmra.mxu0 %v1713
        %v3019 = vpop.f32.mrf.mxu0
        %v3020 = vadd.f32 %v2991, %v3019
        %v3021 = vpop.f32.mrf.mxu0
        %v3022 = vadd.f32 %v2993, %v3021
        %3023 = vdwg.mxu0
        %3024 = vmatpush.bf16.msra.mxu0 %v2342
        %3025 = vmatpush.bf16.msra.mxu0 %v2340
        %3026 = vmatpush.bf16.msra.mxu0 %v2338
        %3027 = vmatpush.bf16.msra.mxu0 %v2336
        %3028 = vmatpush.bf16.msra.mxu0 %v2334
        %3029 = vmatpush.bf16.msra.mxu0 %v2332
        %3030 = vmatpush.bf16.msra.mxu0 %v2330
        %3031 = vmatpush.bf16.msra.mxu0 %v2328
        %3032 = vmatmul.bf16.gmra.mxu0 %v1681
        %v3033 = vpop.f32.mrf.mxu0
        %v3034 = vadd.f32 %v3005, %v3033
        %v3035 = vpop.f32.mrf.mxu0
        %v3036 = vadd.f32 %v3007, %v3035
        %3037 = vmatmul.bf16.gmra.mxu0 %v1692
        %v3038 = vpop.f32.mrf.mxu0
        %v3039 = vadd.f32 %v3010, %v3038
        %v3040 = vpop.f32.mrf.mxu0
        %v3041 = vadd.f32 %v3012, %v3040
        %3042 = vmatmul.bf16.gmra.mxu0 %v1703
        %v3043 = vpop.f32.mrf.mxu0
        %v3044 = vadd.f32 %v3015, %v3043
        %v3045 = vpop.f32.mrf.mxu0
        %v3046 = vadd.f32 %v3017, %v3045
        %3047 = vmatmul.bf16.gmra.mxu0 %v1714
        %v3048 = vpop.f32.mrf.mxu0
        %v3049 = vadd.f32 %v3020, %v3048
        %v3050 = vpop.f32.mrf.mxu0
        %v3051 = vadd.f32 %v3022, %v3050
        %3052 = vdwg.mxu0
        %3053 = vmatpush.bf16.msra.mxu0 %v2358
        %3054 = vmatpush.bf16.msra.mxu0 %v2356
        %3055 = vmatpush.bf16.msra.mxu0 %v2354
        %3056 = vmatpush.bf16.msra.mxu0 %v2352
        %3057 = vmatpush.bf16.msra.mxu0 %v2350
        %3058 = vmatpush.bf16.msra.mxu0 %v2348
        %3059 = vmatpush.bf16.msra.mxu0 %v2346
        %3060 = vmatpush.bf16.msra.mxu0 %v2344
        %3061 = vmatmul.bf16.gmra.mxu0 %v1682
        %v3062 = vpop.f32.mrf.mxu0
        %v3063 = vadd.f32 %v3034, %v3062
        %v3064 = vpop.f32.mrf.mxu0
        %v3065 = vadd.f32 %v3036, %v3064
        %3066 = vmatmul.bf16.gmra.mxu0 %v1693
        %v3067 = vpop.f32.mrf.mxu0
        %v3068 = vadd.f32 %v3039, %v3067
        %v3069 = vpop.f32.mrf.mxu0
        %v3070 = vadd.f32 %v3041, %v3069
        %3071 = vmatmul.bf16.gmra.mxu0 %v1704
        %v3072 = vpop.f32.mrf.mxu0
        %v3073 = vadd.f32 %v3044, %v3072
        %v3074 = vpop.f32.mrf.mxu0
        %v3075 = vadd.f32 %v3046, %v3074
        %3076 = vmatmul.bf16.gmra.mxu0 %v1715
        %v3077 = vpop.f32.mrf.mxu0
        %v3078 = vadd.f32 %v3049, %v3077
        %v3079 = vpop.f32.mrf.mxu0
        %v3080 = vadd.f32 %v3051, %v3079
        %3081 = vdwg.mxu0
        %3082 = vmatpush.bf16.msra.mxu0 %v2374
        %3083 = vmatpush.bf16.msra.mxu0 %v2372
        %3084 = vmatpush.bf16.msra.mxu0 %v2370
        %3085 = vmatpush.bf16.msra.mxu0 %v2368
        %3086 = vmatpush.bf16.msra.mxu0 %v2366
        %3087 = vmatpush.bf16.msra.mxu0 %v2364
        %3088 = vmatpush.bf16.msra.mxu0 %v2362
        %3089 = vmatpush.bf16.msra.mxu0 %v2360
        %3090 = vmatmul.bf16.gmra.mxu0 %v1683
        %v3091 = vpop.f32.mrf.mxu0
        %v3092 = vadd.f32 %v3063, %v3091
        %v3093 = vpop.f32.mrf.mxu0
        %v3094 = vadd.f32 %v3065, %v3093
        %3095 = vmatmul.bf16.gmra.mxu0 %v1694
        %v3096 = vpop.f32.mrf.mxu0
        %v3097 = vadd.f32 %v3068, %v3096
        %v3098 = vpop.f32.mrf.mxu0
        %v3099 = vadd.f32 %v3070, %v3098
        %3100 = vmatmul.bf16.gmra.mxu0 %v1705
        %v3101 = vpop.f32.mrf.mxu0
        %v3102 = vadd.f32 %v3073, %v3101
        %v3103 = vpop.f32.mrf.mxu0
        %v3104 = vadd.f32 %v3075, %v3103
        %3105 = vmatmul.bf16.gmra.mxu0 %v1716
        %v3106 = vpop.f32.mrf.mxu0
        %v3107 = vadd.f32 %v3078, %v3106
        %v3108 = vpop.f32.mrf.mxu0
        %v3109 = vadd.f32 %v3080, %v3108
        %3110 = vdwg.mxu0
        %3111 = vmatpush.bf16.msra.mxu0 %v2390
        %3112 = vmatpush.bf16.msra.mxu0 %v2388
        %3113 = vmatpush.bf16.msra.mxu0 %v2386
        %3114 = vmatpush.bf16.msra.mxu0 %v2384
        %3115 = vmatpush.bf16.msra.mxu0 %v2382
        %3116 = vmatpush.bf16.msra.mxu0 %v2380
        %3117 = vmatpush.bf16.msra.mxu0 %v2378
        %3118 = vmatpush.bf16.msra.mxu0 %v2376
        %3119 = vmatmul.bf16.gmra.mxu0 %v1684
        %v3120 = vpop.f32.mrf.mxu0
        %v3121 = vadd.f32 %v3092, %v3120
        %v3122 = vpop.f32.mrf.mxu0
        %v3123 = vadd.f32 %v3094, %v3122
        %3124 = vmatmul.bf16.gmra.mxu0 %v1695
        %v3125 = vpop.f32.mrf.mxu0
        %v3126 = vadd.f32 %v3097, %v3125
        %v3127 = vpop.f32.mrf.mxu0
        %v3128 = vadd.f32 %v3099, %v3127
        %3129 = vmatmul.bf16.gmra.mxu0 %v1706
        %v3130 = vpop.f32.mrf.mxu0
        %v3131 = vadd.f32 %v3102, %v3130
        %v3132 = vpop.f32.mrf.mxu0
        %v3133 = vadd.f32 %v3104, %v3132
        %3134 = vmatmul.bf16.gmra.mxu0 %v1717
        %v3135 = vpop.f32.mrf.mxu0
        %v3136 = vadd.f32 %v3107, %v3135
        %v3137 = vpop.f32.mrf.mxu0
        %v3138 = vadd.f32 %v3109, %v3137
        %3139 = vdwg.mxu0
        %3140 = vmatpush.bf16.msra.mxu0 %v2406
        %3141 = vmatpush.bf16.msra.mxu0 %v2404
        %3142 = vmatpush.bf16.msra.mxu0 %v2402
        %3143 = vmatpush.bf16.msra.mxu0 %v2400
        %3144 = vmatpush.bf16.msra.mxu0 %v2398
        %3145 = vmatpush.bf16.msra.mxu0 %v2396
        %3146 = vmatpush.bf16.msra.mxu0 %v2394
        %3147 = vmatpush.bf16.msra.mxu0 %v2392
        %3148 = vmatmul.bf16.gmra.mxu0 %v1685
        %v3149 = vpop.f32.mrf.mxu0
        %v3150 = vadd.f32 %v3121, %v3149
        %v3151 = vpop.f32.mrf.mxu0
        %v3152 = vadd.f32 %v3123, %v3151
        %3153 = vmatmul.bf16.gmra.mxu0 %v1696
        %v3154 = vpop.f32.mrf.mxu0
        %v3155 = vadd.f32 %v3126, %v3154
        %v3156 = vpop.f32.mrf.mxu0
        %v3157 = vadd.f32 %v3128, %v3156
        %3158 = vmatmul.bf16.gmra.mxu0 %v1707
        %v3159 = vpop.f32.mrf.mxu0
        %v3160 = vadd.f32 %v3131, %v3159
        %v3161 = vpop.f32.mrf.mxu0
        %v3162 = vadd.f32 %v3133, %v3161
        %3163 = vmatmul.bf16.gmra.mxu0 %v1718
        %v3164 = vpop.f32.mrf.mxu0
        %v3165 = vadd.f32 %v3136, %v3164
        %v3166 = vpop.f32.mrf.mxu0
        %v3167 = vadd.f32 %v3138, %v3166
        %3168 = vdwg.mxu0
        %3169 = vmatpush.bf16.msra.mxu0 %v2422
        %3170 = vmatpush.bf16.msra.mxu0 %v2420
        %3171 = vmatpush.bf16.msra.mxu0 %v2418
        %3172 = vmatpush.bf16.msra.mxu0 %v2416
        %3173 = vmatpush.bf16.msra.mxu0 %v2414
        %3174 = vmatpush.bf16.msra.mxu0 %v2412
        %3175 = vmatpush.bf16.msra.mxu0 %v2410
        %3176 = vmatpush.bf16.msra.mxu0 %v2408
        %3177 = vmatmul.bf16.gmra.mxu0 %v1686
        %v3178 = vpop.f32.mrf.mxu0
        %v3179 = vadd.f32 %v3150, %v3178
        %v3180 = vpop.f32.mrf.mxu0
        %v3181 = vadd.f32 %v3152, %v3180
        %3182 = vmatmul.bf16.gmra.mxu0 %v1697
        %v3183 = vpop.f32.mrf.mxu0
        %v3184 = vadd.f32 %v3155, %v3183
        %v3185 = vpop.f32.mrf.mxu0
        %v3186 = vadd.f32 %v3157, %v3185
        %3187 = vmatmul.bf16.gmra.mxu0 %v1708
        %v3188 = vpop.f32.mrf.mxu0
        %v3189 = vadd.f32 %v3160, %v3188
        %v3190 = vpop.f32.mrf.mxu0
        %v3191 = vadd.f32 %v3162, %v3190
        %3192 = vmatmul.bf16.gmra.mxu0 %v1719
        %v3193 = vpop.f32.mrf.mxu0
        %v3194 = vadd.f32 %v3165, %v3193
        %v3195 = vpop.f32.mrf.mxu0
        %v3196 = vadd.f32 %v3167, %v3195
        %3197 = vdwg.mxu0
        %3198 = vmatpush.bf16.msra.mxu0 %v2438
        %3199 = vmatpush.bf16.msra.mxu0 %v2436
        %3200 = vmatpush.bf16.msra.mxu0 %v2434
        %3201 = vmatpush.bf16.msra.mxu0 %v2432
        %3202 = vmatpush.bf16.msra.mxu0 %v2430
        %3203 = vmatpush.bf16.msra.mxu0 %v2428
        %3204 = vmatpush.bf16.msra.mxu0 %v2426
        %3205 = vmatpush.bf16.msra.mxu0 %v2424
        %3206 = vmatmul.bf16.gmra.mxu0 %v1687
        %v3207 = vpop.f32.mrf.mxu0
        %v3208 = vadd.f32 %v3179, %v3207
        %v3209 = vpop.f32.mrf.mxu0
        %v3210 = vadd.f32 %v3181, %v3209
        %3211 = vmatmul.bf16.gmra.mxu0 %v1698
        %v3212 = vpop.f32.mrf.mxu0
        %v3213 = vadd.f32 %v3184, %v3212
        %v3214 = vpop.f32.mrf.mxu0
        %v3215 = vadd.f32 %v3186, %v3214
        %3216 = vmatmul.bf16.gmra.mxu0 %v1709
        %v3217 = vpop.f32.mrf.mxu0
        %v3218 = vadd.f32 %v3189, %v3217
        %v3219 = vpop.f32.mrf.mxu0
        %v3220 = vadd.f32 %v3191, %v3219
        %3221 = vmatmul.bf16.gmra.mxu0 %v1720
        %v3222 = vpop.f32.mrf.mxu0
        %v3223 = vadd.f32 %v3194, %v3222
        %v3224 = vpop.f32.mrf.mxu0
        %v3225 = vadd.f32 %v3196, %v3224
        %3226 = vdwg.mxu0
        %3227 = vmatpush.bf16.msra.mxu0 %v2454
        %3228 = vmatpush.bf16.msra.mxu0 %v2452
        %3229 = vmatpush.bf16.msra.mxu0 %v2450
        %3230 = vmatpush.bf16.msra.mxu0 %v2448
        %3231 = vmatpush.bf16.msra.mxu0 %v2446
        %3232 = vmatpush.bf16.msra.mxu0 %v2444
        %3233 = vmatpush.bf16.msra.mxu0 %v2442
        %3234 = vmatpush.bf16.msra.mxu0 %v2440
        %3235 = vmatmul.bf16.gmra.mxu0 %v1688
        %v3236 = vpop.f32.mrf.mxu0
        %v3237 = vadd.f32 %v3208, %v3236
        %v3238 = vpop.f32.mrf.mxu0
        %v3239 = vadd.f32 %v3210, %v3238
        %3240 = vmatmul.bf16.gmra.mxu0 %v1699
        %v3241 = vpop.f32.mrf.mxu0
        %v3242 = vadd.f32 %v3213, %v3241
        %v3243 = vpop.f32.mrf.mxu0
        %v3244 = vadd.f32 %v3215, %v3243
        %3245 = vmatmul.bf16.gmra.mxu0 %v1710
        %v3246 = vpop.f32.mrf.mxu0
        %v3247 = vadd.f32 %v3218, %v3246
        %v3248 = vpop.f32.mrf.mxu0
        %v3249 = vadd.f32 %v3220, %v3248
        %3250 = vmatmul.bf16.gmra.mxu0 %v1721
        %v3251 = vpop.f32.mrf.mxu0
        %v3252 = vadd.f32 %v3223, %v3251
        %v3253 = vpop.f32.mrf.mxu0
        %v3254 = vadd.f32 %v3225, %v3253
        %3255 = vdwg.mxu0
        %3256 = vmatpush.bf16.msra.mxu0 %v2470
        %3257 = vmatpush.bf16.msra.mxu0 %v2468
        %3258 = vmatpush.bf16.msra.mxu0 %v2466
        %3259 = vmatpush.bf16.msra.mxu0 %v2464
        %3260 = vmatpush.bf16.msra.mxu0 %v2462
        %3261 = vmatpush.bf16.msra.mxu0 %v2460
        %3262 = vmatpush.bf16.msra.mxu0 %v2458
        %3263 = vmatpush.bf16.msra.mxu0 %v2456
        %3264 = vmatmul.bf16.gmra.mxu0 %v1689
        %v3265 = vpop.f32.mrf.mxu0
        %v3266 = vadd.f32 %v3237, %v3265
        %v3267 = vpop.f32.mrf.mxu0
        %v3268 = vadd.f32 %v3239, %v3267
        %3269 = vmatmul.bf16.gmra.mxu0 %v1700
        %v3270 = vpop.f32.mrf.mxu0
        %v3271 = vadd.f32 %v3242, %v3270
        %v3272 = vpop.f32.mrf.mxu0
        %v3273 = vadd.f32 %v3244, %v3272
        %3274 = vmatmul.bf16.gmra.mxu0 %v1711
        %v3275 = vpop.f32.mrf.mxu0
        %v3276 = vadd.f32 %v3247, %v3275
        %v3277 = vpop.f32.mrf.mxu0
        %v3278 = vadd.f32 %v3249, %v3277
        %3279 = vmatmul.bf16.gmra.mxu0 %v1722
        %v3280 = vpop.f32.mrf.mxu0
        %v3281 = vadd.f32 %v3252, %v3280
        %v3282 = vpop.f32.mrf.mxu0
        %v3283 = vadd.f32 %v3254, %v3282
        %3284 = vdwg.mxu0
        %v3285 = vld [vmem:[%s1272] sm:$0x3]
        %v3287 = vperm.slane %v3285, 0
        %v3288 = vperm.slane %v3285, 1
        %vm3291 = vcmask 523264
        %v3293 = vsel %vm3291, %v1275, 0
        %v3296 = vsel %vm3291, %v1276, 0
        %v3299 = vsel %vm3291, %v1277, 0
        %v3302 = vsel %vm3291, %v1278, 0
        %v3305 = vsel %vm3291, %v1279, 0
        %v3308 = vsel %vm3291, %v1280, 0
        %v3311 = vsel %vm3291, %v1281, 0
        %v3314 = vsel %vm3291, %v1282, 0
        %3316 = vmatpush.msra.mxu0 0.0
        %3317 = vmatpush.msra.mxu0 0.0
        %3318 = vmatpush.msra.mxu0 0.0
        %3319 = vmatpush.msra.mxu0 0.0
        %3320 = vmatpush.msra.mxu0 0.0
        %3321 = vmatpush.msra.mxu0 0.0
        %3322 = vmatpush.msra.mxu0 0.0
        %3323 = vmatpush.msra.mxu0 0.0
        %3324 = vmatpush.msra.mxu0 %v2964
        %3325 = vmatpush.msra.mxu0 %v2962
        %3326 = vmatpush.msra.mxu0 %v2959
        %3327 = vmatpush.msra.mxu0 %v2957
        %3328 = vmatpush.msra.mxu0 %v2954
        %3329 = vmatpush.msra.mxu0 %v2952
        %3330 = vmatpush.msra.mxu0 %v2949
        %3331 = vmatpush.msra.mxu0 %v2947
        %3332 = vmatmul.f32.gmra.mxu0 %v3293
        %v3333 = vpop.f32.mrf.mxu0
        %v3334 = vadd.f32 %v3287, %v3333
        %3335 = vmatmul.f32.gmra.mxu0 %v3296
        %v3336 = vpop.f32.mrf.mxu0
        %v3337 = vadd.f32 %v3287, %v3336
        %3338 = vmatmul.f32.gmra.mxu0 %v3299
        %v3339 = vpop.f32.mrf.mxu0
        %v3340 = vadd.f32 %v3287, %v3339
        %3341 = vmatmul.f32.gmra.mxu0 %v3302
        %v3342 = vpop.f32.mrf.mxu0
        %v3343 = vadd.f32 %v3287, %v3342
        %3344 = vmatmul.f32.gmra.mxu0 %v3305
        %v3345 = vpop.f32.mrf.mxu0
        %v3346 = vadd.f32 %v3287, %v3345
        %3347 = vmatmul.f32.gmra.mxu0 %v3308
        %v3348 = vpop.f32.mrf.mxu0
        %v3349 = vadd.f32 %v3287, %v3348
        %3350 = vmatmul.f32.gmra.mxu0 %v3311
        %v3351 = vpop.f32.mrf.mxu0
        %v3352 = vadd.f32 %v3287, %v3351
        %3353 = vmatmul.f32.gmra.mxu0 %v3314
        %v3354 = vpop.f32.mrf.mxu0
        %v3355 = vadd.f32 %v3287, %v3354
        %3356 = vdwg.mxu0
        %3357 = vmatpush.msra.mxu0 0.0
        %3358 = vmatpush.msra.mxu0 0.0
        %3359 = vmatpush.msra.mxu0 0.0
        %3360 = vmatpush.msra.mxu0 0.0
        %3361 = vmatpush.msra.mxu0 0.0
        %3362 = vmatpush.msra.mxu0 0.0
        %3363 = vmatpush.msra.mxu0 0.0
        %3364 = vmatpush.msra.mxu0 0.0
        %3365 = vmatpush.msra.mxu0 %v3283
        %3366 = vmatpush.msra.mxu0 %v3281
        %3367 = vmatpush.msra.mxu0 %v3278
        %3368 = vmatpush.msra.mxu0 %v3276
        %3369 = vmatpush.msra.mxu0 %v3273
        %3370 = vmatpush.msra.mxu0 %v3271
        %3371 = vmatpush.msra.mxu0 %v3268
        %3372 = vmatpush.msra.mxu0 %v3266
        %3373 = vmatmul.f32.gmra.mxu0 %v3293
        %v3374 = vpop.f32.mrf.mxu0
        %v3375 = vadd.f32 %v3288, %v3374
        %3376 = vmatmul.f32.gmra.mxu0 %v3296
        %v3377 = vpop.f32.mrf.mxu0
        %v3378 = vadd.f32 %v3288, %v3377
        %3379 = vmatmul.f32.gmra.mxu0 %v3299
        %v3380 = vpop.f32.mrf.mxu0
        %v3381 = vadd.f32 %v3288, %v3380
        %3382 = vmatmul.f32.gmra.mxu0 %v3302
        %v3383 = vpop.f32.mrf.mxu0
        %v3384 = vadd.f32 %v3288, %v3383
        %3385 = vmatmul.f32.gmra.mxu0 %v3305
        %v3386 = vpop.f32.mrf.mxu0
        %v3387 = vadd.f32 %v3288, %v3386
        %3388 = vmatmul.f32.gmra.mxu0 %v3308
        %v3389 = vpop.f32.mrf.mxu0
        %v3390 = vadd.f32 %v3288, %v3389
        %3391 = vmatmul.f32.gmra.mxu0 %v3311
        %v3392 = vpop.f32.mrf.mxu0
        %v3393 = vadd.f32 %v3288, %v3392
        %3394 = vmatmul.f32.gmra.mxu0 %v3314
        %v3395 = vpop.f32.mrf.mxu0
        %v3396 = vadd.f32 %v3288, %v3395
        %3397 = vdwg.mxu0
        %v3398 = vmax.f32 %v3334, 0.0
        %v3399 = vmax.f32 %v3375, 0.0
        %v3400 = vmax.f32 %v3337, 0.0
        %v3401 = vmax.f32 %v3378, 0.0
        %v3402 = vmax.f32 %v3340, 0.0
        %v3403 = vmax.f32 %v3381, 0.0
        %v3404 = vmax.f32 %v3343, 0.0
        %v3405 = vmax.f32 %v3384, 0.0
        %v3406 = vmax.f32 %v3346, 0.0
        %v3407 = vmax.f32 %v3387, 0.0
        %v3408 = vmax.f32 %v3349, 0.0
        %v3409 = vmax.f32 %v3390, 0.0
        %v3410 = vmax.f32 %v3352, 0.0
        %v3411 = vmax.f32 %v3393, 0.0
        %v3412 = vmax.f32 %v3355, 0.0
        %v3413 = vmax.f32 %v3396, 0.0
        %v3414 = vld [vmem:[#allocation2] sm:$0xff]
        %v3415 = vld [vmem:[#allocation2 + $0x8] sm:$0xff]
        %v3416 = vld [vmem:[#allocation2 + $0x10] sm:$0xff]
        %v3417 = vld [vmem:[#allocation2 + $0x18] sm:$0xff]
        %v3418 = vld [vmem:[#allocation2 + $0x20] sm:$0xff]
        %v3419 = vld [vmem:[#allocation2 + $0x28] sm:$0xff]
        %v3420 = vld [vmem:[#allocation2 + $0x30] sm:$0xff]
        %v3421 = vld [vmem:[#allocation2 + $0x38] sm:$0xff]
        %v3422 = vld [vmem:[#allocation2 + $0x40] sm:$0xff]
        %v3423 = vld [vmem:[#allocation2 + $0x48] sm:$0xff]
        %v3424 = vld [vmem:[#allocation2 + $0x50] sm:$0xff]
        %v3425 = vld [vmem:[#allocation2 + $0x58] sm:$0xff]
        %v3426 = vld [vmem:[#allocation2 + $0x60] sm:$0xff]
        %v3427 = vld [vmem:[#allocation2 + $0x68] sm:$0xff]
        %v3428 = vld [vmem:[#allocation2 + $0x70] sm:$0xff]
        %v3429 = vld [vmem:[#allocation2 + $0x78] sm:$0xff]
        %v3430 = vld [vmem:[#allocation2 + $0x80] sm:$0xff]
        %v3431 = vld [vmem:[#allocation2 + $0x88] sm:$0xff]
        %v3432 = vld [vmem:[#allocation2 + $0x90] sm:$0xff]
        %v3433 = vld [vmem:[#allocation2 + $0x98] sm:$0xff]
        %v3434 = vld [vmem:[#allocation2 + $0xa0] sm:$0xff]
        %v3435 = vld [vmem:[#allocation2 + $0xa8] sm:$0xff]
        %v3436 = vld [vmem:[#allocation2 + $0xb0] sm:$0xff]
        %v3437 = vld [vmem:[#allocation2 + $0xb8] sm:$0xff]
        %v3438 = vld [vmem:[#allocation2 + $0xc0] sm:$0xff]
        %v3439 = vld [vmem:[#allocation2 + $0xc8] sm:$0xff]
        %v3440 = vld [vmem:[#allocation2 + $0xd0] sm:$0xff]
        %v3441 = vld [vmem:[#allocation2 + $0xd8] sm:$0xff]
        %v3442 = vld [vmem:[#allocation2 + $0xe0] sm:$0xff]
        %v3443 = vld [vmem:[#allocation2 + $0xe8] sm:$0xff]
        %v3444 = vld [vmem:[#allocation2 + $0xf0] sm:$0xff]
        %v3445 = vld [vmem:[#allocation2 + $0xf8] sm:$0xff]
        %v3446 = vpack.c.bf16 %v3400, %v3398
        %v3447 = vpack.c.bf16 %v3401, %v3399
        %v3448 = vpack.c.bf16 %v3404, %v3402
        %v3449 = vpack.c.bf16 %v3405, %v3403
        %v3450 = vpack.c.bf16 %v3408, %v3406
        %v3451 = vpack.c.bf16 %v3409, %v3407
        %v3452 = vpack.c.bf16 %v3412, %v3410
        %v3453 = vpack.c.bf16 %v3413, %v3411
        %v3454 = vld [vmem:[%s1206] sm:$0xff]
        %v3455 = vld [vmem:[%s1206 + $0x8] sm:$0xff]
        %v3456 = vld [vmem:[%s1206 + $0x10] sm:$0xff]
        %v3457 = vld [vmem:[%s1206 + $0x18] sm:$0xff]
        %v3458 = vld [vmem:[%s1206 + $0x20] sm:$0xff]
        %v3459 = vld [vmem:[%s1206 + $0x28] sm:$0xff]
        %v3460 = vld [vmem:[%s1206 + $0x30] sm:$0xff]
        %v3461 = vld [vmem:[%s1206 + $0x38] sm:$0xff]
        %v3462 = vld [vmem:[%s1206 + $0x40] sm:$0xff]
        %v3463 = vld [vmem:[%s1206 + $0x48] sm:$0xff]
        %v3464 = vld [vmem:[%s1206 + $0x50] sm:$0xff]
        %v3465 = vld [vmem:[%s1206 + $0x58] sm:$0xff]
        %v3466 = vld [vmem:[%s1206 + $0x60] sm:$0xff]
        %v3467 = vld [vmem:[%s1206 + $0x68] sm:$0xff]
        %v3468 = vld [vmem:[%s1206 + $0x70] sm:$0xff]
        %v3469 = vld [vmem:[%s1206 + $0x78] sm:$0xff]
        %v3470 = vld [vmem:[%s1206 + $0x80] sm:$0xff]
        %v3471 = vld [vmem:[%s1206 + $0x88] sm:$0xff]
        %v3472 = vld [vmem:[%s1206 + $0x90] sm:$0xff]
        %v3473 = vld [vmem:[%s1206 + $0x98] sm:$0xff]
        %v3474 = vld [vmem:[%s1206 + $0xa0] sm:$0xff]
        %v3475 = vld [vmem:[%s1206 + $0xa8] sm:$0xff]
        %v3476 = vld [vmem:[%s1206 + $0xb0] sm:$0xff]
        %v3477 = vld [vmem:[%s1206 + $0xb8] sm:$0xff]
        %v3478 = vld [vmem:[%s1206 + $0xc0] sm:$0xff]
        %v3479 = vld [vmem:[%s1206 + $0xc8] sm:$0xff]
        %v3480 = vld [vmem:[%s1206 + $0xd0] sm:$0xff]
        %v3481 = vld [vmem:[%s1206 + $0xd8] sm:$0xff]
        %v3482 = vld [vmem:[%s1206 + $0xe0] sm:$0xff]
        %v3483 = vld [vmem:[%s1206 + $0xe8] sm:$0xff]
        %v3484 = vld [vmem:[%s1206 + $0xf0] sm:$0xff]
        %v3485 = vld [vmem:[%s1206 + $0xf8] sm:$0xff]
        %v3486 = vld [vmem:[%s1206 + $0x100] sm:$0xff]
        %v3487 = vld [vmem:[%s1206 + $0x108] sm:$0xff]
        %v3488 = vld [vmem:[%s1206 + $0x110] sm:$0xff]
        %v3489 = vld [vmem:[%s1206 + $0x118] sm:$0xff]
        %v3490 = vld [vmem:[%s1206 + $0x120] sm:$0xff]
        %v3491 = vld [vmem:[%s1206 + $0x128] sm:$0xff]
        %v3492 = vld [vmem:[%s1206 + $0x130] sm:$0xff]
        %v3493 = vld [vmem:[%s1206 + $0x138] sm:$0xff]
        %v3494 = vld [vmem:[%s1206 + $0x140] sm:$0xff]
        %v3495 = vld [vmem:[%s1206 + $0x148] sm:$0xff]
        %v3496 = vld [vmem:[%s1206 + $0x150] sm:$0xff]
        %v3497 = vld [vmem:[%s1206 + $0x158] sm:$0xff]
        %v3498 = vld [vmem:[%s1206 + $0x160] sm:$0xff]
        %v3499 = vld [vmem:[%s1206 + $0x168] sm:$0xff]
        %v3500 = vld [vmem:[%s1206 + $0x170] sm:$0xff]
        %v3501 = vld [vmem:[%s1206 + $0x178] sm:$0xff]
        %v3502 = vld [vmem:[%s1206 + $0x180] sm:$0xff]
        %v3503 = vld [vmem:[%s1206 + $0x188] sm:$0xff]
        %v3504 = vld [vmem:[%s1206 + $0x190] sm:$0xff]
        %v3505 = vld [vmem:[%s1206 + $0x198] sm:$0xff]
        %v3506 = vld [vmem:[%s1206 + $0x1a0] sm:$0xff]
        %v3507 = vld [vmem:[%s1206 + $0x1a8] sm:$0xff]
        %v3508 = vld [vmem:[%s1206 + $0x1b0] sm:$0xff]
        %v3509 = vld [vmem:[%s1206 + $0x1b8] sm:$0xff]
        %v3510 = vld [vmem:[%s1206 + $0x1c0] sm:$0xff]
        %v3511 = vld [vmem:[%s1206 + $0x1c8] sm:$0xff]
        %v3512 = vld [vmem:[%s1206 + $0x1d0] sm:$0xff]
        %v3513 = vld [vmem:[%s1206 + $0x1d8] sm:$0xff]
        %v3514 = vld [vmem:[%s1206 + $0x1e0] sm:$0xff]
        %v3515 = vld [vmem:[%s1206 + $0x1e8] sm:$0xff]
        %v3516 = vld [vmem:[%s1206 + $0x1f0] sm:$0xff]
        %v3517 = vld [vmem:[%s1206 + $0x1f8] sm:$0xff]
        %v3582 = vunpack.c.l.b16 %v3454
        %v3583 = vunpack.c.h.b16 %v3454
        %v3584 = vunpack.c.l.b16 %v3455
        %v3585 = vunpack.c.h.b16 %v3455
        %v3586 = vunpack.c.l.b16 %v3456
        %v3587 = vunpack.c.h.b16 %v3456
        %v3588 = vunpack.c.l.b16 %v3457
        %v3589 = vunpack.c.h.b16 %v3457
        %v3590 = vunpack.c.l.b16 %v3458
        %v3591 = vunpack.c.h.b16 %v3458
        %v3592 = vunpack.c.l.b16 %v3459
        %v3593 = vunpack.c.h.b16 %v3459
        %v3594 = vunpack.c.l.b16 %v3460
        %v3595 = vunpack.c.h.b16 %v3460
        %v3596 = vunpack.c.l.b16 %v3461
        %v3597 = vunpack.c.h.b16 %v3461
        %v3598 = vunpack.c.l.b16 %v3462
        %v3599 = vunpack.c.h.b16 %v3462
        %v3600 = vunpack.c.l.b16 %v3463
        %v3601 = vunpack.c.h.b16 %v3463
        %v3602 = vunpack.c.l.b16 %v3464
        %v3603 = vunpack.c.h.b16 %v3464
        %v3604 = vunpack.c.l.b16 %v3465
        %v3605 = vunpack.c.h.b16 %v3465
        %v3606 = vunpack.c.l.b16 %v3466
        %v3607 = vunpack.c.h.b16 %v3466
        %v3608 = vunpack.c.l.b16 %v3467
        %v3609 = vunpack.c.h.b16 %v3467
        %v3610 = vunpack.c.l.b16 %v3468
        %v3611 = vunpack.c.h.b16 %v3468
        %v3612 = vunpack.c.l.b16 %v3469
        %v3613 = vunpack.c.h.b16 %v3469
        %v3614 = vunpack.c.l.b16 %v3470
        %v3615 = vunpack.c.h.b16 %v3470
        %v3616 = vunpack.c.l.b16 %v3471
        %v3617 = vunpack.c.h.b16 %v3471
        %v3618 = vunpack.c.l.b16 %v3472
        %v3619 = vunpack.c.h.b16 %v3472
        %v3620 = vunpack.c.l.b16 %v3473
        %v3621 = vunpack.c.h.b16 %v3473
        %v3622 = vunpack.c.l.b16 %v3474
        %v3623 = vunpack.c.h.b16 %v3474
        %v3624 = vunpack.c.l.b16 %v3475
        %v3625 = vunpack.c.h.b16 %v3475
        %v3626 = vunpack.c.l.b16 %v3476
        %v3627 = vunpack.c.h.b16 %v3476
        %v3628 = vunpack.c.l.b16 %v3477
        %v3629 = vunpack.c.h.b16 %v3477
        %v3630 = vunpack.c.l.b16 %v3478
        %v3631 = vunpack.c.h.b16 %v3478
        %v3632 = vunpack.c.l.b16 %v3479
        %v3633 = vunpack.c.h.b16 %v3479
        %v3634 = vunpack.c.l.b16 %v3480
        %v3635 = vunpack.c.h.b16 %v3480
        %v3636 = vunpack.c.l.b16 %v3481
        %v3637 = vunpack.c.h.b16 %v3481
        %v3638 = vunpack.c.l.b16 %v3482
        %v3639 = vunpack.c.h.b16 %v3482
        %v3640 = vunpack.c.l.b16 %v3483
        %v3641 = vunpack.c.h.b16 %v3483
        %v3642 = vunpack.c.l.b16 %v3484
        %v3643 = vunpack.c.h.b16 %v3484
        %v3644 = vunpack.c.l.b16 %v3485
        %v3645 = vunpack.c.h.b16 %v3485
        %v3646 = vunpack.c.l.b16 %v3486
        %v3647 = vunpack.c.h.b16 %v3486
        %v3648 = vunpack.c.l.b16 %v3487
        %v3649 = vunpack.c.h.b16 %v3487
        %v3650 = vunpack.c.l.b16 %v3488
        %v3651 = vunpack.c.h.b16 %v3488
        %v3652 = vunpack.c.l.b16 %v3489
        %v3653 = vunpack.c.h.b16 %v3489
        %v3654 = vunpack.c.l.b16 %v3490
        %v3655 = vunpack.c.h.b16 %v3490
        %v3656 = vunpack.c.l.b16 %v3491
        %v3657 = vunpack.c.h.b16 %v3491
        %v3658 = vunpack.c.l.b16 %v3492
        %v3659 = vunpack.c.h.b16 %v3492
        %v3660 = vunpack.c.l.b16 %v3493
        %v3661 = vunpack.c.h.b16 %v3493
        %v3662 = vunpack.c.l.b16 %v3494
        %v3663 = vunpack.c.h.b16 %v3494
        %v3664 = vunpack.c.l.b16 %v3495
        %v3665 = vunpack.c.h.b16 %v3495
        %v3666 = vunpack.c.l.b16 %v3496
        %v3667 = vunpack.c.h.b16 %v3496
        %v3668 = vunpack.c.l.b16 %v3497
        %v3669 = vunpack.c.h.b16 %v3497
        %v3670 = vunpack.c.l.b16 %v3498
        %v3671 = vunpack.c.h.b16 %v3498
        %v3672 = vunpack.c.l.b16 %v3499
        %v3673 = vunpack.c.h.b16 %v3499
        %v3674 = vunpack.c.l.b16 %v3500
        %v3675 = vunpack.c.h.b16 %v3500
        %v3676 = vunpack.c.l.b16 %v3501
        %v3677 = vunpack.c.h.b16 %v3501
        %v3678 = vunpack.c.l.b16 %v3502
        %v3679 = vunpack.c.h.b16 %v3502
        %v3680 = vunpack.c.l.b16 %v3503
        %v3681 = vunpack.c.h.b16 %v3503
        %v3682 = vunpack.c.l.b16 %v3504
        %v3683 = vunpack.c.h.b16 %v3504
        %v3684 = vunpack.c.l.b16 %v3505
        %v3685 = vunpack.c.h.b16 %v3505
        %v3686 = vunpack.c.l.b16 %v3506
        %v3687 = vunpack.c.h.b16 %v3506
        %v3688 = vunpack.c.l.b16 %v3507
        %v3689 = vunpack.c.h.b16 %v3507
        %v3690 = vunpack.c.l.b16 %v3508
        %v3691 = vunpack.c.h.b16 %v3508
        %v3692 = vunpack.c.l.b16 %v3509
        %v3693 = vunpack.c.h.b16 %v3509
        %v3694 = vunpack.c.l.b16 %v3510
        %v3695 = vunpack.c.h.b16 %v3510
        %v3696 = vunpack.c.l.b16 %v3511
        %v3697 = vunpack.c.h.b16 %v3511
        %v3698 = vunpack.c.l.b16 %v3512
        %v3699 = vunpack.c.h.b16 %v3512
        %v3700 = vunpack.c.l.b16 %v3513
        %v3701 = vunpack.c.h.b16 %v3513
        %v3702 = vunpack.c.l.b16 %v3514
        %v3703 = vunpack.c.h.b16 %v3514
        %v3704 = vunpack.c.l.b16 %v3515
        %v3705 = vunpack.c.h.b16 %v3515
        %v3706 = vunpack.c.l.b16 %v3516
        %v3707 = vunpack.c.h.b16 %v3516
        %v3708 = vunpack.c.l.b16 %v3517
        %v3709 = vunpack.c.h.b16 %v3517
        %v3710 = vpack.c.b16 %v3586, %v3582
        %v3711 = vpack.c.b16 %v3587, %v3583
        %v3712 = vpack.c.b16 %v3588, %v3584
        %v3713 = vpack.c.b16 %v3589, %v3585
        %v3714 = vpack.c.b16 %v3594, %v3590
        %v3715 = vpack.c.b16 %v3595, %v3591
        %v3716 = vpack.c.b16 %v3596, %v3592
        %v3717 = vpack.c.b16 %v3597, %v3593
        %v3718 = vpack.c.b16 %v3602, %v3598
        %v3719 = vpack.c.b16 %v3603, %v3599
        %v3720 = vpack.c.b16 %v3604, %v3600
        %v3721 = vpack.c.b16 %v3605, %v3601
        %v3722 = vpack.c.b16 %v3610, %v3606
        %v3723 = vpack.c.b16 %v3611, %v3607
        %v3724 = vpack.c.b16 %v3612, %v3608
        %v3725 = vpack.c.b16 %v3613, %v3609
        %v3726 = vpack.c.b16 %v3618, %v3614
        %v3727 = vpack.c.b16 %v3619, %v3615
        %v3728 = vpack.c.b16 %v3620, %v3616
        %v3729 = vpack.c.b16 %v3621, %v3617
        %v3730 = vpack.c.b16 %v3626, %v3622
        %v3731 = vpack.c.b16 %v3627, %v3623
        %v3732 = vpack.c.b16 %v3628, %v3624
        %v3733 = vpack.c.b16 %v3629, %v3625
        %v3734 = vpack.c.b16 %v3634, %v3630
        %v3735 = vpack.c.b16 %v3635, %v3631
        %v3736 = vpack.c.b16 %v3636, %v3632
        %v3737 = vpack.c.b16 %v3637, %v3633
        %v3738 = vpack.c.b16 %v3642, %v3638
        %v3739 = vpack.c.b16 %v3643, %v3639
        %v3740 = vpack.c.b16 %v3644, %v3640
        %v3741 = vpack.c.b16 %v3645, %v3641
        %v3742 = vpack.c.b16 %v3650, %v3646
        %v3743 = vpack.c.b16 %v3651, %v3647
        %v3744 = vpack.c.b16 %v3652, %v3648
        %v3745 = vpack.c.b16 %v3653, %v3649
        %v3746 = vpack.c.b16 %v3658, %v3654
        %v3747 = vpack.c.b16 %v3659, %v3655
        %v3748 = vpack.c.b16 %v3660, %v3656
        %v3749 = vpack.c.b16 %v3661, %v3657
        %v3750 = vpack.c.b16 %v3666, %v3662
        %v3751 = vpack.c.b16 %v3667, %v3663
        %v3752 = vpack.c.b16 %v3668, %v3664
        %v3753 = vpack.c.b16 %v3669, %v3665
        %v3754 = vpack.c.b16 %v3674, %v3670
        %v3755 = vpack.c.b16 %v3675, %v3671
        %v3756 = vpack.c.b16 %v3676, %v3672
        %v3757 = vpack.c.b16 %v3677, %v3673
        %v3758 = vpack.c.b16 %v3682, %v3678
        %v3759 = vpack.c.b16 %v3683, %v3679
        %v3760 = vpack.c.b16 %v3684, %v3680
        %v3761 = vpack.c.b16 %v3685, %v3681
        %v3762 = vpack.c.b16 %v3690, %v3686
        %v3763 = vpack.c.b16 %v3691, %v3687
        %v3764 = vpack.c.b16 %v3692, %v3688
        %v3765 = vpack.c.b16 %v3693, %v3689
        %v3766 = vpack.c.b16 %v3698, %v3694
        %v3767 = vpack.c.b16 %v3699, %v3695
        %v3768 = vpack.c.b16 %v3700, %v3696
        %v3769 = vpack.c.b16 %v3701, %v3697
        %v3770 = vpack.c.b16 %v3706, %v3702
        %v3771 = vpack.c.b16 %v3707, %v3703
        %v3772 = vpack.c.b16 %v3708, %v3704
        %v3773 = vpack.c.b16 %v3709, %v3705
        %3838 = vmatpush.bf16.msra.mxu0 %v3738
        %3839 = vmatpush.bf16.msra.mxu0 %v3734
        %3840 = vmatpush.bf16.msra.mxu0 %v3730
        %3841 = vmatpush.bf16.msra.mxu0 %v3726
        %3842 = vmatpush.bf16.msra.mxu0 %v3722
        %3843 = vmatpush.bf16.msra.mxu0 %v3718
        %3844 = vmatpush.bf16.msra.mxu0 %v3714
        %3845 = vmatpush.bf16.msra.mxu0 %v3710
        %3846 = vmatmul.bf16.gmra.mxu0 %v3446
        %v3847 = vpop.f32.mrf.mxu0
        %v3848 = vadd.f32 0.0, %v3847
        %v3849 = vpop.f32.mrf.mxu0
        %v3850 = vadd.f32 0.0, %v3849
        %3851 = vmatmul.bf16.gmra.mxu0 %v3448
        %v3852 = vpop.f32.mrf.mxu0
        %v3853 = vadd.f32 0.0, %v3852
        %v3854 = vpop.f32.mrf.mxu0
        %v3855 = vadd.f32 0.0, %v3854
        %3856 = vmatmul.bf16.gmra.mxu0 %v3450
        %v3857 = vpop.f32.mrf.mxu0
        %v3858 = vadd.f32 0.0, %v3857
        %v3859 = vpop.f32.mrf.mxu0
        %v3860 = vadd.f32 0.0, %v3859
        %3861 = vmatmul.bf16.gmra.mxu0 %v3452
        %v3862 = vpop.f32.mrf.mxu0
        %v3863 = vadd.f32 0.0, %v3862
        %v3864 = vpop.f32.mrf.mxu0
        %v3865 = vadd.f32 0.0, %v3864
        %3866 = vdwg.mxu0
        %3867 = vmatpush.bf16.msra.mxu0 %v3770
        %3868 = vmatpush.bf16.msra.mxu0 %v3766
        %3869 = vmatpush.bf16.msra.mxu0 %v3762
        %3870 = vmatpush.bf16.msra.mxu0 %v3758
        %3871 = vmatpush.bf16.msra.mxu0 %v3754
        %3872 = vmatpush.bf16.msra.mxu0 %v3750
        %3873 = vmatpush.bf16.msra.mxu0 %v3746
        %3874 = vmatpush.bf16.msra.mxu0 %v3742
        %3875 = vmatmul.bf16.gmra.mxu0 %v3447
        %v3876 = vpop.f32.mrf.mxu0
        %v3877 = vadd.f32 %v3848, %v3876
        %v3878 = vpop.f32.mrf.mxu0
        %v3879 = vadd.f32 %v3850, %v3878
        %3880 = vmatmul.bf16.gmra.mxu0 %v3449
        %v3881 = vpop.f32.mrf.mxu0
        %v3882 = vadd.f32 %v3853, %v3881
        %v3883 = vpop.f32.mrf.mxu0
        %v3884 = vadd.f32 %v3855, %v3883
        %3885 = vmatmul.bf16.gmra.mxu0 %v3451
        %v3886 = vpop.f32.mrf.mxu0
        %v3887 = vadd.f32 %v3858, %v3886
        %v3888 = vpop.f32.mrf.mxu0
        %v3889 = vadd.f32 %v3860, %v3888
        %3890 = vmatmul.bf16.gmra.mxu0 %v3453
        %v3891 = vpop.f32.mrf.mxu0
        %v3892 = vadd.f32 %v3863, %v3891
        %v3893 = vpop.f32.mrf.mxu0
        %v3894 = vadd.f32 %v3865, %v3893
        %3895 = vdwg.mxu0
        %3896 = vmatpush.bf16.msra.mxu0 %v3739
        %3897 = vmatpush.bf16.msra.mxu0 %v3735
        %3898 = vmatpush.bf16.msra.mxu0 %v3731
        %3899 = vmatpush.bf16.msra.mxu0 %v3727
        %3900 = vmatpush.bf16.msra.mxu0 %v3723
        %3901 = vmatpush.bf16.msra.mxu0 %v3719
        %3902 = vmatpush.bf16.msra.mxu0 %v3715
        %3903 = vmatpush.bf16.msra.mxu0 %v3711
        %3904 = vmatmul.bf16.gmra.mxu0 %v3446
        %v3905 = vpop.f32.mrf.mxu0
        %v3906 = vadd.f32 0.0, %v3905
        %v3907 = vpop.f32.mrf.mxu0
        %v3908 = vadd.f32 0.0, %v3907
        %3909 = vmatmul.bf16.gmra.mxu0 %v3448
        %v3910 = vpop.f32.mrf.mxu0
        %v3911 = vadd.f32 0.0, %v3910
        %v3912 = vpop.f32.mrf.mxu0
        %v3913 = vadd.f32 0.0, %v3912
        %3914 = vmatmul.bf16.gmra.mxu0 %v3450
        %v3915 = vpop.f32.mrf.mxu0
        %v3916 = vadd.f32 0.0, %v3915
        %v3917 = vpop.f32.mrf.mxu0
        %v3918 = vadd.f32 0.0, %v3917
        %3919 = vmatmul.bf16.gmra.mxu0 %v3452
        %v3920 = vpop.f32.mrf.mxu0
        %v3921 = vadd.f32 0.0, %v3920
        %v3922 = vpop.f32.mrf.mxu0
        %v3923 = vadd.f32 0.0, %v3922
        %3924 = vdwg.mxu0
        %3925 = vmatpush.bf16.msra.mxu0 %v3771
        %3926 = vmatpush.bf16.msra.mxu0 %v3767
        %3927 = vmatpush.bf16.msra.mxu0 %v3763
        %3928 = vmatpush.bf16.msra.mxu0 %v3759
        %3929 = vmatpush.bf16.msra.mxu0 %v3755
        %3930 = vmatpush.bf16.msra.mxu0 %v3751
        %3931 = vmatpush.bf16.msra.mxu0 %v3747
        %3932 = vmatpush.bf16.msra.mxu0 %v3743
        %3933 = vmatmul.bf16.gmra.mxu0 %v3447
        %v3934 = vpop.f32.mrf.mxu0
        %v3935 = vadd.f32 %v3906, %v3934
        %v3936 = vpop.f32.mrf.mxu0
        %v3937 = vadd.f32 %v3908, %v3936
        %3938 = vmatmul.bf16.gmra.mxu0 %v3449
        %v3939 = vpop.f32.mrf.mxu0
        %v3940 = vadd.f32 %v3911, %v3939
        %v3941 = vpop.f32.mrf.mxu0
        %v3942 = vadd.f32 %v3913, %v3941
        %3943 = vmatmul.bf16.gmra.mxu0 %v3451
        %v3944 = vpop.f32.mrf.mxu0
        %v3945 = vadd.f32 %v3916, %v3944
        %v3946 = vpop.f32.mrf.mxu0
        %v3947 = vadd.f32 %v3918, %v3946
        %3948 = vmatmul.bf16.gmra.mxu0 %v3453
        %v3949 = vpop.f32.mrf.mxu0
        %v3950 = vadd.f32 %v3921, %v3949
        %v3951 = vpop.f32.mrf.mxu0
        %v3952 = vadd.f32 %v3923, %v3951
        %3953 = vdwg.mxu0
        %3954 = vmatpush.bf16.msra.mxu0 %v3740
        %3955 = vmatpush.bf16.msra.mxu0 %v3736
        %3956 = vmatpush.bf16.msra.mxu0 %v3732
        %3957 = vmatpush.bf16.msra.mxu0 %v3728
        %3958 = vmatpush.bf16.msra.mxu0 %v3724
        %3959 = vmatpush.bf16.msra.mxu0 %v3720
        %3960 = vmatpush.bf16.msra.mxu0 %v3716
        %3961 = vmatpush.bf16.msra.mxu0 %v3712
        %3962 = vmatmul.bf16.gmra.mxu0 %v3446
        %v3963 = vpop.f32.mrf.mxu0
        %v3964 = vadd.f32 0.0, %v3963
        %v3965 = vpop.f32.mrf.mxu0
        %v3966 = vadd.f32 0.0, %v3965
        %3967 = vmatmul.bf16.gmra.mxu0 %v3448
        %v3968 = vpop.f32.mrf.mxu0
        %v3969 = vadd.f32 0.0, %v3968
        %v3970 = vpop.f32.mrf.mxu0
        %v3971 = vadd.f32 0.0, %v3970
        %3972 = vmatmul.bf16.gmra.mxu0 %v3450
        %v3973 = vpop.f32.mrf.mxu0
        %v3974 = vadd.f32 0.0, %v3973
        %v3975 = vpop.f32.mrf.mxu0
        %v3976 = vadd.f32 0.0, %v3975
        %3977 = vmatmul.bf16.gmra.mxu0 %v3452
        %v3978 = vpop.f32.mrf.mxu0
        %v3979 = vadd.f32 0.0, %v3978
        %v3980 = vpop.f32.mrf.mxu0
        %v3981 = vadd.f32 0.0, %v3980
        %3982 = vdwg.mxu0
        %3983 = vmatpush.bf16.msra.mxu0 %v3772
        %3984 = vmatpush.bf16.msra.mxu0 %v3768
        %3985 = vmatpush.bf16.msra.mxu0 %v3764
        %3986 = vmatpush.bf16.msra.mxu0 %v3760
        %3987 = vmatpush.bf16.msra.mxu0 %v3756
        %3988 = vmatpush.bf16.msra.mxu0 %v3752
        %3989 = vmatpush.bf16.msra.mxu0 %v3748
        %3990 = vmatpush.bf16.msra.mxu0 %v3744
        %3991 = vmatmul.bf16.gmra.mxu0 %v3447
        %v3992 = vpop.f32.mrf.mxu0
        %v3993 = vadd.f32 %v3964, %v3992
        %v3994 = vpop.f32.mrf.mxu0
        %v3995 = vadd.f32 %v3966, %v3994
        %3996 = vmatmul.bf16.gmra.mxu0 %v3449
        %v3997 = vpop.f32.mrf.mxu0
        %v3998 = vadd.f32 %v3969, %v3997
        %v3999 = vpop.f32.mrf.mxu0
        %v4000 = vadd.f32 %v3971, %v3999
        %4001 = vmatmul.bf16.gmra.mxu0 %v3451
        %v4002 = vpop.f32.mrf.mxu0
        %v4003 = vadd.f32 %v3974, %v4002
        %v4004 = vpop.f32.mrf.mxu0
        %v4005 = vadd.f32 %v3976, %v4004
        %4006 = vmatmul.bf16.gmra.mxu0 %v3453
        %v4007 = vpop.f32.mrf.mxu0
        %v4008 = vadd.f32 %v3979, %v4007
        %v4009 = vpop.f32.mrf.mxu0
        %v4010 = vadd.f32 %v3981, %v4009
        %4011 = vdwg.mxu0
        %4012 = vmatpush.bf16.msra.mxu0 %v3741
        %4013 = vmatpush.bf16.msra.mxu0 %v3737
        %4014 = vmatpush.bf16.msra.mxu0 %v3733
        %4015 = vmatpush.bf16.msra.mxu0 %v3729
        %4016 = vmatpush.bf16.msra.mxu0 %v3725
        %4017 = vmatpush.bf16.msra.mxu0 %v3721
        %4018 = vmatpush.bf16.msra.mxu0 %v3717
        %4019 = vmatpush.bf16.msra.mxu0 %v3713
        %4020 = vmatmul.bf16.gmra.mxu0 %v3446
        %v4021 = vpop.f32.mrf.mxu0
        %v4022 = vadd.f32 0.0, %v4021
        %v4023 = vpop.f32.mrf.mxu0
        %v4024 = vadd.f32 0.0, %v4023
        %4025 = vmatmul.bf16.gmra.mxu0 %v3448
        %v4026 = vpop.f32.mrf.mxu0
        %v4027 = vadd.f32 0.0, %v4026
        %v4028 = vpop.f32.mrf.mxu0
        %v4029 = vadd.f32 0.0, %v4028
        %4030 = vmatmul.bf16.gmra.mxu0 %v3450
        %v4031 = vpop.f32.mrf.mxu0
        %v4032 = vadd.f32 0.0, %v4031
        %v4033 = vpop.f32.mrf.mxu0
        %v4034 = vadd.f32 0.0, %v4033
        %4035 = vmatmul.bf16.gmra.mxu0 %v3452
        %v4036 = vpop.f32.mrf.mxu0
        %v4037 = vadd.f32 0.0, %v4036
        %v4038 = vpop.f32.mrf.mxu0
        %v4039 = vadd.f32 0.0, %v4038
        %4040 = vdwg.mxu0
        %4041 = vmatpush.bf16.msra.mxu0 %v3773
        %4042 = vmatpush.bf16.msra.mxu0 %v3769
        %4043 = vmatpush.bf16.msra.mxu0 %v3765
        %4044 = vmatpush.bf16.msra.mxu0 %v3761
        %4045 = vmatpush.bf16.msra.mxu0 %v3757
        %4046 = vmatpush.bf16.msra.mxu0 %v3753
        %4047 = vmatpush.bf16.msra.mxu0 %v3749
        %4048 = vmatpush.bf16.msra.mxu0 %v3745
        %4049 = vmatmul.bf16.gmra.mxu0 %v3447
        %v4050 = vpop.f32.mrf.mxu0
        %v4051 = vadd.f32 %v4022, %v4050
        %v4052 = vpop.f32.mrf.mxu0
        %v4053 = vadd.f32 %v4024, %v4052
        %4054 = vmatmul.bf16.gmra.mxu0 %v3449
        %v4055 = vpop.f32.mrf.mxu0
        %v4056 = vadd.f32 %v4027, %v4055
        %v4057 = vpop.f32.mrf.mxu0
        %v4058 = vadd.f32 %v4029, %v4057
        %4059 = vmatmul.bf16.gmra.mxu0 %v3451
        %v4060 = vpop.f32.mrf.mxu0
        %v4061 = vadd.f32 %v4032, %v4060
        %v4062 = vpop.f32.mrf.mxu0
        %v4063 = vadd.f32 %v4034, %v4062
        %4064 = vmatmul.bf16.gmra.mxu0 %v3453
        %v4065 = vpop.f32.mrf.mxu0
        %v4066 = vadd.f32 %v4037, %v4065
        %v4067 = vpop.f32.mrf.mxu0
        %v4068 = vadd.f32 %v4039, %v4067
        %4069 = vdwg.mxu0
        %v4070 = vadd.f32 %v3414, %v3877
        %v4071 = vadd.f32 %v3415, %v3935
        %v4072 = vadd.f32 %v3416, %v3993
        %v4073 = vadd.f32 %v3417, %v4051
        %v4074 = vadd.f32 %v3418, %v3879
        %v4075 = vadd.f32 %v3419, %v3937
        %v4076 = vadd.f32 %v3420, %v3995
        %v4077 = vadd.f32 %v3421, %v4053
        %v4078 = vadd.f32 %v3422, %v3882
        %v4079 = vadd.f32 %v3423, %v3940
        %v4080 = vadd.f32 %v3424, %v3998
        %v4081 = vadd.f32 %v3425, %v4056
        %v4082 = vadd.f32 %v3426, %v3884
        %v4083 = vadd.f32 %v3427, %v3942
        %v4084 = vadd.f32 %v3428, %v4000
        %v4085 = vadd.f32 %v3429, %v4058
        %v4086 = vadd.f32 %v3430, %v3887
        %v4087 = vadd.f32 %v3431, %v3945
        %v4088 = vadd.f32 %v3432, %v4003
        %v4089 = vadd.f32 %v3433, %v4061
        %v4090 = vadd.f32 %v3434, %v3889
        %v4091 = vadd.f32 %v3435, %v3947
        %v4092 = vadd.f32 %v3436, %v4005
        %v4093 = vadd.f32 %v3437, %v4063
        %v4094 = vadd.f32 %v3438, %v3892
        %v4095 = vadd.f32 %v3439, %v3950
        %v4096 = vadd.f32 %v3440, %v4008
        %v4097 = vadd.f32 %v3441, %v4066
        %v4098 = vadd.f32 %v3442, %v3894
        %v4099 = vadd.f32 %v3443, %v3952
        %v4100 = vadd.f32 %v3444, %v4010
        %v4101 = vadd.f32 %v3445, %v4068
        %4102 = vst [vmem:[#allocation2] sm:$0xff] %v4070
        %4103 = vst [vmem:[#allocation2 + $0x8] sm:$0xff] %v4071
        %4104 = vst [vmem:[#allocation2 + $0x10] sm:$0xff] %v4072
        %4105 = vst [vmem:[#allocation2 + $0x18] sm:$0xff] %v4073
        %4106 = vst [vmem:[#allocation2 + $0x20] sm:$0xff] %v4074
        %4107 = vst [vmem:[#allocation2 + $0x28] sm:$0xff] %v4075
        %4108 = vst [vmem:[#allocation2 + $0x30] sm:$0xff] %v4076
        %4109 = vst [vmem:[#allocation2 + $0x38] sm:$0xff] %v4077
        %4110 = vst [vmem:[#allocation2 + $0x40] sm:$0xff] %v4078
        %4111 = vst [vmem:[#allocation2 + $0x48] sm:$0xff] %v4079
        %4112 = vst [vmem:[#allocation2 + $0x50] sm:$0xff] %v4080
        %4113 = vst [vmem:[#allocation2 + $0x58] sm:$0xff] %v4081
        %4114 = vst [vmem:[#allocation2 + $0x60] sm:$0xff] %v4082
        %4115 = vst [vmem:[#allocation2 + $0x68] sm:$0xff] %v4083
        %4116 = vst [vmem:[#allocation2 + $0x70] sm:$0xff] %v4084
        %4117 = vst [vmem:[#allocation2 + $0x78] sm:$0xff] %v4085
        %4118 = vst [vmem:[#allocation2 + $0x80] sm:$0xff] %v4086
        %4119 = vst [vmem:[#allocation2 + $0x88] sm:$0xff] %v4087
        %4120 = vst [vmem:[#allocation2 + $0x90] sm:$0xff] %v4088
        %4121 = vst [vmem:[#allocation2 + $0x98] sm:$0xff] %v4089
        %4122 = vst [vmem:[#allocation2 + $0xa0] sm:$0xff] %v4090
        %4123 = vst [vmem:[#allocation2 + $0xa8] sm:$0xff] %v4091
        %4124 = vst [vmem:[#allocation2 + $0xb0] sm:$0xff] %v4092
        %4125 = vst [vmem:[#allocation2 + $0xb8] sm:$0xff] %v4093
        %4126 = vst [vmem:[#allocation2 + $0xc0] sm:$0xff] %v4094
        %4127 = vst [vmem:[#allocation2 + $0xc8] sm:$0xff] %v4095
        %4128 = vst [vmem:[#allocation2 + $0xd0] sm:$0xff] %v4096
        %4129 = vst [vmem:[#allocation2 + $0xd8] sm:$0xff] %v4097
        %4130 = vst [vmem:[#allocation2 + $0xe0] sm:$0xff] %v4098
        %4131 = vst [vmem:[#allocation2 + $0xe8] sm:$0xff] %v4099
        %4132 = vst [vmem:[#allocation2 + $0xf0] sm:$0xff] %v4100
        %4133 = vst [vmem:[#allocation2 + $0xf8] sm:$0xff] %v4101
        %p4134 = scmp.eq.s32.totalorder %s31, 3
        // Predicated region
        $region127: #{deformation_block_forward.1} parent=101 // pred_check
          %p4135 = pneg %p4134
        $region128: #{deformation_block_forward.1} parent=101 // pred_check_branch
          %4137 = sbr.rel (%p4135) target = $region130
        $region129: #{deformation_block_forward.1} parent=101 // pred_region
          %v4138 = vld [vmem:[#allocation2] sm:$0xff]
          %v4139 = vld [vmem:[#allocation2 + $0x8] sm:$0xff]
          %v4140 = vld [vmem:[#allocation2 + $0x10] sm:$0xff]
          %v4141 = vld [vmem:[#allocation2 + $0x18] sm:$0xff]
          %v4142 = vld [vmem:[#allocation2 + $0x20] sm:$0xff]
          %v4143 = vld [vmem:[#allocation2 + $0x28] sm:$0xff]
          %v4144 = vld [vmem:[#allocation2 + $0x30] sm:$0xff]
          %v4145 = vld [vmem:[#allocation2 + $0x38] sm:$0xff]
          %v4146 = vld [vmem:[#allocation2 + $0x40] sm:$0xff]
          %v4147 = vld [vmem:[#allocation2 + $0x48] sm:$0xff]
          %v4148 = vld [vmem:[#allocation2 + $0x50] sm:$0xff]
          %v4149 = vld [vmem:[#allocation2 + $0x58] sm:$0xff]
          %v4150 = vld [vmem:[#allocation2 + $0x60] sm:$0xff]
          %v4151 = vld [vmem:[#allocation2 + $0x68] sm:$0xff]
          %v4152 = vld [vmem:[#allocation2 + $0x70] sm:$0xff]
          %v4153 = vld [vmem:[#allocation2 + $0x78] sm:$0xff]
          %v4154 = vld [vmem:[#allocation2 + $0x80] sm:$0xff]
          %v4155 = vld [vmem:[#allocation2 + $0x88] sm:$0xff]
          %v4156 = vld [vmem:[#allocation2 + $0x90] sm:$0xff]
          %v4157 = vld [vmem:[#allocation2 + $0x98] sm:$0xff]
          %v4158 = vld [vmem:[#allocation2 + $0xa0] sm:$0xff]
          %v4159 = vld [vmem:[#allocation2 + $0xa8] sm:$0xff]
          %v4160 = vld [vmem:[#allocation2 + $0xb0] sm:$0xff]
          %v4161 = vld [vmem:[#allocation2 + $0xb8] sm:$0xff]
          %v4162 = vld [vmem:[#allocation2 + $0xc0] sm:$0xff]
          %v4163 = vld [vmem:[#allocation2 + $0xc8] sm:$0xff]
          %v4164 = vld [vmem:[#allocation2 + $0xd0] sm:$0xff]
          %v4165 = vld [vmem:[#allocation2 + $0xd8] sm:$0xff]
          %v4166 = vld [vmem:[#allocation2 + $0xe0] sm:$0xff]
          %v4167 = vld [vmem:[#allocation2 + $0xe8] sm:$0xff]
          %v4168 = vld [vmem:[#allocation2 + $0xf0] sm:$0xff]
          %v4169 = vld [vmem:[#allocation2 + $0xf8] sm:$0xff]
          %v4170 = vld [vmem:[%s5] sm:$0xf]
          %v4172 = vperm.slane %v4170, 0
          %v4173 = vperm.slane %v4170, 1
          %v4174 = vperm.slane %v4170, 2
          %v4175 = vperm.slane %v4170, 3
          %4180 = vmatpush.msra.mxu0 0.0
          %4181 = vmatpush.msra.mxu0 0.0
          %4182 = vmatpush.msra.mxu0 0.0
          %4183 = vmatpush.msra.mxu0 0.0
          %4184 = vmatpush.msra.mxu0 0.0
          %4185 = vmatpush.msra.mxu0 0.0
          %4186 = vmatpush.msra.mxu0 0.0
          %4187 = vmatpush.msra.mxu0 0.0
          %4188 = vmatpush.msra.mxu0 %v4166
          %4189 = vmatpush.msra.mxu0 %v4162
          %4190 = vmatpush.msra.mxu0 %v4158
          %4191 = vmatpush.msra.mxu0 %v4154
          %4192 = vmatpush.msra.mxu0 %v4150
          %4193 = vmatpush.msra.mxu0 %v4146
          %4194 = vmatpush.msra.mxu0 %v4142
          %4195 = vmatpush.msra.mxu0 %v4138
          %4196 = vmatmul.f32.gmra.mxu0 %v3293
          %v4197 = vpop.f32.mrf.mxu0
          %v4198 = vadd.f32 %v4172, %v4197
          %4199 = vmatmul.f32.gmra.mxu0 %v3296
          %v4200 = vpop.f32.mrf.mxu0
          %v4201 = vadd.f32 %v4172, %v4200
          %4202 = vmatmul.f32.gmra.mxu0 %v3299
          %v4203 = vpop.f32.mrf.mxu0
          %v4204 = vadd.f32 %v4172, %v4203
          %4205 = vmatmul.f32.gmra.mxu0 %v3302
          %v4206 = vpop.f32.mrf.mxu0
          %v4207 = vadd.f32 %v4172, %v4206
          %4208 = vmatmul.f32.gmra.mxu0 %v3305
          %v4209 = vpop.f32.mrf.mxu0
          %v4210 = vadd.f32 %v4172, %v4209
          %4211 = vmatmul.f32.gmra.mxu0 %v3308
          %v4212 = vpop.f32.mrf.mxu0
          %v4213 = vadd.f32 %v4172, %v4212
          %4214 = vmatmul.f32.gmra.mxu0 %v3311
          %v4215 = vpop.f32.mrf.mxu0
          %v4216 = vadd.f32 %v4172, %v4215
          %4217 = vmatmul.f32.gmra.mxu0 %v3314
          %v4218 = vpop.f32.mrf.mxu0
          %v4219 = vadd.f32 %v4172, %v4218
          %4220 = vdwg.mxu0
          %4221 = vmatpush.msra.mxu0 0.0
          %4222 = vmatpush.msra.mxu0 0.0
          %4223 = vmatpush.msra.mxu0 0.0
          %4224 = vmatpush.msra.mxu0 0.0
          %4225 = vmatpush.msra.mxu0 0.0
          %4226 = vmatpush.msra.mxu0 0.0
          %4227 = vmatpush.msra.mxu0 0.0
          %4228 = vmatpush.msra.mxu0 0.0
          %4229 = vmatpush.msra.mxu0 %v4167
          %4230 = vmatpush.msra.mxu0 %v4163
          %4231 = vmatpush.msra.mxu0 %v4159
          %4232 = vmatpush.msra.mxu0 %v4155
          %4233 = vmatpush.msra.mxu0 %v4151
          %4234 = vmatpush.msra.mxu0 %v4147
          %4235 = vmatpush.msra.mxu0 %v4143
          %4236 = vmatpush.msra.mxu0 %v4139
          %4237 = vmatmul.f32.gmra.mxu0 %v3293
          %v4238 = vpop.f32.mrf.mxu0
          %v4239 = vadd.f32 %v4173, %v4238
          %4240 = vmatmul.f32.gmra.mxu0 %v3296
          %v4241 = vpop.f32.mrf.mxu0
          %v4242 = vadd.f32 %v4173, %v4241
          %4243 = vmatmul.f32.gmra.mxu0 %v3299
          %v4244 = vpop.f32.mrf.mxu0
          %v4245 = vadd.f32 %v4173, %v4244
          %4246 = vmatmul.f32.gmra.mxu0 %v3302
          %v4247 = vpop.f32.mrf.mxu0
          %v4248 = vadd.f32 %v4173, %v4247
          %4249 = vmatmul.f32.gmra.mxu0 %v3305
          %v4250 = vpop.f32.mrf.mxu0
          %v4251 = vadd.f32 %v4173, %v4250
          %4252 = vmatmul.f32.gmra.mxu0 %v3308
          %v4253 = vpop.f32.mrf.mxu0
          %v4254 = vadd.f32 %v4173, %v4253
          %4255 = vmatmul.f32.gmra.mxu0 %v3311
          %v4256 = vpop.f32.mrf.mxu0
          %v4257 = vadd.f32 %v4173, %v4256
          %4258 = vmatmul.f32.gmra.mxu0 %v3314
          %v4259 = vpop.f32.mrf.mxu0
          %v4260 = vadd.f32 %v4173, %v4259
          %4261 = vdwg.mxu0
          %4262 = vmatpush.msra.mxu0 0.0
          %4263 = vmatpush.msra.mxu0 0.0
          %4264 = vmatpush.msra.mxu0 0.0
          %4265 = vmatpush.msra.mxu0 0.0
          %4266 = vmatpush.msra.mxu0 0.0
          %4267 = vmatpush.msra.mxu0 0.0
          %4268 = vmatpush.msra.mxu0 0.0
          %4269 = vmatpush.msra.mxu0 0.0
          %4270 = vmatpush.msra.mxu0 %v4168
          %4271 = vmatpush.msra.mxu0 %v4164
          %4272 = vmatpush.msra.mxu0 %v4160
          %4273 = vmatpush.msra.mxu0 %v4156
          %4274 = vmatpush.msra.mxu0 %v4152
          %4275 = vmatpush.msra.mxu0 %v4148
          %4276 = vmatpush.msra.mxu0 %v4144
          %4277 = vmatpush.msra.mxu0 %v4140
          %4278 = vmatmul.f32.gmra.mxu0 %v3293
          %v4279 = vpop.f32.mrf.mxu0
          %v4280 = vadd.f32 %v4174, %v4279
          %4281 = vmatmul.f32.gmra.mxu0 %v3296
          %v4282 = vpop.f32.mrf.mxu0
          %v4283 = vadd.f32 %v4174, %v4282
          %4284 = vmatmul.f32.gmra.mxu0 %v3299
          %v4285 = vpop.f32.mrf.mxu0
          %v4286 = vadd.f32 %v4174, %v4285
          %4287 = vmatmul.f32.gmra.mxu0 %v3302
          %v4288 = vpop.f32.mrf.mxu0
          %v4289 = vadd.f32 %v4174, %v4288
          %4290 = vmatmul.f32.gmra.mxu0 %v3305
          %v4291 = vpop.f32.mrf.mxu0
          %v4292 = vadd.f32 %v4174, %v4291
          %4293 = vmatmul.f32.gmra.mxu0 %v3308
          %v4294 = vpop.f32.mrf.mxu0
          %v4295 = vadd.f32 %v4174, %v4294
          %4296 = vmatmul.f32.gmra.mxu0 %v3311
          %v4297 = vpop.f32.mrf.mxu0
          %v4298 = vadd.f32 %v4174, %v4297
          %4299 = vmatmul.f32.gmra.mxu0 %v3314
          %v4300 = vpop.f32.mrf.mxu0
          %v4301 = vadd.f32 %v4174, %v4300
          %4302 = vdwg.mxu0
          %4303 = vmatpush.msra.mxu0 0.0
          %4304 = vmatpush.msra.mxu0 0.0
          %4305 = vmatpush.msra.mxu0 0.0
          %4306 = vmatpush.msra.mxu0 0.0
          %4307 = vmatpush.msra.mxu0 0.0
          %4308 = vmatpush.msra.mxu0 0.0
          %4309 = vmatpush.msra.mxu0 0.0
          %4310 = vmatpush.msra.mxu0 0.0
          %4311 = vmatpush.msra.mxu0 %v4169
          %4312 = vmatpush.msra.mxu0 %v4165
          %4313 = vmatpush.msra.mxu0 %v4161
          %4314 = vmatpush.msra.mxu0 %v4157
          %4315 = vmatpush.msra.mxu0 %v4153
          %4316 = vmatpush.msra.mxu0 %v4149
          %4317 = vmatpush.msra.mxu0 %v4145
          %4318 = vmatpush.msra.mxu0 %v4141
          %4319 = vmatmul.f32.gmra.mxu0 %v3293
          %v4320 = vpop.f32.mrf.mxu0
          %v4321 = vadd.f32 %v4175, %v4320
          %4322 = vmatmul.f32.gmra.mxu0 %v3296
          %v4323 = vpop.f32.mrf.mxu0
          %v4324 = vadd.f32 %v4175, %v4323
          %4325 = vmatmul.f32.gmra.mxu0 %v3299
          %v4326 = vpop.f32.mrf.mxu0
          %v4327 = vadd.f32 %v4175, %v4326
          %4328 = vmatmul.f32.gmra.mxu0 %v3302
          %v4329 = vpop.f32.mrf.mxu0
          %v4330 = vadd.f32 %v4175, %v4329
          %4331 = vmatmul.f32.gmra.mxu0 %v3305
          %v4332 = vpop.f32.mrf.mxu0
          %v4333 = vadd.f32 %v4175, %v4332
          %4334 = vmatmul.f32.gmra.mxu0 %v3308
          %v4335 = vpop.f32.mrf.mxu0
          %v4336 = vadd.f32 %v4175, %v4335
          %4337 = vmatmul.f32.gmra.mxu0 %v3311
          %v4338 = vpop.f32.mrf.mxu0
          %v4339 = vadd.f32 %v4175, %v4338
          %4340 = vmatmul.f32.gmra.mxu0 %v3314
          %v4341 = vpop.f32.mrf.mxu0
          %v4342 = vadd.f32 %v4175, %v4341
          %4343 = vdwg.mxu0
          %v4344 = vmax.f32 %v4198, 0.0
          %v4345 = vmax.f32 %v4239, 0.0
          %v4346 = vmax.f32 %v4280, 0.0
          %v4347 = vmax.f32 %v4321, 0.0
          %v4348 = vmax.f32 %v4201, 0.0
          %v4349 = vmax.f32 %v4242, 0.0
          %v4350 = vmax.f32 %v4283, 0.0
          %v4351 = vmax.f32 %v4324, 0.0
          %v4352 = vmax.f32 %v4204, 0.0
          %v4353 = vmax.f32 %v4245, 0.0
          %v4354 = vmax.f32 %v4286, 0.0
          %v4355 = vmax.f32 %v4327, 0.0
          %v4356 = vmax.f32 %v4207, 0.0
          %v4357 = vmax.f32 %v4248, 0.0
          %v4358 = vmax.f32 %v4289, 0.0
          %v4359 = vmax.f32 %v4330, 0.0
          %v4360 = vmax.f32 %v4210, 0.0
          %v4361 = vmax.f32 %v4251, 0.0
          %v4362 = vmax.f32 %v4292, 0.0
          %v4363 = vmax.f32 %v4333, 0.0
          %v4364 = vmax.f32 %v4213, 0.0
          %v4365 = vmax.f32 %v4254, 0.0
          %v4366 = vmax.f32 %v4295, 0.0
          %v4367 = vmax.f32 %v4336, 0.0
          %v4368 = vmax.f32 %v4216, 0.0
          %v4369 = vmax.f32 %v4257, 0.0
          %v4370 = vmax.f32 %v4298, 0.0
          %v4371 = vmax.f32 %v4339, 0.0
          %v4372 = vmax.f32 %v4219, 0.0
          %v4373 = vmax.f32 %v4260, 0.0
          %v4374 = vmax.f32 %v4301, 0.0
          %v4375 = vmax.f32 %v4342, 0.0
          %v4376 = vpack.c.bf16 %v4348, %v4344
          %v4377 = vpack.c.bf16 %v4349, %v4345
          %v4378 = vpack.c.bf16 %v4350, %v4346
          %v4379 = vpack.c.bf16 %v4351, %v4347
          %v4380 = vpack.c.bf16 %v4356, %v4352
          %v4381 = vpack.c.bf16 %v4357, %v4353
          %v4382 = vpack.c.bf16 %v4358, %v4354
          %v4383 = vpack.c.bf16 %v4359, %v4355
          %v4384 = vpack.c.bf16 %v4364, %v4360
          %v4385 = vpack.c.bf16 %v4365, %v4361
          %v4386 = vpack.c.bf16 %v4366, %v4362
          %v4387 = vpack.c.bf16 %v4367, %v4363
          %v4388 = vpack.c.bf16 %v4372, %v4368
          %v4389 = vpack.c.bf16 %v4373, %v4369
          %v4390 = vpack.c.bf16 %v4374, %v4370
          %v4391 = vpack.c.bf16 %v4375, %v4371
          %v4392 = vld [vmem:[#allocation7] sm:$0xff]
          %v4393 = vld [vmem:[#allocation7 + $0x8] sm:$0xff]
          %v4394 = vld [vmem:[#allocation7 + $0x10] sm:$0xff]
          %v4395 = vld [vmem:[#allocation7 + $0x18] sm:$0xff]
          %v4396 = vld [vmem:[#allocation7 + $0x20] sm:$0xff]
          %v4397 = vld [vmem:[#allocation7 + $0x28] sm:$0xff]
          %v4398 = vld [vmem:[#allocation7 + $0x30] sm:$0xff]
          %v4399 = vld [vmem:[#allocation7 + $0x38] sm:$0xff]
          %v4400 = vld [vmem:[#allocation7 + $0x40] sm:$0xff]
          %v4401 = vld [vmem:[#allocation7 + $0x48] sm:$0xff]
          %v4402 = vld [vmem:[#allocation7 + $0x50] sm:$0xff]
          %v4403 = vld [vmem:[#allocation7 + $0x58] sm:$0xff]
          %v4404 = vld [vmem:[#allocation7 + $0x60] sm:$0xff]
          %v4405 = vld [vmem:[#allocation7 + $0x68] sm:$0xff]
          %v4406 = vld [vmem:[#allocation7 + $0x70] sm:$0xff]
          %v4407 = vld [vmem:[#allocation7 + $0x78] sm:$0xff]
          %v4408 = vld [vmem:[#allocation7 + $0x80] sm:$0xff]
          %v4409 = vld [vmem:[#allocation7 + $0x88] sm:$0xff]
          %v4410 = vld [vmem:[#allocation7 + $0x90] sm:$0xff]
          %v4411 = vld [vmem:[#allocation7 + $0x98] sm:$0xff]
          %v4412 = vld [vmem:[#allocation7 + $0xa0] sm:$0xff]
          %v4413 = vld [vmem:[#allocation7 + $0xa8] sm:$0xff]
          %v4414 = vld [vmem:[#allocation7 + $0xb0] sm:$0xff]
          %v4415 = vld [vmem:[#allocation7 + $0xb8] sm:$0xff]
          %v4416 = vld [vmem:[#allocation7 + $0xc0] sm:$0xff]
          %v4417 = vld [vmem:[#allocation7 + $0xc8] sm:$0xff]
          %v4418 = vld [vmem:[#allocation7 + $0xd0] sm:$0xff]
          %v4419 = vld [vmem:[#allocation7 + $0xd8] sm:$0xff]
          %v4420 = vld [vmem:[#allocation7 + $0xe0] sm:$0xff]
          %v4421 = vld [vmem:[#allocation7 + $0xe8] sm:$0xff]
          %v4422 = vld [vmem:[#allocation7 + $0xf0] sm:$0xff]
          %v4423 = vld [vmem:[#allocation7 + $0xf8] sm:$0xff]
          %v4424 = vld [vmem:[#allocation7 + $0x100] sm:$0xff]
          %v4425 = vld [vmem:[#allocation7 + $0x108] sm:$0xff]
          %v4426 = vld [vmem:[#allocation7 + $0x110] sm:$0xff]
          %v4427 = vld [vmem:[#allocation7 + $0x118] sm:$0xff]
          %v4428 = vld [vmem:[#allocation7 + $0x120] sm:$0xff]
          %v4429 = vld [vmem:[#allocation7 + $0x128] sm:$0xff]
          %v4430 = vld [vmem:[#allocation7 + $0x130] sm:$0xff]
          %v4431 = vld [vmem:[#allocation7 + $0x138] sm:$0xff]
          %v4432 = vld [vmem:[#allocation7 + $0x140] sm:$0xff]
          %v4433 = vld [vmem:[#allocation7 + $0x148] sm:$0xff]
          %v4434 = vld [vmem:[#allocation7 + $0x150] sm:$0xff]
          %v4435 = vld [vmem:[#allocation7 + $0x158] sm:$0xff]
          %v4436 = vld [vmem:[#allocation7 + $0x160] sm:$0xff]
          %v4437 = vld [vmem:[#allocation7 + $0x168] sm:$0xff]
          %v4438 = vld [vmem:[#allocation7 + $0x170] sm:$0xff]
          %v4439 = vld [vmem:[#allocation7 + $0x178] sm:$0xff]
          %v4440 = vld [vmem:[#allocation7 + $0x180] sm:$0xff]
          %v4441 = vld [vmem:[#allocation7 + $0x188] sm:$0xff]
          %v4442 = vld [vmem:[#allocation7 + $0x190] sm:$0xff]
          %v4443 = vld [vmem:[#allocation7 + $0x198] sm:$0xff]
          %v4444 = vld [vmem:[#allocation7 + $0x1a0] sm:$0xff]
          %v4445 = vld [vmem:[#allocation7 + $0x1a8] sm:$0xff]
          %v4446 = vld [vmem:[#allocation7 + $0x1b0] sm:$0xff]
          %v4447 = vld [vmem:[#allocation7 + $0x1b8] sm:$0xff]
          %v4448 = vld [vmem:[#allocation7 + $0x1c0] sm:$0xff]
          %v4449 = vld [vmem:[#allocation7 + $0x1c8] sm:$0xff]
          %v4450 = vld [vmem:[#allocation7 + $0x1d0] sm:$0xff]
          %v4451 = vld [vmem:[#allocation7 + $0x1d8] sm:$0xff]
          %v4452 = vld [vmem:[#allocation7 + $0x1e0] sm:$0xff]
          %v4453 = vld [vmem:[#allocation7 + $0x1e8] sm:$0xff]
          %v4454 = vld [vmem:[#allocation7 + $0x1f0] sm:$0xff]
          %v4455 = vld [vmem:[#allocation7 + $0x1f8] sm:$0xff]
          %v4520 = vunpack.c.l.b16 %v4392
          %v4521 = vunpack.c.h.b16 %v4392
          %v4522 = vunpack.c.l.b16 %v4393
          %v4523 = vunpack.c.h.b16 %v4393
          %v4524 = vunpack.c.l.b16 %v4394
          %v4525 = vunpack.c.h.b16 %v4394
          %v4526 = vunpack.c.l.b16 %v4395
          %v4527 = vunpack.c.h.b16 %v4395
          %v4528 = vunpack.c.l.b16 %v4396
          %v4529 = vunpack.c.h.b16 %v4396
          %v4530 = vunpack.c.l.b16 %v4397
          %v4531 = vunpack.c.h.b16 %v4397
          %v4532 = vunpack.c.l.b16 %v4398
          %v4533 = vunpack.c.h.b16 %v4398
          %v4534 = vunpack.c.l.b16 %v4399
          %v4535 = vunpack.c.h.b16 %v4399
          %v4536 = vunpack.c.l.b16 %v4400
          %v4537 = vunpack.c.h.b16 %v4400
          %v4538 = vunpack.c.l.b16 %v4401
          %v4539 = vunpack.c.h.b16 %v4401
          %v4540 = vunpack.c.l.b16 %v4402
          %v4541 = vunpack.c.h.b16 %v4402
          %v4542 = vunpack.c.l.b16 %v4403
          %v4543 = vunpack.c.h.b16 %v4403
          %v4544 = vunpack.c.l.b16 %v4404
          %v4545 = vunpack.c.h.b16 %v4404
          %v4546 = vunpack.c.l.b16 %v4405
          %v4547 = vunpack.c.h.b16 %v4405
          %v4548 = vunpack.c.l.b16 %v4406
          %v4549 = vunpack.c.h.b16 %v4406
          %v4550 = vunpack.c.l.b16 %v4407
          %v4551 = vunpack.c.h.b16 %v4407
          %v4552 = vunpack.c.l.b16 %v4408
          %v4553 = vunpack.c.h.b16 %v4408
          %v4554 = vunpack.c.l.b16 %v4409
          %v4555 = vunpack.c.h.b16 %v4409
          %v4556 = vunpack.c.l.b16 %v4410
          %v4557 = vunpack.c.h.b16 %v4410
          %v4558 = vunpack.c.l.b16 %v4411
          %v4559 = vunpack.c.h.b16 %v4411
          %v4560 = vunpack.c.l.b16 %v4412
          %v4561 = vunpack.c.h.b16 %v4412
          %v4562 = vunpack.c.l.b16 %v4413
          %v4563 = vunpack.c.h.b16 %v4413
          %v4564 = vunpack.c.l.b16 %v4414
          %v4565 = vunpack.c.h.b16 %v4414
          %v4566 = vunpack.c.l.b16 %v4415
          %v4567 = vunpack.c.h.b16 %v4415
          %v4568 = vunpack.c.l.b16 %v4416
          %v4569 = vunpack.c.h.b16 %v4416
          %v4570 = vunpack.c.l.b16 %v4417
          %v4571 = vunpack.c.h.b16 %v4417
          %v4572 = vunpack.c.l.b16 %v4418
          %v4573 = vunpack.c.h.b16 %v4418
          %v4574 = vunpack.c.l.b16 %v4419
          %v4575 = vunpack.c.h.b16 %v4419
          %v4576 = vunpack.c.l.b16 %v4420
          %v4577 = vunpack.c.h.b16 %v4420
          %v4578 = vunpack.c.l.b16 %v4421
          %v4579 = vunpack.c.h.b16 %v4421
          %v4580 = vunpack.c.l.b16 %v4422
          %v4581 = vunpack.c.h.b16 %v4422
          %v4582 = vunpack.c.l.b16 %v4423
          %v4583 = vunpack.c.h.b16 %v4423
          %v4584 = vunpack.c.l.b16 %v4424
          %v4585 = vunpack.c.h.b16 %v4424
          %v4586 = vunpack.c.l.b16 %v4425
          %v4587 = vunpack.c.h.b16 %v4425
          %v4588 = vunpack.c.l.b16 %v4426
          %v4589 = vunpack.c.h.b16 %v4426
          %v4590 = vunpack.c.l.b16 %v4427
          %v4591 = vunpack.c.h.b16 %v4427
          %v4592 = vunpack.c.l.b16 %v4428
          %v4593 = vunpack.c.h.b16 %v4428
          %v4594 = vunpack.c.l.b16 %v4429
          %v4595 = vunpack.c.h.b16 %v4429
          %v4596 = vunpack.c.l.b16 %v4430
          %v4597 = vunpack.c.h.b16 %v4430
          %v4598 = vunpack.c.l.b16 %v4431
          %v4599 = vunpack.c.h.b16 %v4431
          %v4600 = vunpack.c.l.b16 %v4432
          %v4601 = vunpack.c.h.b16 %v4432
          %v4602 = vunpack.c.l.b16 %v4433
          %v4603 = vunpack.c.h.b16 %v4433
          %v4604 = vunpack.c.l.b16 %v4434
          %v4605 = vunpack.c.h.b16 %v4434
          %v4606 = vunpack.c.l.b16 %v4435
          %v4607 = vunpack.c.h.b16 %v4435
          %v4608 = vunpack.c.l.b16 %v4436
          %v4609 = vunpack.c.h.b16 %v4436
          %v4610 = vunpack.c.l.b16 %v4437
          %v4611 = vunpack.c.h.b16 %v4437
          %v4612 = vunpack.c.l.b16 %v4438
          %v4613 = vunpack.c.h.b16 %v4438
          %v4614 = vunpack.c.l.b16 %v4439
          %v4615 = vunpack.c.h.b16 %v4439
          %v4616 = vunpack.c.l.b16 %v4440
          %v4617 = vunpack.c.h.b16 %v4440
          %v4618 = vunpack.c.l.b16 %v4441
          %v4619 = vunpack.c.h.b16 %v4441
          %v4620 = vunpack.c.l.b16 %v4442
          %v4621 = vunpack.c.h.b16 %v4442
          %v4622 = vunpack.c.l.b16 %v4443
          %v4623 = vunpack.c.h.b16 %v4443
          %v4624 = vunpack.c.l.b16 %v4444
          %v4625 = vunpack.c.h.b16 %v4444
          %v4626 = vunpack.c.l.b16 %v4445
          %v4627 = vunpack.c.h.b16 %v4445
          %v4628 = vunpack.c.l.b16 %v4446
          %v4629 = vunpack.c.h.b16 %v4446
          %v4630 = vunpack.c.l.b16 %v4447
          %v4631 = vunpack.c.h.b16 %v4447
          %v4632 = vunpack.c.l.b16 %v4448
          %v4633 = vunpack.c.h.b16 %v4448
          %v4634 = vunpack.c.l.b16 %v4449
          %v4635 = vunpack.c.h.b16 %v4449
          %v4636 = vunpack.c.l.b16 %v4450
          %v4637 = vunpack.c.h.b16 %v4450
          %v4638 = vunpack.c.l.b16 %v4451
          %v4639 = vunpack.c.h.b16 %v4451
          %v4640 = vunpack.c.l.b16 %v4452
          %v4641 = vunpack.c.h.b16 %v4452
          %v4642 = vunpack.c.l.b16 %v4453
          %v4643 = vunpack.c.h.b16 %v4453
          %v4644 = vunpack.c.l.b16 %v4454
          %v4645 = vunpack.c.h.b16 %v4454
          %v4646 = vunpack.c.l.b16 %v4455
          %v4647 = vunpack.c.h.b16 %v4455
          %v4648 = vpack.c.b16 %v4522, %v4520
          %v4649 = vpack.c.b16 %v4523, %v4521
          %v4650 = vpack.c.b16 %v4526, %v4524
          %v4651 = vpack.c.b16 %v4527, %v4525
          %v4652 = vpack.c.b16 %v4530, %v4528
          %v4653 = vpack.c.b16 %v4531, %v4529
          %v4654 = vpack.c.b16 %v4534, %v4532
          %v4655 = vpack.c.b16 %v4535, %v4533
          %v4656 = vpack.c.b16 %v4538, %v4536
          %v4657 = vpack.c.b16 %v4539, %v4537
          %v4658 = vpack.c.b16 %v4542, %v4540
          %v4659 = vpack.c.b16 %v4543, %v4541
          %v4660 = vpack.c.b16 %v4546, %v4544
          %v4661 = vpack.c.b16 %v4547, %v4545
          %v4662 = vpack.c.b16 %v4550, %v4548
          %v4663 = vpack.c.b16 %v4551, %v4549
          %v4664 = vpack.c.b16 %v4554, %v4552
          %v4665 = vpack.c.b16 %v4555, %v4553
          %v4666 = vpack.c.b16 %v4558, %v4556
          %v4667 = vpack.c.b16 %v4559, %v4557
          %v4668 = vpack.c.b16 %v4562, %v4560
          %v4669 = vpack.c.b16 %v4563, %v4561
          %v4670 = vpack.c.b16 %v4566, %v4564
          %v4671 = vpack.c.b16 %v4567, %v4565
          %v4672 = vpack.c.b16 %v4570, %v4568
          %v4673 = vpack.c.b16 %v4571, %v4569
          %v4674 = vpack.c.b16 %v4574, %v4572
          %v4675 = vpack.c.b16 %v4575, %v4573
          %v4676 = vpack.c.b16 %v4578, %v4576
          %v4677 = vpack.c.b16 %v4579, %v4577
          %v4678 = vpack.c.b16 %v4582, %v4580
          %v4679 = vpack.c.b16 %v4583, %v4581
          %v4680 = vpack.c.b16 %v4586, %v4584
          %v4681 = vpack.c.b16 %v4587, %v4585
          %v4682 = vpack.c.b16 %v4590, %v4588
          %v4683 = vpack.c.b16 %v4591, %v4589
          %v4684 = vpack.c.b16 %v4594, %v4592
          %v4685 = vpack.c.b16 %v4595, %v4593
          %v4686 = vpack.c.b16 %v4598, %v4596
          %v4687 = vpack.c.b16 %v4599, %v4597
          %v4688 = vpack.c.b16 %v4602, %v4600
          %v4689 = vpack.c.b16 %v4603, %v4601
          %v4690 = vpack.c.b16 %v4606, %v4604
          %v4691 = vpack.c.b16 %v4607, %v4605
          %v4692 = vpack.c.b16 %v4610, %v4608
          %v4693 = vpack.c.b16 %v4611, %v4609
          %v4694 = vpack.c.b16 %v4614, %v4612
          %v4695 = vpack.c.b16 %v4615, %v4613
          %v4696 = vpack.c.b16 %v4618, %v4616
          %v4697 = vpack.c.b16 %v4619, %v4617
          %v4698 = vpack.c.b16 %v4622, %v4620
          %v4699 = vpack.c.b16 %v4623, %v4621
          %v4700 = vpack.c.b16 %v4626, %v4624
          %v4701 = vpack.c.b16 %v4627, %v4625
          %v4702 = vpack.c.b16 %v4630, %v4628
          %v4703 = vpack.c.b16 %v4631, %v4629
          %v4704 = vpack.c.b16 %v4634, %v4632
          %v4705 = vpack.c.b16 %v4635, %v4633
          %v4706 = vpack.c.b16 %v4638, %v4636
          %v4707 = vpack.c.b16 %v4639, %v4637
          %v4708 = vpack.c.b16 %v4642, %v4640
          %v4709 = vpack.c.b16 %v4643, %v4641
          %v4710 = vpack.c.b16 %v4646, %v4644
          %v4711 = vpack.c.b16 %v4647, %v4645
          %4776 = vmatpush.bf16.msra.mxu0 %v4662
          %4777 = vmatpush.bf16.msra.mxu0 %v4660
          %4778 = vmatpush.bf16.msra.mxu0 %v4658
          %4779 = vmatpush.bf16.msra.mxu0 %v4656
          %4780 = vmatpush.bf16.msra.mxu0 %v4654
          %4781 = vmatpush.bf16.msra.mxu0 %v4652
          %4782 = vmatpush.bf16.msra.mxu0 %v4650
          %4783 = vmatpush.bf16.msra.mxu0 %v4648
          %4784 = vmatmul.bf16.gmra.mxu0 %v4376
          %v4785 = vpop.f32.mrf.mxu0
          %v4786 = vadd.f32 0.0, %v4785
          %v4787 = vpop.f32.mrf.mxu0
          %v4788 = vadd.f32 0.0, %v4787
          %4789 = vmatmul.bf16.gmra.mxu0 %v4380
          %v4790 = vpop.f32.mrf.mxu0
          %v4791 = vadd.f32 0.0, %v4790
          %v4792 = vpop.f32.mrf.mxu0
          %v4793 = vadd.f32 0.0, %v4792
          %4794 = vmatmul.bf16.gmra.mxu0 %v4384
          %v4795 = vpop.f32.mrf.mxu0
          %v4796 = vadd.f32 0.0, %v4795
          %v4797 = vpop.f32.mrf.mxu0
          %v4798 = vadd.f32 0.0, %v4797
          %4799 = vmatmul.bf16.gmra.mxu0 %v4388
          %v4800 = vpop.f32.mrf.mxu0
          %v4801 = vadd.f32 0.0, %v4800
          %v4802 = vpop.f32.mrf.mxu0
          %v4803 = vadd.f32 0.0, %v4802
          %4804 = vdwg.mxu0
          %4805 = vmatpush.bf16.msra.mxu0 %v4678
          %4806 = vmatpush.bf16.msra.mxu0 %v4676
          %4807 = vmatpush.bf16.msra.mxu0 %v4674
          %4808 = vmatpush.bf16.msra.mxu0 %v4672
          %4809 = vmatpush.bf16.msra.mxu0 %v4670
          %4810 = vmatpush.bf16.msra.mxu0 %v4668
          %4811 = vmatpush.bf16.msra.mxu0 %v4666
          %4812 = vmatpush.bf16.msra.mxu0 %v4664
          %4813 = vmatmul.bf16.gmra.mxu0 %v4377
          %v4814 = vpop.f32.mrf.mxu0
          %v4815 = vadd.f32 %v4786, %v4814
          %v4816 = vpop.f32.mrf.mxu0
          %v4817 = vadd.f32 %v4788, %v4816
          %4818 = vmatmul.bf16.gmra.mxu0 %v4381
          %v4819 = vpop.f32.mrf.mxu0
          %v4820 = vadd.f32 %v4791, %v4819
          %v4821 = vpop.f32.mrf.mxu0
          %v4822 = vadd.f32 %v4793, %v4821
          %4823 = vmatmul.bf16.gmra.mxu0 %v4385
          %v4824 = vpop.f32.mrf.mxu0
          %v4825 = vadd.f32 %v4796, %v4824
          %v4826 = vpop.f32.mrf.mxu0
          %v4827 = vadd.f32 %v4798, %v4826
          %4828 = vmatmul.bf16.gmra.mxu0 %v4389
          %v4829 = vpop.f32.mrf.mxu0
          %v4830 = vadd.f32 %v4801, %v4829
          %v4831 = vpop.f32.mrf.mxu0
          %v4832 = vadd.f32 %v4803, %v4831
          %4833 = vdwg.mxu0
          %4834 = vmatpush.bf16.msra.mxu0 %v4694
          %4835 = vmatpush.bf16.msra.mxu0 %v4692
          %4836 = vmatpush.bf16.msra.mxu0 %v4690
          %4837 = vmatpush.bf16.msra.mxu0 %v4688
          %4838 = vmatpush.bf16.msra.mxu0 %v4686
          %4839 = vmatpush.bf16.msra.mxu0 %v4684
          %4840 = vmatpush.bf16.msra.mxu0 %v4682
          %4841 = vmatpush.bf16.msra.mxu0 %v4680
          %4842 = vmatmul.bf16.gmra.mxu0 %v4378
          %v4843 = vpop.f32.mrf.mxu0
          %v4844 = vadd.f32 %v4815, %v4843
          %v4845 = vpop.f32.mrf.mxu0
          %v4846 = vadd.f32 %v4817, %v4845
          %4847 = vmatmul.bf16.gmra.mxu0 %v4382
          %v4848 = vpop.f32.mrf.mxu0
          %v4849 = vadd.f32 %v4820, %v4848
          %v4850 = vpop.f32.mrf.mxu0
          %v4851 = vadd.f32 %v4822, %v4850
          %4852 = vmatmul.bf16.gmra.mxu0 %v4386
          %v4853 = vpop.f32.mrf.mxu0
          %v4854 = vadd.f32 %v4825, %v4853
          %v4855 = vpop.f32.mrf.mxu0
          %v4856 = vadd.f32 %v4827, %v4855
          %4857 = vmatmul.bf16.gmra.mxu0 %v4390
          %v4858 = vpop.f32.mrf.mxu0
          %v4859 = vadd.f32 %v4830, %v4858
          %v4860 = vpop.f32.mrf.mxu0
          %v4861 = vadd.f32 %v4832, %v4860
          %4862 = vdwg.mxu0
          %4863 = vmatpush.bf16.msra.mxu0 %v4710
          %4864 = vmatpush.bf16.msra.mxu0 %v4708
          %4865 = vmatpush.bf16.msra.mxu0 %v4706
          %4866 = vmatpush.bf16.msra.mxu0 %v4704
          %4867 = vmatpush.bf16.msra.mxu0 %v4702
          %4868 = vmatpush.bf16.msra.mxu0 %v4700
          %4869 = vmatpush.bf16.msra.mxu0 %v4698
          %4870 = vmatpush.bf16.msra.mxu0 %v4696
          %4871 = vmatmul.bf16.gmra.mxu0 %v4379
          %v4872 = vpop.f32.mrf.mxu0
          %v4873 = vadd.f32 %v4844, %v4872
          %v4874 = vpop.f32.mrf.mxu0
          %v4875 = vadd.f32 %v4846, %v4874
          %4876 = vmatmul.bf16.gmra.mxu0 %v4383
          %v4877 = vpop.f32.mrf.mxu0
          %v4878 = vadd.f32 %v4849, %v4877
          %v4879 = vpop.f32.mrf.mxu0
          %v4880 = vadd.f32 %v4851, %v4879
          %4881 = vmatmul.bf16.gmra.mxu0 %v4387
          %v4882 = vpop.f32.mrf.mxu0
          %v4883 = vadd.f32 %v4854, %v4882
          %v4884 = vpop.f32.mrf.mxu0
          %v4885 = vadd.f32 %v4856, %v4884
          %4886 = vmatmul.bf16.gmra.mxu0 %v4391
          %v4887 = vpop.f32.mrf.mxu0
          %v4888 = vadd.f32 %v4859, %v4887
          %v4889 = vpop.f32.mrf.mxu0
          %v4890 = vadd.f32 %v4861, %v4889
          %4891 = vdwg.mxu0
          %4892 = vmatpush.bf16.msra.mxu0 %v4663
          %4893 = vmatpush.bf16.msra.mxu0 %v4661
          %4894 = vmatpush.bf16.msra.mxu0 %v4659
          %4895 = vmatpush.bf16.msra.mxu0 %v4657
          %4896 = vmatpush.bf16.msra.mxu0 %v4655
          %4897 = vmatpush.bf16.msra.mxu0 %v4653
          %4898 = vmatpush.bf16.msra.mxu0 %v4651
          %4899 = vmatpush.bf16.msra.mxu0 %v4649
          %4900 = vmatmul.bf16.gmra.mxu0 %v4376
          %v4901 = vpop.f32.mrf.mxu0
          %v4902 = vadd.f32 0.0, %v4901
          %v4903 = vpop.f32.mrf.mxu0
          %v4904 = vadd.f32 0.0, %v4903
          %4905 = vmatmul.bf16.gmra.mxu0 %v4380
          %v4906 = vpop.f32.mrf.mxu0
          %v4907 = vadd.f32 0.0, %v4906
          %v4908 = vpop.f32.mrf.mxu0
          %v4909 = vadd.f32 0.0, %v4908
          %4910 = vmatmul.bf16.gmra.mxu0 %v4384
          %v4911 = vpop.f32.mrf.mxu0
          %v4912 = vadd.f32 0.0, %v4911
          %v4913 = vpop.f32.mrf.mxu0
          %v4914 = vadd.f32 0.0, %v4913
          %4915 = vmatmul.bf16.gmra.mxu0 %v4388
          %v4916 = vpop.f32.mrf.mxu0
          %v4917 = vadd.f32 0.0, %v4916
          %v4918 = vpop.f32.mrf.mxu0
          %v4919 = vadd.f32 0.0, %v4918
          %4920 = vdwg.mxu0
          %4921 = vmatpush.bf16.msra.mxu0 %v4679
          %4922 = vmatpush.bf16.msra.mxu0 %v4677
          %4923 = vmatpush.bf16.msra.mxu0 %v4675
          %4924 = vmatpush.bf16.msra.mxu0 %v4673
          %4925 = vmatpush.bf16.msra.mxu0 %v4671
          %4926 = vmatpush.bf16.msra.mxu0 %v4669
          %4927 = vmatpush.bf16.msra.mxu0 %v4667
          %4928 = vmatpush.bf16.msra.mxu0 %v4665
          %4929 = vmatmul.bf16.gmra.mxu0 %v4377
          %v4930 = vpop.f32.mrf.mxu0
          %v4931 = vadd.f32 %v4902, %v4930
          %v4932 = vpop.f32.mrf.mxu0
          %v4933 = vadd.f32 %v4904, %v4932
          %4934 = vmatmul.bf16.gmra.mxu0 %v4381
          %v4935 = vpop.f32.mrf.mxu0
          %v4936 = vadd.f32 %v4907, %v4935
          %v4937 = vpop.f32.mrf.mxu0
          %v4938 = vadd.f32 %v4909, %v4937
          %4939 = vmatmul.bf16.gmra.mxu0 %v4385
          %v4940 = vpop.f32.mrf.mxu0
          %v4941 = vadd.f32 %v4912, %v4940
          %v4942 = vpop.f32.mrf.mxu0
          %v4943 = vadd.f32 %v4914, %v4942
          %4944 = vmatmul.bf16.gmra.mxu0 %v4389
          %v4945 = vpop.f32.mrf.mxu0
          %v4946 = vadd.f32 %v4917, %v4945
          %v4947 = vpop.f32.mrf.mxu0
          %v4948 = vadd.f32 %v4919, %v4947
          %4949 = vdwg.mxu0
          %4950 = vmatpush.bf16.msra.mxu0 %v4695
          %4951 = vmatpush.bf16.msra.mxu0 %v4693
          %4952 = vmatpush.bf16.msra.mxu0 %v4691
          %4953 = vmatpush.bf16.msra.mxu0 %v4689
          %4954 = vmatpush.bf16.msra.mxu0 %v4687
          %4955 = vmatpush.bf16.msra.mxu0 %v4685
          %4956 = vmatpush.bf16.msra.mxu0 %v4683
          %4957 = vmatpush.bf16.msra.mxu0 %v4681
          %4958 = vmatmul.bf16.gmra.mxu0 %v4378
          %v4959 = vpop.f32.mrf.mxu0
          %v4960 = vadd.f32 %v4931, %v4959
          %v4961 = vpop.f32.mrf.mxu0
          %v4962 = vadd.f32 %v4933, %v4961
          %4963 = vmatmul.bf16.gmra.mxu0 %v4382
          %v4964 = vpop.f32.mrf.mxu0
          %v4965 = vadd.f32 %v4936, %v4964
          %v4966 = vpop.f32.mrf.mxu0
          %v4967 = vadd.f32 %v4938, %v4966
          %4968 = vmatmul.bf16.gmra.mxu0 %v4386
          %v4969 = vpop.f32.mrf.mxu0
          %v4970 = vadd.f32 %v4941, %v4969
          %v4971 = vpop.f32.mrf.mxu0
          %v4972 = vadd.f32 %v4943, %v4971
          %4973 = vmatmul.bf16.gmra.mxu0 %v4390
          %v4974 = vpop.f32.mrf.mxu0
          %v4975 = vadd.f32 %v4946, %v4974
          %v4976 = vpop.f32.mrf.mxu0
          %v4977 = vadd.f32 %v4948, %v4976
          %4978 = vdwg.mxu0
          %4979 = vmatpush.bf16.msra.mxu0 %v4711
          %4980 = vmatpush.bf16.msra.mxu0 %v4709
          %4981 = vmatpush.bf16.msra.mxu0 %v4707
          %4982 = vmatpush.bf16.msra.mxu0 %v4705
          %4983 = vmatpush.bf16.msra.mxu0 %v4703
          %4984 = vmatpush.bf16.msra.mxu0 %v4701
          %4985 = vmatpush.bf16.msra.mxu0 %v4699
          %4986 = vmatpush.bf16.msra.mxu0 %v4697
          %4987 = vmatmul.bf16.gmra.mxu0 %v4379
          %v4988 = vpop.f32.mrf.mxu0
          %v4989 = vadd.f32 %v4960, %v4988
          %v4990 = vpop.f32.mrf.mxu0
          %v4991 = vadd.f32 %v4962, %v4990
          %4992 = vmatmul.bf16.gmra.mxu0 %v4383
          %v4993 = vpop.f32.mrf.mxu0
          %v4994 = vadd.f32 %v4965, %v4993
          %v4995 = vpop.f32.mrf.mxu0
          %v4996 = vadd.f32 %v4967, %v4995
          %4997 = vmatmul.bf16.gmra.mxu0 %v4387
          %v4998 = vpop.f32.mrf.mxu0
          %v4999 = vadd.f32 %v4970, %v4998
          %v5000 = vpop.f32.mrf.mxu0
          %v5001 = vadd.f32 %v4972, %v5000
          %5002 = vmatmul.bf16.gmra.mxu0 %v4391
          %v5003 = vpop.f32.mrf.mxu0
          %v5004 = vadd.f32 %v4975, %v5003
          %v5005 = vpop.f32.mrf.mxu0
          %v5006 = vadd.f32 %v4977, %v5005
          %5007 = vdwg.mxu0
          %v5008 = vld [vmem:[%s7] sm:$0x3]
          %v5010 = vperm.slane %v5008, 0
          %v5011 = vperm.slane %v5008, 1
          %5014 = vmatpush.msra.mxu0 0.0
          %5015 = vmatpush.msra.mxu0 0.0
          %5016 = vmatpush.msra.mxu0 0.0
          %5017 = vmatpush.msra.mxu0 0.0
          %5018 = vmatpush.msra.mxu0 0.0
          %5019 = vmatpush.msra.mxu0 0.0
          %5020 = vmatpush.msra.mxu0 0.0
          %5021 = vmatpush.msra.mxu0 0.0
          %5022 = vmatpush.msra.mxu0 %v4890
          %5023 = vmatpush.msra.mxu0 %v4888
          %5024 = vmatpush.msra.mxu0 %v4885
          %5025 = vmatpush.msra.mxu0 %v4883
          %5026 = vmatpush.msra.mxu0 %v4880
          %5027 = vmatpush.msra.mxu0 %v4878
          %5028 = vmatpush.msra.mxu0 %v4875
          %5029 = vmatpush.msra.mxu0 %v4873
          %5030 = vmatmul.f32.gmra.mxu0 %v3293
          %v5031 = vpop.f32.mrf.mxu0
          %v5032 = vadd.f32 %v5010, %v5031
          %5033 = vmatmul.f32.gmra.mxu0 %v3296
          %v5034 = vpop.f32.mrf.mxu0
          %v5035 = vadd.f32 %v5010, %v5034
          %5036 = vmatmul.f32.gmra.mxu0 %v3299
          %v5037 = vpop.f32.mrf.mxu0
          %v5038 = vadd.f32 %v5010, %v5037
          %5039 = vmatmul.f32.gmra.mxu0 %v3302
          %v5040 = vpop.f32.mrf.mxu0
          %v5041 = vadd.f32 %v5010, %v5040
          %5042 = vmatmul.f32.gmra.mxu0 %v3305
          %v5043 = vpop.f32.mrf.mxu0
          %v5044 = vadd.f32 %v5010, %v5043
          %5045 = vmatmul.f32.gmra.mxu0 %v3308
          %v5046 = vpop.f32.mrf.mxu0
          %v5047 = vadd.f32 %v5010, %v5046
          %5048 = vmatmul.f32.gmra.mxu0 %v3311
          %v5049 = vpop.f32.mrf.mxu0
          %v5050 = vadd.f32 %v5010, %v5049
          %5051 = vmatmul.f32.gmra.mxu0 %v3314
          %v5052 = vpop.f32.mrf.mxu0
          %v5053 = vadd.f32 %v5010, %v5052
          %5054 = vdwg.mxu0
          %5055 = vmatpush.msra.mxu0 0.0
          %5056 = vmatpush.msra.mxu0 0.0
          %5057 = vmatpush.msra.mxu0 0.0
          %5058 = vmatpush.msra.mxu0 0.0
          %5059 = vmatpush.msra.mxu0 0.0
          %5060 = vmatpush.msra.mxu0 0.0
          %5061 = vmatpush.msra.mxu0 0.0
          %5062 = vmatpush.msra.mxu0 0.0
          %5063 = vmatpush.msra.mxu0 %v5006
          %5064 = vmatpush.msra.mxu0 %v5004
          %5065 = vmatpush.msra.mxu0 %v5001
          %5066 = vmatpush.msra.mxu0 %v4999
          %5067 = vmatpush.msra.mxu0 %v4996
          %5068 = vmatpush.msra.mxu0 %v4994
          %5069 = vmatpush.msra.mxu0 %v4991
          %5070 = vmatpush.msra.mxu0 %v4989
          %5071 = vmatmul.f32.gmra.mxu0 %v3293
          %v5072 = vpop.f32.mrf.mxu0
          %v5073 = vadd.f32 %v5011, %v5072
          %5074 = vmatmul.f32.gmra.mxu0 %v3296
          %v5075 = vpop.f32.mrf.mxu0
          %v5076 = vadd.f32 %v5011, %v5075
          %5077 = vmatmul.f32.gmra.mxu0 %v3299
          %v5078 = vpop.f32.mrf.mxu0
          %v5079 = vadd.f32 %v5011, %v5078
          %5080 = vmatmul.f32.gmra.mxu0 %v3302
          %v5081 = vpop.f32.mrf.mxu0
          %v5082 = vadd.f32 %v5011, %v5081
          %5083 = vmatmul.f32.gmra.mxu0 %v3305
          %v5084 = vpop.f32.mrf.mxu0
          %v5085 = vadd.f32 %v5011, %v5084
          %5086 = vmatmul.f32.gmra.mxu0 %v3308
          %v5087 = vpop.f32.mrf.mxu0
          %v5088 = vadd.f32 %v5011, %v5087
          %5089 = vmatmul.f32.gmra.mxu0 %v3311
          %v5090 = vpop.f32.mrf.mxu0
          %v5091 = vadd.f32 %v5011, %v5090
          %5092 = vmatmul.f32.gmra.mxu0 %v3314
          %v5093 = vpop.f32.mrf.mxu0
          %v5094 = vadd.f32 %v5011, %v5093
          %5095 = vdwg.mxu0
          %v5096 = vmax.f32 %v5032, 0.0
          %v5097 = vmax.f32 %v5073, 0.0
          %v5098 = vmax.f32 %v5035, 0.0
          %v5099 = vmax.f32 %v5076, 0.0
          %v5100 = vmax.f32 %v5038, 0.0
          %v5101 = vmax.f32 %v5079, 0.0
          %v5102 = vmax.f32 %v5041, 0.0
          %v5103 = vmax.f32 %v5082, 0.0
          %v5104 = vmax.f32 %v5044, 0.0
          %v5105 = vmax.f32 %v5085, 0.0
          %v5106 = vmax.f32 %v5047, 0.0
          %v5107 = vmax.f32 %v5088, 0.0
          %v5108 = vmax.f32 %v5050, 0.0
          %v5109 = vmax.f32 %v5091, 0.0
          %v5110 = vmax.f32 %v5053, 0.0
          %v5111 = vmax.f32 %v5094, 0.0
          %v5112 = vpack.c.bf16 %v5098, %v5096
          %v5113 = vpack.c.bf16 %v5099, %v5097
          %v5114 = vpack.c.bf16 %v5102, %v5100
          %v5115 = vpack.c.bf16 %v5103, %v5101
          %v5116 = vpack.c.bf16 %v5106, %v5104
          %v5117 = vpack.c.bf16 %v5107, %v5105
          %v5118 = vpack.c.bf16 %v5110, %v5108
          %v5119 = vpack.c.bf16 %v5111, %v5109
          %v5120 = vld [vmem:[#allocation9] sm:$0xf]
          %v5121 = vld [vmem:[#allocation9 + $0x4] sm:$0xf]
          %v5122 = vld [vmem:[#allocation9 + $0x8] sm:$0xf]
          %v5123 = vld [vmem:[#allocation9 + $0xc] sm:$0xf]
          %v5124 = vld [vmem:[#allocation9 + $0x10] sm:$0xf]
          %v5125 = vld [vmem:[#allocation9 + $0x14] sm:$0xf]
          %v5126 = vld [vmem:[#allocation9 + $0x18] sm:$0xf]
          %v5127 = vld [vmem:[#allocation9 + $0x1c] sm:$0xf]
          %v5128 = vld [vmem:[#allocation9 + $0x20] sm:$0xf]
          %v5129 = vld [vmem:[#allocation9 + $0x24] sm:$0xf]
          %v5130 = vld [vmem:[#allocation9 + $0x28] sm:$0xf]
          %v5131 = vld [vmem:[#allocation9 + $0x2c] sm:$0xf]
          %v5132 = vld [vmem:[#allocation9 + $0x30] sm:$0xf]
          %v5133 = vld [vmem:[#allocation9 + $0x34] sm:$0xf]
          %v5134 = vld [vmem:[#allocation9 + $0x38] sm:$0xf]
          %v5135 = vld [vmem:[#allocation9 + $0x3c] sm:$0xf]
          %v5136 = vld [vmem:[#allocation9 + $0x40] sm:$0xf]
          %v5137 = vld [vmem:[#allocation9 + $0x44] sm:$0xf]
          %v5138 = vld [vmem:[#allocation9 + $0x48] sm:$0xf]
          %v5139 = vld [vmem:[#allocation9 + $0x4c] sm:$0xf]
          %v5140 = vld [vmem:[#allocation9 + $0x50] sm:$0xf]
          %v5141 = vld [vmem:[#allocation9 + $0x54] sm:$0xf]
          %v5142 = vld [vmem:[#allocation9 + $0x58] sm:$0xf]
          %v5143 = vld [vmem:[#allocation9 + $0x5c] sm:$0xf]
          %v5144 = vld [vmem:[#allocation9 + $0x60] sm:$0xf]
          %v5145 = vld [vmem:[#allocation9 + $0x64] sm:$0xf]
          %v5146 = vld [vmem:[#allocation9 + $0x68] sm:$0xf]
          %v5147 = vld [vmem:[#allocation9 + $0x6c] sm:$0xf]
          %v5148 = vld [vmem:[#allocation9 + $0x70] sm:$0xf]
          %v5149 = vld [vmem:[#allocation9 + $0x74] sm:$0xf]
          %v5150 = vld [vmem:[#allocation9 + $0x78] sm:$0xf]
          %v5151 = vld [vmem:[#allocation9 + $0x7c] sm:$0xf]
          %v5184 = vunpack.c.l.b16 %v5120
          %v5185 = vunpack.c.l.b16 %v5121
          %v5186 = vunpack.c.l.b16 %v5122
          %v5187 = vunpack.c.l.b16 %v5123
          %v5188 = vunpack.c.l.b16 %v5124
          %v5189 = vunpack.c.l.b16 %v5125
          %v5190 = vunpack.c.l.b16 %v5126
          %v5191 = vunpack.c.l.b16 %v5127
          %v5192 = vunpack.c.l.b16 %v5128
          %v5193 = vunpack.c.l.b16 %v5129
          %v5194 = vunpack.c.l.b16 %v5130
          %v5195 = vunpack.c.l.b16 %v5131
          %v5196 = vunpack.c.l.b16 %v5132
          %v5197 = vunpack.c.l.b16 %v5133
          %v5198 = vunpack.c.l.b16 %v5134
          %v5199 = vunpack.c.l.b16 %v5135
          %v5200 = vunpack.c.l.b16 %v5136
          %v5201 = vunpack.c.l.b16 %v5137
          %v5202 = vunpack.c.l.b16 %v5138
          %v5203 = vunpack.c.l.b16 %v5139
          %v5204 = vunpack.c.l.b16 %v5140
          %v5205 = vunpack.c.l.b16 %v5141
          %v5206 = vunpack.c.l.b16 %v5142
          %v5207 = vunpack.c.l.b16 %v5143
          %v5208 = vunpack.c.l.b16 %v5144
          %v5209 = vunpack.c.l.b16 %v5145
          %v5210 = vunpack.c.l.b16 %v5146
          %v5211 = vunpack.c.l.b16 %v5147
          %v5212 = vunpack.c.l.b16 %v5148
          %v5213 = vunpack.c.l.b16 %v5149
          %v5214 = vunpack.c.l.b16 %v5150
          %v5215 = vunpack.c.l.b16 %v5151
          %v5216 = vpack.c.b16 %v5185, %v5184
          %v5217 = vpack.c.b16 %v5187, %v5186
          %v5218 = vpack.c.b16 %v5189, %v5188
          %v5219 = vpack.c.b16 %v5191, %v5190
          %v5220 = vpack.c.b16 %v5193, %v5192
          %v5221 = vpack.c.b16 %v5195, %v5194
          %v5222 = vpack.c.b16 %v5197, %v5196
          %v5223 = vpack.c.b16 %v5199, %v5198
          %v5224 = vpack.c.b16 %v5201, %v5200
          %v5225 = vpack.c.b16 %v5203, %v5202
          %v5226 = vpack.c.b16 %v5205, %v5204
          %v5227 = vpack.c.b16 %v5207, %v5206
          %v5228 = vpack.c.b16 %v5209, %v5208
          %v5229 = vpack.c.b16 %v5211, %v5210
          %v5230 = vpack.c.b16 %v5213, %v5212
          %v5231 = vpack.c.b16 %v5215, %v5214
          %5248 = vmatpush.bf16.msra.mxu0 %v5223
          %5249 = vmatpush.bf16.msra.mxu0 %v5222
          %5250 = vmatpush.bf16.msra.mxu0 %v5221
          %5251 = vmatpush.bf16.msra.mxu0 %v5220
          %5252 = vmatpush.bf16.msra.mxu0 %v5219
          %5253 = vmatpush.bf16.msra.mxu0 %v5218
          %5254 = vmatpush.bf16.msra.mxu0 %v5217
          %5255 = vmatpush.bf16.msra.mxu0 %v5216
          %5256 = vmatmul.bf16.gmra.mxu0 %v5112
          %v5257 = vpop.f32.mrf.mxu0
          %v5258 = vadd.f32 0.0, %v5257
          %v5259 = vpop.f32.mrf.mxu0
          %v5260 = vadd.f32 0.0, %v5259
          %5261 = vmatmul.bf16.gmra.mxu0 %v5114
          %v5262 = vpop.f32.mrf.mxu0
          %v5263 = vadd.f32 0.0, %v5262
          %v5264 = vpop.f32.mrf.mxu0
          %v5265 = vadd.f32 0.0, %v5264
          %5266 = vmatmul.bf16.gmra.mxu0 %v5116
          %v5267 = vpop.f32.mrf.mxu0
          %v5268 = vadd.f32 0.0, %v5267
          %v5269 = vpop.f32.mrf.mxu0
          %v5270 = vadd.f32 0.0, %v5269
          %5271 = vmatmul.bf16.gmra.mxu0 %v5118
          %v5272 = vpop.f32.mrf.mxu0
          %v5273 = vadd.f32 0.0, %v5272
          %v5274 = vpop.f32.mrf.mxu0
          %v5275 = vadd.f32 0.0, %v5274
          %5276 = vdwg.mxu0
          %5277 = vmatpush.bf16.msra.mxu0 %v5231
          %5278 = vmatpush.bf16.msra.mxu0 %v5230
          %5279 = vmatpush.bf16.msra.mxu0 %v5229
          %5280 = vmatpush.bf16.msra.mxu0 %v5228
          %5281 = vmatpush.bf16.msra.mxu0 %v5227
          %5282 = vmatpush.bf16.msra.mxu0 %v5226
          %5283 = vmatpush.bf16.msra.mxu0 %v5225
          %5284 = vmatpush.bf16.msra.mxu0 %v5224
          %5285 = vmatmul.bf16.gmra.mxu0 %v5113
          %v5286 = vpop.f32.mrf.mxu0
          %v5287 = vadd.f32 %v5258, %v5286
          %v5288 = vpop.f32.mrf.mxu0
          %v5289 = vadd.f32 %v5260, %v5288
          %5290 = vmatmul.bf16.gmra.mxu0 %v5115
          %v5291 = vpop.f32.mrf.mxu0
          %v5292 = vadd.f32 %v5263, %v5291
          %v5293 = vpop.f32.mrf.mxu0
          %v5294 = vadd.f32 %v5265, %v5293
          %5295 = vmatmul.bf16.gmra.mxu0 %v5117
          %v5296 = vpop.f32.mrf.mxu0
          %v5297 = vadd.f32 %v5268, %v5296
          %v5298 = vpop.f32.mrf.mxu0
          %v5299 = vadd.f32 %v5270, %v5298
          %5300 = vmatmul.bf16.gmra.mxu0 %v5119
          %v5301 = vpop.f32.mrf.mxu0
          %v5302 = vadd.f32 %v5273, %v5301
          %v5303 = vpop.f32.mrf.mxu0
          %v5304 = vadd.f32 %v5275, %v5303
          %5305 = vdwg.mxu0
          %v5306 = vld [vmem:[%s9] sm:$0x1]
          %v5308 = vperm.slane %v5306, 0
          %5310 = vmatpush.msra.mxu0 0.0
          %5311 = vmatpush.msra.mxu0 0.0
          %5312 = vmatpush.msra.mxu0 0.0
          %5313 = vmatpush.msra.mxu0 0.0
          %5314 = vmatpush.msra.mxu0 0.0
          %5315 = vmatpush.msra.mxu0 0.0
          %5316 = vmatpush.msra.mxu0 0.0
          %5317 = vmatpush.msra.mxu0 0.0
          %5318 = vmatpush.msra.mxu0 %v5304
          %5319 = vmatpush.msra.mxu0 %v5302
          %5320 = vmatpush.msra.mxu0 %v5299
          %5321 = vmatpush.msra.mxu0 %v5297
          %5322 = vmatpush.msra.mxu0 %v5294
          %5323 = vmatpush.msra.mxu0 %v5292
          %5324 = vmatpush.msra.mxu0 %v5289
          %5325 = vmatpush.msra.mxu0 %v5287
          %5326 = vmatmul.f32.gmra.mxu0 %v3293
          %v5327 = vpop.f32.mrf.mxu0
          %v5328 = vadd.f32 %v5308, %v5327
          %5329 = vmatmul.f32.gmra.mxu0 %v3296
          %v5330 = vpop.f32.mrf.mxu0
          %v5331 = vadd.f32 %v5308, %v5330
          %5332 = vmatmul.f32.gmra.mxu0 %v3299
          %v5333 = vpop.f32.mrf.mxu0
          %v5334 = vadd.f32 %v5308, %v5333
          %5335 = vmatmul.f32.gmra.mxu0 %v3302
          %v5336 = vpop.f32.mrf.mxu0
          %v5337 = vadd.f32 %v5308, %v5336
          %5338 = vmatmul.f32.gmra.mxu0 %v3305
          %v5339 = vpop.f32.mrf.mxu0
          %v5340 = vadd.f32 %v5308, %v5339
          %5341 = vmatmul.f32.gmra.mxu0 %v3308
          %v5342 = vpop.f32.mrf.mxu0
          %v5343 = vadd.f32 %v5308, %v5342
          %5344 = vmatmul.f32.gmra.mxu0 %v3311
          %v5345 = vpop.f32.mrf.mxu0
          %v5346 = vadd.f32 %v5308, %v5345
          %5347 = vmatmul.f32.gmra.mxu0 %v3314
          %v5348 = vpop.f32.mrf.mxu0
          %v5349 = vadd.f32 %v5308, %v5348
          %5350 = vdwg.mxu0
          %v5351 = vmax.f32 %v5328, 0.0
          %v5352 = vmax.f32 %v5331, 0.0
          %v5353 = vmax.f32 %v5334, 0.0
          %v5354 = vmax.f32 %v5337, 0.0
          %v5355 = vmax.f32 %v5340, 0.0
          %v5356 = vmax.f32 %v5343, 0.0
          %v5357 = vmax.f32 %v5346, 0.0
          %v5358 = vmax.f32 %v5349, 0.0
          %5359 = vst [vmem:[#allocation12] sm:$0xff] %v5351
          %5360 = vst [vmem:[#allocation12 + $0x8] sm:$0xff] %v5352
          %5361 = vst [vmem:[#allocation12 + $0x10] sm:$0xff] %v5353
          %5362 = vst [vmem:[#allocation12 + $0x18] sm:$0xff] %v5354
          %5363 = vst [vmem:[#allocation12 + $0x20] sm:$0xff] %v5355
          %5364 = vst [vmem:[#allocation12 + $0x28] sm:$0xff] %v5356
          %5365 = vst [vmem:[#allocation12 + $0x30] sm:$0xff] %v5357
          %5366 = vst [vmem:[#allocation12 + $0x38] sm:$0xff] %v5358
          %v5367 = vpack.c.bf16 %v5352, %v5351
          %v5368 = vpack.c.bf16 %v5354, %v5353
          %v5369 = vpack.c.bf16 %v5356, %v5355
          %v5370 = vpack.c.bf16 %v5358, %v5357
          %v5371 = vld [vmem:[#allocation10] sm:$0xf]
          %v5372 = vld [vmem:[#allocation10 + $0x4] sm:$0xf]
          %v5373 = vld [vmem:[#allocation10 + $0x8] sm:$0xf]
          %v5374 = vld [vmem:[#allocation10 + $0xc] sm:$0xf]
          %v5375 = vld [vmem:[#allocation10 + $0x10] sm:$0xf]
          %v5376 = vld [vmem:[#allocation10 + $0x14] sm:$0xf]
          %v5377 = vld [vmem:[#allocation10 + $0x18] sm:$0xf]
          %v5378 = vld [vmem:[#allocation10 + $0x1c] sm:$0xf]
          %v5379 = vld [vmem:[#allocation10 + $0x20] sm:$0xf]
          %v5380 = vld [vmem:[#allocation10 + $0x24] sm:$0xf]
          %v5381 = vld [vmem:[#allocation10 + $0x28] sm:$0xf]
          %v5382 = vld [vmem:[#allocation10 + $0x2c] sm:$0xf]
          %v5383 = vld [vmem:[#allocation10 + $0x30] sm:$0xf]
          %v5384 = vld [vmem:[#allocation10 + $0x34] sm:$0xf]
          %v5385 = vld [vmem:[#allocation10 + $0x38] sm:$0xf]
          %v5386 = vld [vmem:[#allocation10 + $0x3c] sm:$0xf]
          %v5403 = vunpack.c.l.b16 %v5371
          %v5404 = vunpack.c.l.b16 %v5372
          %v5405 = vunpack.c.l.b16 %v5373
          %v5406 = vunpack.c.l.b16 %v5374
          %v5407 = vunpack.c.l.b16 %v5375
          %v5408 = vunpack.c.l.b16 %v5376
          %v5409 = vunpack.c.l.b16 %v5377
          %v5410 = vunpack.c.l.b16 %v5378
          %v5411 = vunpack.c.l.b16 %v5379
          %v5412 = vunpack.c.l.b16 %v5380
          %v5413 = vunpack.c.l.b16 %v5381
          %v5414 = vunpack.c.l.b16 %v5382
          %v5415 = vunpack.c.l.b16 %v5383
          %v5416 = vunpack.c.l.b16 %v5384
          %v5417 = vunpack.c.l.b16 %v5385
          %v5418 = vunpack.c.l.b16 %v5386
          %v5419 = vpack.c.b16 %v5404, %v5403
          %v5420 = vpack.c.b16 %v5406, %v5405
          %v5421 = vpack.c.b16 %v5408, %v5407
          %v5422 = vpack.c.b16 %v5410, %v5409
          %v5423 = vpack.c.b16 %v5412, %v5411
          %v5424 = vpack.c.b16 %v5414, %v5413
          %v5425 = vpack.c.b16 %v5416, %v5415
          %v5426 = vpack.c.b16 %v5418, %v5417
          %5435 = vmatpush.bf16.msra.mxu0 %v5426
          %5436 = vmatpush.bf16.msra.mxu0 %v5425
          %5437 = vmatpush.bf16.msra.mxu0 %v5424
          %5438 = vmatpush.bf16.msra.mxu0 %v5423
          %5439 = vmatpush.bf16.msra.mxu0 %v5422
          %5440 = vmatpush.bf16.msra.mxu0 %v5421
          %5441 = vmatpush.bf16.msra.mxu0 %v5420
          %5442 = vmatpush.bf16.msra.mxu0 %v5419
          %5443 = vmatmul.bf16.gmra.mxu0 %v5367
          %v5444 = vpop.f32.mrf.mxu0
          %v5445 = vadd.f32 0.0, %v5444
          %v5446 = vpop.f32.mrf.mxu0
          %v5447 = vadd.f32 0.0, %v5446
          %5448 = vmatmul.bf16.gmra.mxu0 %v5368
          %v5449 = vpop.f32.mrf.mxu0
          %v5450 = vadd.f32 0.0, %v5449
          %v5451 = vpop.f32.mrf.mxu0
          %v5452 = vadd.f32 0.0, %v5451
          %5453 = vmatmul.bf16.gmra.mxu0 %v5369
          %v5454 = vpop.f32.mrf.mxu0
          %v5455 = vadd.f32 0.0, %v5454
          %v5456 = vpop.f32.mrf.mxu0
          %v5457 = vadd.f32 0.0, %v5456
          %5458 = vmatmul.bf16.gmra.mxu0 %v5370
          %v5459 = vpop.f32.mrf.mxu0
          %v5460 = vadd.f32 0.0, %v5459
          %v5461 = vpop.f32.mrf.mxu0
          %v5462 = vadd.f32 0.0, %v5461
          %5463 = vdwg.mxu0
          %v5464 = vld [vmem:[%s11] sm:$0x1]
          %v5466 = vperm.slane %v5464, 0
          %5468 = vmatpush.msra.mxu0 0.0
          %5469 = vmatpush.msra.mxu0 0.0
          %5470 = vmatpush.msra.mxu0 0.0
          %5471 = vmatpush.msra.mxu0 0.0
          %5472 = vmatpush.msra.mxu0 0.0
          %5473 = vmatpush.msra.mxu0 0.0
          %5474 = vmatpush.msra.mxu0 0.0
          %5475 = vmatpush.msra.mxu0 0.0
          %5476 = vmatpush.msra.mxu0 %v5462
          %5477 = vmatpush.msra.mxu0 %v5460
          %5478 = vmatpush.msra.mxu0 %v5457
          %5479 = vmatpush.msra.mxu0 %v5455
          %5480 = vmatpush.msra.mxu0 %v5452
          %5481 = vmatpush.msra.mxu0 %v5450
          %5482 = vmatpush.msra.mxu0 %v5447
          %5483 = vmatpush.msra.mxu0 %v5445
          %5484 = vmatmul.f32.gmra.mxu0 %v3293
          %v5485 = vpop.f32.mrf.mxu0
          %v5486 = vadd.f32 %v5466, %v5485
          %5487 = vmatmul.f32.gmra.mxu0 %v3296
          %v5488 = vpop.f32.mrf.mxu0
          %v5489 = vadd.f32 %v5466, %v5488
          %5490 = vmatmul.f32.gmra.mxu0 %v3299
          %v5491 = vpop.f32.mrf.mxu0
          %v5492 = vadd.f32 %v5466, %v5491
          %5493 = vmatmul.f32.gmra.mxu0 %v3302
          %v5494 = vpop.f32.mrf.mxu0
          %v5495 = vadd.f32 %v5466, %v5494
          %5496 = vmatmul.f32.gmra.mxu0 %v3305
          %v5497 = vpop.f32.mrf.mxu0
          %v5498 = vadd.f32 %v5466, %v5497
          %5499 = vmatmul.f32.gmra.mxu0 %v3308
          %v5500 = vpop.f32.mrf.mxu0
          %v5501 = vadd.f32 %v5466, %v5500
          %5502 = vmatmul.f32.gmra.mxu0 %v3311
          %v5503 = vpop.f32.mrf.mxu0
          %v5504 = vadd.f32 %v5466, %v5503
          %5505 = vmatmul.f32.gmra.mxu0 %v3314
          %v5506 = vpop.f32.mrf.mxu0
          %v5507 = vadd.f32 %v5466, %v5506
          %5508 = vdwg.mxu0
          %5509 = vst [vmem:[%s13] sm:$0xff] %v5486
          %5510 = vst [vmem:[%s13 + $0x8] sm:$0xff] %v5489
          %5511 = vst [vmem:[%s13 + $0x10] sm:$0xff] %v5492
          %5512 = vst [vmem:[%s13 + $0x18] sm:$0xff] %v5495
          %5513 = vst [vmem:[%s13 + $0x20] sm:$0xff] %v5498
          %5514 = vst [vmem:[%s13 + $0x28] sm:$0xff] %v5501
          %5515 = vst [vmem:[%s13 + $0x30] sm:$0xff] %v5504
          %5516 = vst [vmem:[%s13 + $0x38] sm:$0xff] %v5507
        $region130: #{deformation_block_forward.1} parent=101 // pred_fallthru
          _
        // Predicated region
        $region131: #{deformation_block_forward.1} parent=101 // pred_check
          %p5517 = pneg %p311
        $region132: #{deformation_block_forward.1} parent=101 // pred_check_branch
          %5519 = sbr.rel (%p5517) target = $region134
        $region133: #{deformation_block_forward.1} parent=101 // pred_region
          %5521 = vsyncadd [#allocation6], 0
          %s5522 = sshll.u32 [#allocation12], 4
          %s5523 = int_to_ptr.vmem [resolvable:$true] %s5522
          %s5524 = sshll.u32 %s12, 4
          %s5525 = int_to_ptr.hbm [resolvable:$true] %s5524
          %5530 = dma.vmem_to_hbm [thread:$0]  %s5523, 1024, %s5525, [#allocation6], 128, 128, 8
        $region134: #{deformation_block_forward.1} parent=101 // pred_fallthru
          _
        // Predicated region
        $region135: #{deformation_block_forward.1} parent=101 // pred_check
          %p5531 = pneg %p332
        $region136: #{deformation_block_forward.1} parent=101 // pred_check_branch
          %5533 = sbr.rel (%p5531) target = $region138
        $region137: #{deformation_block_forward.1} parent=101 // pred_region
          _
        $region138: #{deformation_block_forward.1} parent=101 // pred_fallthru
          _
        // Predicated region
        $region139: #{deformation_block_forward.1} parent=101 // pred_check
          %p5534 = pneg %p311
        $region140: #{deformation_block_forward.1} parent=101 // pred_check_branch
          %5536 = sbr.rel (%p5534) target = $region142
        $region141: #{deformation_block_forward.1} parent=101 // pred_region
          %5538 = dma.done [#allocation6], 1024
        $region142: #{deformation_block_forward.1} parent=101 // pred_fallthru
          _
        // Predicated region
        $region143: #{deformation_block_forward.1} parent=101 // pred_check
          %p5539 = pneg %p332
        $region144: #{deformation_block_forward.1} parent=101 // pred_check_branch
          %5541 = sbr.rel (%p5539) target = $region146
        $region145: #{deformation_block_forward.1} parent=101 // pred_region
          _
        $region146: #{deformation_block_forward.1} parent=101 // pred_fallthru
          _
      $region102: #{deformation_block_forward.1} parent=5 // pred_fallthru
        _
      %p5542 = scmp.le.s32.totalorder 2, %s26
      // Predicated region
      $region147: #{deformation_block_forward.1} parent=5 // pred_check
        %p5543 = pneg %p5542
      $region148: #{deformation_block_forward.1} parent=5 // pred_check_branch
        %5545 = sbr.rel (%p5543) target = $region150
      $region149: #{deformation_block_forward.1} parent=5 // pred_region
        %s5546 = ssub.s32 %s26, 2
      $region150: #{deformation_block_forward.1} parent=5 // pred_fallthru
        _
    $region6: #{deformation_block_forward.1} parent=1 // loop_footer
      %s30 = sadd.s32 1, %s26
    $region7: #{deformation_block_forward.1} parent=1 // loop_footer_branch
      %25 = sbr.rel target = $region3
    $region8: #{deformation_block_forward.1} parent=1 // loop_exit
      _
    %5547 = vsyncpa [#allocation5], 1
    %s5548 = scalar_lea.sflag [#allocation5], 1
    %5549 = vsyncpa %s5548, 1
    %5550 = vsyncpa [#allocation8], 1
    %5551 = vsyncpa [#allocation11], 1
    %5552 = vsyncpa [#allocation6], 1
    %s5553 = scalar_lea.sflag [#allocation6], 1
    %5554 = vsyncpa %s5553, 1

</llo_original>
